<compile_context>
chip_gen: v6e
topology: v6e:2x2x1
jax: 0.10.0
libtpu: 0.0.40
codegen_flags: <defaults>
</compile_context>

<pallas_src>
import functools

import numpy as np
import jax
import jax.numpy as jnp
from jax.experimental import pallas as pl
from jax.experimental.pallas import tpu as pltpu


# ----------------------------------------------------------------------------
# Fused LeNet forward kernel
# ----------------------------------------------------------------------------
def _lenet_kernel(a1_ref, w1_ref, b1_ref, s1_ref,
                  w2_ref, b2_ref, s2_ref,
                  w3_ref, b3_ref,
                  wfc_ref, bfc_ref, out_ref, *, geom, batch, n_fc_groups):
    f32, bf16 = jnp.float32, jnp.bfloat16

    def stacked_taps(a, wp, length, k):
        # a: (Cin*B, Hp*Wp) f32 padded activation; rows are (channel, batch),
        # lanes the flattened padded spatial map.  Tap (ky,kx) of a stride-1
        # kxk conv is the lane-contiguous slice a[:, d:d+length], d = ky*wp+kx.
        # Stack the k*k shifted views along the contraction (sublane) axis so
        # the whole layer is a single MXU matmul with internal accumulation.
        slices = [a[:, ky * wp + kx: ky * wp + kx + length]
                  for ky in range(k) for kx in range(k)]
        return jnp.concatenate(slices, axis=0).astype(bf16)

    def conv_sigmoid(a, w_ref, b_ref, wp, length, k):
        acc = jnp.dot(w_ref[...], stacked_taps(a, wp, length, k),
                      preferred_element_type=f32)            # (Cout*B, L) f32
        z = acc + b_ref[...]                                  # bias (f32, VPU)
        # sigmoid = 1 / (1 + exp(-z)): exp and approx reciprocal both on EUP.
        return pl.reciprocal(1.0 + jnp.exp(-z), approx=True)

    # conv1 (rewritten as s1 3x3 on the space-to-depth input) -> sel1 re-pad
    a = conv_sigmoid(a1_ref[...], w1_ref, b1_ref, *geom[0])
    a = jnp.dot(a.astype(bf16), s1_ref[...], preferred_element_type=f32)
    # conv2 (s2 folded into sel2) -> sel2 re-pad
    a = conv_sigmoid(a, w2_ref, b2_ref, *geom[1])
    a = jnp.dot(a.astype(bf16), s2_ref[...], preferred_element_type=f32)
    # conv3 (s1); sel3 is pre-folded into the fc weights
    h = conv_sigmoid(a, w3_ref, b3_ref, *geom[2]).astype(bf16)   # (C3*B, L3)

    # fc: logits[b, n] = sum_{c, l} h[c*B + b, l] * wfc3s[c, l, n] + bfc[n]
    logits = jnp.zeros(out_ref.shape, f32)
    for c in range(n_fc_groups):
        logits = logits + jnp.dot(h[c * batch:(c + 1) * batch, :], wfc_ref[c],
                                  preferred_element_type=f32)
    out_ref[...] = (logits + bfc_ref[...]).astype(out_ref.dtype)


# ----------------------------------------------------------------------------
# Static 0/1 selection matrices (stride + garbage-lane drop + zero re-pad)
# ----------------------------------------------------------------------------
def _sel_matrix(wp_in, len_in, ho, wo, stride, pad_out):
    """Maps the un-compacted conv accumulator (lane j = stride*oy*wp_in + stride*ox)
    to the next layer's zero-padded flat layout (lane = (oy+pad)*wp_out + (ox+pad))."""
    wp_out = wo + 2 * pad_out
    hp_out = ho + 2 * pad_out
    sel = np.zeros((len_in, hp_out * wp_out), np.float32)
    for oy in range(ho):
        for ox in range(wo):
            j = stride * oy * wp_in + stride * ox
            k = (oy + pad_out) * wp_out + (ox + pad_out)
            sel[j, k] = 1.0
    return sel


def _full_spec(arr):
    nd = arr.ndim
    return pl.BlockSpec(arr.shape, lambda: (0,) * nd)


# ----------------------------------------------------------------------------
# One-time parameter prep + jitted per-call forward
# ----------------------------------------------------------------------------
def make_lenet_forward(params, batch, channel, height, num_classes=10):
    """Hoists every parameter-only transform out of the per-call path and returns
    a jitted forward(x) that only does input pad/space-to-depth + one pallas_call."""
    f32, bf16 = jnp.float32, jnp.bfloat16
    B, C, H = batch, channel, height
    assert H % 2 == 0, "LeNet geometry assumes even square inputs"

    w1, b1 = params["w1"], params["b1"]
    w2, b2 = params["w2"], params["b2"]
    w3, b3 = params["w3"], params["b3"]
    wfc, bfc = params["wfc"], params["bfc"]
    C1, C2, C3 = w1.shape[0], w2.shape[0], w3.shape[0]
    ncls = wfc.shape[0]

    # ---- static geometry ----------------------------------------------------
    H1 = (H + 4 - 5) // 2 + 1          # conv1: k5 s2 p2
    H2 = (H1 + 4 - 5) // 2 + 1         # conv2: k5 s2 p2
    H3 = (H2 + 4 - 5) // 1 + 1         # conv3: k5 s1 p2
    assert wfc.shape[1] == C3 * H3 * H3, "fc width must match conv output"
    HP1, K1 = (H + 4) // 2, 3          # conv1 rewritten as s1 3x3 on s2d input
    HP2, K2 = H1 + 4, 5
    HP3, K3 = H2 + 4, 5
    L1 = HP1 * HP1 - (K1 - 1) * (HP1 + 1)
    L2 = HP2 * HP2 - (K2 - 1) * (HP2 + 1)
    L3 = HP3 * HP3 - (K3 - 1) * (HP3 + 1)

    # ---- conv1 weight -> equivalent stride-1 3x3 weight on 4C channels -------
    w1p = jnp.pad(w1, ((0, 0), (0, 0), (0, 1), (0, 1)))       # (C1, C, 6, 6)
    w1e = (w1p.reshape(C1, C, K1, 2, K1, 2)
              .transpose(0, 1, 3, 5, 2, 4).reshape(C1, 4 * C, K1, K1))

    # ---- tap-stacked, kron(I_B)-expanded weights, cast to bf16 ----------------
    eye = jnp.eye(B, dtype=f32)

    def stacked_kron(w):                   # (Co,Ci,k,k) -> (Co*B, k*k*Ci*B) bf16
        co, ci, kh, kw = w.shape
        t = w.transpose(2, 3, 0, 1).reshape(kh * kw, co, ci)   # (t, o, c)
        big = jnp.einsum("toc,bd->obtcd", t, eye)              # (o, b, t, c, d)
        return big.reshape(co * B, kh * kw * ci * B).astype(bf16)

    W1s, W2s, W3s = stacked_kron(w1e), stacked_kron(w2), stacked_kron(w3)
    B1e = jnp.repeat(b1, B).reshape(C1 * B, 1).astype(f32)
    B2e = jnp.repeat(b2, B).reshape(C2 * B, 1).astype(f32)
    B3e = jnp.repeat(b3, B).reshape(C3 * B, 1).astype(f32)

    # ---- 0/1 selection matrices: exact in bf16 (halves the biggest DMA) -------
    sel1 = jnp.asarray(_sel_matrix(HP1, L1, H1, H1, 1, 2), bf16)   # -> conv2 padded
    sel2 = jnp.asarray(_sel_matrix(HP2, L2, H2, H2, 2, 2), bf16)   # -> conv3 padded
    sel3 = _sel_matrix(HP3, L3, H3, H3, 1, 0)                      # pure selection

    # ---- fold sel3 into the fc weights (exact: sel3 rows are one-hot / zero) ---
    wfc3 = wfc.reshape(ncls, C3, H3 * H3).transpose(1, 2, 0)       # (C3, H3*H3, n)
    wfc3s = jnp.einsum("ls,csn->cln", jnp.asarray(sel3, f32), wfc3).astype(bf16)
    bfc2 = bfc.reshape(1, ncls).astype(f32)

    geom = ((HP1, L1, K1), (HP2, L2, K2), (HP3, L3, K3))
    consts = (W1s, B1e, sel1, W2s, B2e, sel2, W3s, B3e, wfc3s, bfc2)
    kernel = functools.partial(_lenet_kernel, geom=geom, batch=B, n_fc_groups=C3)

    @jax.jit
    def forward(x):
        # per-call work: pad + space-to-depth of x, then the single fused kernel.
        xp = jnp.pad(x, ((0, 0), (0, 0), (2, 2), (2, 2)))
        z = xp.reshape(B, C, HP1, 2, HP1, 2)                       # (b,c,u,q,v,r)
        a1 = (z.transpose(1, 3, 5, 0, 2, 4)
                .reshape(4 * C * B, HP1 * HP1).astype(f32))

        inputs = (a1,) + consts
        return pl.pallas_call(
            kernel,
            out_shape=jax.ShapeDtypeStruct((B, ncls), f32),
            in_specs=[_full_spec(t) for t in inputs],
            out_specs=pl.BlockSpec((B, ncls), lambda: (0, 0)),
            compiler_params=pltpu.CompilerParams(
                vmem_limit_bytes=32 * 1024 * 1024),
        )(*inputs)

    return forward


# ----------------------------------------------------------------------------
# Parameters + pure-XLA reference (used only to validate the fused kernel)
# ----------------------------------------------------------------------------
def init_lenet_params(key, channel=3, hidden=768, num_classes=10):
    ks = jax.random.split(key, 8)

    def u(k, shape, fan_in):
        bound = 1.0 / np.sqrt(fan_in)
        return jax.random.uniform(k, shape, jnp.float32, -bound, bound)

    return {
        "w1": u(ks[0], (12, channel, 5, 5), channel * 25),
        "b1": u(ks[1], (12,), channel * 25),
        "w2": u(ks[2], (12, 12, 5, 5), 12 * 25),
        "b2": u(ks[3], (12,), 12 * 25),
        "w3": u(ks[4], (12, 12, 5, 5), 12 * 25),
        "b3": u(ks[5], (12,), 12 * 25),
        "wfc": u(ks[6], (num_classes, hidden), hidden),
        "bfc": u(ks[7], (num_classes,), hidden),
    }


def _lenet_reference(params, x):
    def conv_sig(h, w, b, stride):
        out = jax.lax.conv_general_dilated(
            h, w, window_strides=(stride, stride), padding=[(2, 2), (2, 2)],
            dimension_numbers=("NCHW", "OIHW", "NCHW"))
        return jax.nn.sigmoid(out + b[None, :, None, None])

    out = conv_sig(x, params["w1"], params["b1"], 2)
    out = conv_sig(out, params["w2"], params["b2"], 2)
    out = conv_sig(out, params["w3"], params["b3"], 1)
    flat = out.reshape(out.shape[0], -1)
    return flat @ params["wfc"].T + params["bfc"][None, :]


if __name__ == "__main__":
    key = jax.random.PRNGKey(0)
    pkey, xkey = jax.random.split(key)

    # 32x32 RGB input so 12 * 8 * 8 = 768 matches the module's hideen=768 default.
    B, C, H, W = 2, 3, 32, 32
    params = init_lenet_params(pkey, channel=C, hidden=768, num_classes=10)
    x = jax.random.normal(xkey, (B, C, H, W), jnp.float32)

    forward = make_lenet_forward(params, batch=B, channel=C, height=H,
                                 num_classes=10)
    logits = forward(x)
    jax.block_until_ready(logits)
    assert logits.shape == (B, 10), logits.shape

    ref = _lenet_reference(params, x)
    err = float(jnp.max(jnp.abs(logits - ref)))
    # bf16 MXU operands + approx-reciprocal sigmoid: loosen tolerance slightly;
    # layout/indexing bugs show up as O(0.1+) errors and are still caught.
    assert err < 5e-2, f"kernel/reference mismatch: max abs err = {err}"
    print("KERNEL_OK")
</pallas_src>

<mosaic_0001>
module attributes {stable_mosaic.version = 11 : i64} {
  func.func @_lenet_kernel(%arg0: memref<24x324xf32, #tpu.memory_space<vmem>>, %arg1: memref<24x216xbf16, #tpu.memory_space<vmem>>, %arg2: memref<24x1xf32, #tpu.memory_space<vmem>>, %arg3: memref<286x400xbf16, #tpu.memory_space<vmem>>, %arg4: memref<24x600xbf16, #tpu.memory_space<vmem>>, %arg5: memref<24x1xf32, #tpu.memory_space<vmem>>, %arg6: memref<316x144xbf16, #tpu.memory_space<vmem>>, %arg7: memref<24x600xbf16, #tpu.memory_space<vmem>>, %arg8: memref<24x1xf32, #tpu.memory_space<vmem>>, %arg9: memref<12x92x10xbf16, #tpu.memory_space<vmem>>, %arg10: memref<1x10xf32, #tpu.memory_space<vmem>>, %arg11: memref<2x10xf32, #tpu.memory_space<vmem>>) attributes {dimension_semantics = [], scalar_prefetch = 0 : i64, scratch_operands = 0 : i64, tpu.core_type = #tpu.core_type<tc>} {
    %c0 = arith.constant 0 : index
    %c0_0 = arith.constant 0 : index
    %0 = vector.load %arg0[%c0, %c0_0] : memref<24x324xf32, #tpu.memory_space<vmem>>, vector<24x324xf32>
    %c0_1 = arith.constant 0 : index
    %c0_2 = arith.constant 0 : index
    %1 = vector.load %arg1[%c0_1, %c0_2] : memref<24x216xbf16, #tpu.memory_space<vmem>>, vector<24x216xbf16>
    %2 = vector.extract_strided_slice %0 {offsets = [0, 0], sizes = [24, 286], strides = [1, 1]} : vector<24x324xf32> to vector<24x286xf32>
    %3 = vector.extract_strided_slice %0 {offsets = [0, 1], sizes = [24, 286], strides = [1, 1]} : vector<24x324xf32> to vector<24x286xf32>
    %4 = vector.extract_strided_slice %0 {offsets = [0, 2], sizes = [24, 286], strides = [1, 1]} : vector<24x324xf32> to vector<24x286xf32>
    %5 = vector.extract_strided_slice %0 {offsets = [0, 18], sizes = [24, 286], strides = [1, 1]} : vector<24x324xf32> to vector<24x286xf32>
    %6 = vector.extract_strided_slice %0 {offsets = [0, 19], sizes = [24, 286], strides = [1, 1]} : vector<24x324xf32> to vector<24x286xf32>
    %7 = vector.extract_strided_slice %0 {offsets = [0, 20], sizes = [24, 286], strides = [1, 1]} : vector<24x324xf32> to vector<24x286xf32>
    %8 = vector.extract_strided_slice %0 {offsets = [0, 36], sizes = [24, 286], strides = [1, 1]} : vector<24x324xf32> to vector<24x286xf32>
    %9 = vector.extract_strided_slice %0 {offsets = [0, 37], sizes = [24, 286], strides = [1, 1]} : vector<24x324xf32> to vector<24x286xf32>
    %10 = vector.extract_strided_slice %0 {offsets = [0, 38], sizes = [24, 286], strides = [1, 1]} : vector<24x324xf32> to vector<24x286xf32>
    %11 = tpu.concatenate %2, %3, %4, %5, %6, %7, %8, %9, %10 in 0 : vector<24x286xf32>, vector<24x286xf32>, vector<24x286xf32>, vector<24x286xf32>, vector<24x286xf32>, vector<24x286xf32>, vector<24x286xf32>, vector<24x286xf32>, vector<24x286xf32> -> vector<216x286xf32>
    %12 = arith.truncf %11 : vector<216x286xf32> to vector<216x286xbf16>
    %cst = arith.constant dense<0.000000e+00> : vector<24x286xf32>
    %13 = tpu.matmul %1, %12, %cst {dimension_numbers = #tpu.dot_dimension_numbers<[1], [0], [0], [1], [0, 0, 1, 1], [], []>} : vector<24x216xbf16>, vector<216x286xbf16>, vector<24x286xf32> -> vector<24x286xf32>
    %c0_3 = arith.constant 0 : index
    %c0_4 = arith.constant 0 : index
    %14 = vector.load %arg2[%c0_3, %c0_4] : memref<24x1xf32, #tpu.memory_space<vmem>>, vector<24x1xf32>
    %15 = vector.broadcast %14 : vector<24x1xf32> to vector<24x286xf32>
    %16 = arith.addf %13, %15 : vector<24x286xf32>
    %cst_5 = arith.constant 0.000000e+00 : f32
    %17 = vector.broadcast %cst_5 : f32 to vector<24x286xf32>
    %18 = arith.subf %17, %16 : vector<24x286xf32>
    %19 = math.exp %18 : vector<24x286xf32>
    %cst_6 = arith.constant 1.000000e+00 : f32
    %20 = vector.broadcast %cst_6 : f32 to vector<24x286xf32>
    %21 = arith.addf %20, %19 : vector<24x286xf32>
    %22 = tpu.reciprocal %21 {approx = true} : vector<24x286xf32> -> vector<24x286xf32>
    %23 = arith.truncf %22 : vector<24x286xf32> to vector<24x286xbf16>
    %c0_7 = arith.constant 0 : index
    %c0_8 = arith.constant 0 : index
    %24 = vector.load %arg3[%c0_7, %c0_8] : memref<286x400xbf16, #tpu.memory_space<vmem>>, vector<286x400xbf16>
    %cst_9 = arith.constant dense<0.000000e+00> : vector<24x400xf32>
    %25 = tpu.matmul %23, %24, %cst_9 {dimension_numbers = #tpu.dot_dimension_numbers<[1], [0], [0], [1], [0, 0, 1, 1], [], []>} : vector<24x286xbf16>, vector<286x400xbf16>, vector<24x400xf32> -> vector<24x400xf32>
    %c0_10 = arith.constant 0 : index
    %c0_11 = arith.constant 0 : index
    %26 = vector.load %arg4[%c0_10, %c0_11] : memref<24x600xbf16, #tpu.memory_space<vmem>>, vector<24x600xbf16>
    %27 = vector.extract_strided_slice %25 {offsets = [0, 0], sizes = [24, 316], strides = [1, 1]} : vector<24x400xf32> to vector<24x316xf32>
    %28 = vector.extract_strided_slice %25 {offsets = [0, 1], sizes = [24, 316], strides = [1, 1]} : vector<24x400xf32> to vector<24x316xf32>
    %29 = vector.extract_strided_slice %25 {offsets = [0, 2], sizes = [24, 316], strides = [1, 1]} : vector<24x400xf32> to vector<24x316xf32>
    %30 = vector.extract_strided_slice %25 {offsets = [0, 3], sizes = [24, 316], strides = [1, 1]} : vector<24x400xf32> to vector<24x316xf32>
    %31 = vector.extract_strided_slice %25 {offsets = [0, 4], sizes = [24, 316], strides = [1, 1]} : vector<24x400xf32> to vector<24x316xf32>
    %32 = vector.extract_strided_slice %25 {offsets = [0, 20], sizes = [24, 316], strides = [1, 1]} : vector<24x400xf32> to vector<24x316xf32>
    %33 = vector.extract_strided_slice %25 {offsets = [0, 21], sizes = [24, 316], strides = [1, 1]} : vector<24x400xf32> to vector<24x316xf32>
    %34 = vector.extract_strided_slice %25 {offsets = [0, 22], sizes = [24, 316], strides = [1, 1]} : vector<24x400xf32> to vector<24x316xf32>
    %35 = vector.extract_strided_slice %25 {offsets = [0, 23], sizes = [24, 316], strides = [1, 1]} : vector<24x400xf32> to vector<24x316xf32>
    %36 = vector.extract_strided_slice %25 {offsets = [0, 24], sizes = [24, 316], strides = [1, 1]} : vector<24x400xf32> to vector<24x316xf32>
    %37 = vector.extract_strided_slice %25 {offsets = [0, 40], sizes = [24, 316], strides = [1, 1]} : vector<24x400xf32> to vector<24x316xf32>
    %38 = vector.extract_strided_slice %25 {offsets = [0, 41], sizes = [24, 316], strides = [1, 1]} : vector<24x400xf32> to vector<24x316xf32>
    %39 = vector.extract_strided_slice %25 {offsets = [0, 42], sizes = [24, 316], strides = [1, 1]} : vector<24x400xf32> to vector<24x316xf32>
    %40 = vector.extract_strided_slice %25 {offsets = [0, 43], sizes = [24, 316], strides = [1, 1]} : vector<24x400xf32> to vector<24x316xf32>
    %41 = vector.extract_strided_slice %25 {offsets = [0, 44], sizes = [24, 316], strides = [1, 1]} : vector<24x400xf32> to vector<24x316xf32>
    %42 = vector.extract_strided_slice %25 {offsets = [0, 60], sizes = [24, 316], strides = [1, 1]} : vector<24x400xf32> to vector<24x316xf32>
    %43 = vector.extract_strided_slice %25 {offsets = [0, 61], sizes = [24, 316], strides = [1, 1]} : vector<24x400xf32> to vector<24x316xf32>
    %44 = vector.extract_strided_slice %25 {offsets = [0, 62], sizes = [24, 316], strides = [1, 1]} : vector<24x400xf32> to vector<24x316xf32>
    %45 = vector.extract_strided_slice %25 {offsets = [0, 63], sizes = [24, 316], strides = [1, 1]} : vector<24x400xf32> to vector<24x316xf32>
    %46 = vector.extract_strided_slice %25 {offsets = [0, 64], sizes = [24, 316], strides = [1, 1]} : vector<24x400xf32> to vector<24x316xf32>
    %47 = vector.extract_strided_slice %25 {offsets = [0, 80], sizes = [24, 316], strides = [1, 1]} : vector<24x400xf32> to vector<24x316xf32>
    %48 = vector.extract_strided_slice %25 {offsets = [0, 81], sizes = [24, 316], strides = [1, 1]} : vector<24x400xf32> to vector<24x316xf32>
    %49 = vector.extract_strided_slice %25 {offsets = [0, 82], sizes = [24, 316], strides = [1, 1]} : vector<24x400xf32> to vector<24x316xf32>
    %50 = vector.extract_strided_slice %25 {offsets = [0, 83], sizes = [24, 316], strides = [1, 1]} : vector<24x400xf32> to vector<24x316xf32>
    %51 = vector.extract_strided_slice %25 {offsets = [0, 84], sizes = [24, 316], strides = [1, 1]} : vector<24x400xf32> to vector<24x316xf32>
    %52 = tpu.concatenate %27, %28, %29, %30, %31, %32, %33, %34, %35, %36, %37, %38, %39, %40, %41, %42 in 0 : vector<24x316xf32>, vector<24x316xf32>, vector<24x316xf32>, vector<24x316xf32>, vector<24x316xf32>, vector<24x316xf32>, vector<24x316xf32>, vector<24x316xf32>, vector<24x316xf32>, vector<24x316xf32>, vector<24x316xf32>, vector<24x316xf32>, vector<24x316xf32>, vector<24x316xf32>, vector<24x316xf32>, vector<24x316xf32> -> vector<384x316xf32>
    %53 = tpu.concatenate %43, %44, %45, %46, %47, %48, %49, %50, %51 in 0 : vector<24x316xf32>, vector<24x316xf32>, vector<24x316xf32>, vector<24x316xf32>, vector<24x316xf32>, vector<24x316xf32>, vector<24x316xf32>, vector<24x316xf32>, vector<24x316xf32> -> vector<216x316xf32>
    %54 = tpu.concatenate %52, %53 in 0 : vector<384x316xf32>, vector<216x316xf32> -> vector<600x316xf32>
    %55 = arith.truncf %54 : vector<600x316xf32> to vector<600x316xbf16>
    %cst_12 = arith.constant dense<0.000000e+00> : vector<24x316xf32>
    %56 = tpu.matmul %26, %55, %cst_12 {dimension_numbers = #tpu.dot_dimension_numbers<[1], [0], [0], [1], [0, 0, 1, 1], [], []>} : vector<24x600xbf16>, vector<600x316xbf16>, vector<24x316xf32> -> vector<24x316xf32>
    %c0_13 = arith.constant 0 : index
    %c0_14 = arith.constant 0 : index
    %57 = vector.load %arg5[%c0_13, %c0_14] : memref<24x1xf32, #tpu.memory_space<vmem>>, vector<24x1xf32>
    %58 = vector.broadcast %57 : vector<24x1xf32> to vector<24x316xf32>
    %59 = arith.addf %56, %58 : vector<24x316xf32>
    %cst_15 = arith.constant 0.000000e+00 : f32
    %60 = vector.broadcast %cst_15 : f32 to vector<24x316xf32>
    %61 = arith.subf %60, %59 : vector<24x316xf32>
    %62 = math.exp %61 : vector<24x316xf32>
    %cst_16 = arith.constant 1.000000e+00 : f32
    %63 = vector.broadcast %cst_16 : f32 to vector<24x316xf32>
    %64 = arith.addf %63, %62 : vector<24x316xf32>
    %65 = tpu.reciprocal %64 {approx = true} : vector<24x316xf32> -> vector<24x316xf32>
    %66 = arith.truncf %65 : vector<24x316xf32> to vector<24x316xbf16>
    %c0_17 = arith.constant 0 : index
    %c0_18 = arith.constant 0 : index
    %67 = vector.load %arg6[%c0_17, %c0_18] : memref<316x144xbf16, #tpu.memory_space<vmem>>, vector<316x144xbf16>
    %cst_19 = arith.constant dense<0.000000e+00> : vector<24x144xf32>
    %68 = tpu.matmul %66, %67, %cst_19 {dimension_numbers = #tpu.dot_dimension_numbers<[1], [0], [0], [1], [0, 0, 1, 1], [], []>} : vector<24x316xbf16>, vector<316x144xbf16>, vector<24x144xf32> -> vector<24x144xf32>
    %c0_20 = arith.constant 0 : index
    %c0_21 = arith.constant 0 : index
    %69 = vector.load %arg7[%c0_20, %c0_21] : memref<24x600xbf16, #tpu.memory_space<vmem>>, vector<24x600xbf16>
    %70 = vector.extract_strided_slice %68 {offsets = [0, 0], sizes = [24, 92], strides = [1, 1]} : vector<24x144xf32> to vector<24x92xf32>
    %71 = vector.extract_strided_slice %68 {offsets = [0, 1], sizes = [24, 92], strides = [1, 1]} : vector<24x144xf32> to vector<24x92xf32>
    %72 = vector.extract_strided_slice %68 {offsets = [0, 2], sizes = [24, 92], strides = [1, 1]} : vector<24x144xf32> to vector<24x92xf32>
    %73 = vector.extract_strided_slice %68 {offsets = [0, 3], sizes = [24, 92], strides = [1, 1]} : vector<24x144xf32> to vector<24x92xf32>
    %74 = vector.extract_strided_slice %68 {offsets = [0, 4], sizes = [24, 92], strides = [1, 1]} : vector<24x144xf32> to vector<24x92xf32>
    %75 = vector.extract_strided_slice %68 {offsets = [0, 12], sizes = [24, 92], strides = [1, 1]} : vector<24x144xf32> to vector<24x92xf32>
    %76 = vector.extract_strided_slice %68 {offsets = [0, 13], sizes = [24, 92], strides = [1, 1]} : vector<24x144xf32> to vector<24x92xf32>
    %77 = vector.extract_strided_slice %68 {offsets = [0, 14], sizes = [24, 92], strides = [1, 1]} : vector<24x144xf32> to vector<24x92xf32>
    %78 = vector.extract_strided_slice %68 {offsets = [0, 15], sizes = [24, 92], strides = [1, 1]} : vector<24x144xf32> to vector<24x92xf32>
    %79 = vector.extract_strided_slice %68 {offsets = [0, 16], sizes = [24, 92], strides = [1, 1]} : vector<24x144xf32> to vector<24x92xf32>
    %80 = vector.extract_strided_slice %68 {offsets = [0, 24], sizes = [24, 92], strides = [1, 1]} : vector<24x144xf32> to vector<24x92xf32>
    %81 = vector.extract_strided_slice %68 {offsets = [0, 25], sizes = [24, 92], strides = [1, 1]} : vector<24x144xf32> to vector<24x92xf32>
    %82 = vector.extract_strided_slice %68 {offsets = [0, 26], sizes = [24, 92], strides = [1, 1]} : vector<24x144xf32> to vector<24x92xf32>
    %83 = vector.extract_strided_slice %68 {offsets = [0, 27], sizes = [24, 92], strides = [1, 1]} : vector<24x144xf32> to vector<24x92xf32>
    %84 = vector.extract_strided_slice %68 {offsets = [0, 28], sizes = [24, 92], strides = [1, 1]} : vector<24x144xf32> to vector<24x92xf32>
    %85 = vector.extract_strided_slice %68 {offsets = [0, 36], sizes = [24, 92], strides = [1, 1]} : vector<24x144xf32> to vector<24x92xf32>
    %86 = vector.extract_strided_slice %68 {offsets = [0, 37], sizes = [24, 92], strides = [1, 1]} : vector<24x144xf32> to vector<24x92xf32>
    %87 = vector.extract_strided_slice %68 {offsets = [0, 38], sizes = [24, 92], strides = [1, 1]} : vector<24x144xf32> to vector<24x92xf32>
    %88 = vector.extract_strided_slice %68 {offsets = [0, 39], sizes = [24, 92], strides = [1, 1]} : vector<24x144xf32> to vector<24x92xf32>
    %89 = vector.extract_strided_slice %68 {offsets = [0, 40], sizes = [24, 92], strides = [1, 1]} : vector<24x144xf32> to vector<24x92xf32>
    %90 = vector.extract_strided_slice %68 {offsets = [0, 48], sizes = [24, 92], strides = [1, 1]} : vector<24x144xf32> to vector<24x92xf32>
    %91 = vector.extract_strided_slice %68 {offsets = [0, 49], sizes = [24, 92], strides = [1, 1]} : vector<24x144xf32> to vector<24x92xf32>
    %92 = vector.extract_strided_slice %68 {offsets = [0, 50], sizes = [24, 92], strides = [1, 1]} : vector<24x144xf32> to vector<24x92xf32>
    %93 = vector.extract_strided_slice %68 {offsets = [0, 51], sizes = [24, 92], strides = [1, 1]} : vector<24x144xf32> to vector<24x92xf32>
    %94 = vector.extract_strided_slice %68 {offsets = [0, 52], sizes = [24, 92], strides = [1, 1]} : vector<24x144xf32> to vector<24x92xf32>
    %95 = tpu.concatenate %70, %71, %72, %73, %74, %75, %76, %77, %78, %79, %80, %81, %82, %83, %84, %85 in 0 : vector<24x92xf32>, vector<24x92xf32>, vector<24x92xf32>, vector<24x92xf32>, vector<24x92xf32>, vector<24x92xf32>, vector<24x92xf32>, vector<24x92xf32>, vector<24x92xf32>, vector<24x92xf32>, vector<24x92xf32>, vector<24x92xf32>, vector<24x92xf32>, vector<24x92xf32>, vector<24x92xf32>, vector<24x92xf32> -> vector<384x92xf32>
    %96 = tpu.concatenate %86, %87, %88, %89, %90, %91, %92, %93, %94 in 0 : vector<24x92xf32>, vector<24x92xf32>, vector<24x92xf32>, vector<24x92xf32>, vector<24x92xf32>, vector<24x92xf32>, vector<24x92xf32>, vector<24x92xf32>, vector<24x92xf32> -> vector<216x92xf32>
    %97 = tpu.concatenate %95, %96 in 0 : vector<384x92xf32>, vector<216x92xf32> -> vector<600x92xf32>
    %98 = arith.truncf %97 : vector<600x92xf32> to vector<600x92xbf16>
    %cst_22 = arith.constant dense<0.000000e+00> : vector<24x92xf32>
    %99 = tpu.matmul %69, %98, %cst_22 {dimension_numbers = #tpu.dot_dimension_numbers<[1], [0], [0], [1], [0, 0, 1, 1], [], []>} : vector<24x600xbf16>, vector<600x92xbf16>, vector<24x92xf32> -> vector<24x92xf32>
    %c0_23 = arith.constant 0 : index
    %c0_24 = arith.constant 0 : index
    %100 = vector.load %arg8[%c0_23, %c0_24] : memref<24x1xf32, #tpu.memory_space<vmem>>, vector<24x1xf32>
    %101 = vector.broadcast %100 : vector<24x1xf32> to vector<24x92xf32>
    %102 = arith.addf %99, %101 : vector<24x92xf32>
    %cst_25 = arith.constant 0.000000e+00 : f32
    %103 = vector.broadcast %cst_25 : f32 to vector<24x92xf32>
    %104 = arith.subf %103, %102 : vector<24x92xf32>
    %105 = math.exp %104 : vector<24x92xf32>
    %cst_26 = arith.constant 1.000000e+00 : f32
    %106 = vector.broadcast %cst_26 : f32 to vector<24x92xf32>
    %107 = arith.addf %106, %105 : vector<24x92xf32>
    %108 = tpu.reciprocal %107 {approx = true} : vector<24x92xf32> -> vector<24x92xf32>
    %109 = arith.truncf %108 : vector<24x92xf32> to vector<24x92xbf16>
    %cst_27 = arith.constant 0.000000e+00 : f32
    %110 = vector.broadcast %cst_27 : f32 to vector<2x10xf32>
    %111 = vector.extract_strided_slice %109 {offsets = [0, 0], sizes = [2, 92], strides = [1, 1]} : vector<24x92xbf16> to vector<2x92xbf16>
    %c0_28 = arith.constant 0 : index
    %c0_29 = arith.constant 0 : index
    %c0_30 = arith.constant 0 : index
    %112 = vector.load %arg9[%c0_28, %c0_29, %c0_30] : memref<12x92x10xbf16, #tpu.memory_space<vmem>>, vector<1x92x10xbf16>
    %113 = vector.shape_cast %112 : vector<1x92x10xbf16> to vector<92x10xbf16>
    %cst_31 = arith.constant dense<0.000000e+00> : vector<2x10xf32>
    %114 = tpu.matmul %111, %113, %cst_31 {dimension_numbers = #tpu.dot_dimension_numbers<[1], [0], [0], [1], [0, 0, 1, 1], [], []>} : vector<2x92xbf16>, vector<92x10xbf16>, vector<2x10xf32> -> vector<2x10xf32>
    %115 = arith.addf %110, %114 : vector<2x10xf32>
    %116 = vector.extract_strided_slice %109 {offsets = [2, 0], sizes = [2, 92], strides = [1, 1]} : vector<24x92xbf16> to vector<2x92xbf16>
    %c1 = arith.constant 1 : index
    %c0_32 = arith.constant 0 : index
    %c0_33 = arith.constant 0 : index
    %117 = vector.load %arg9[%c1, %c0_32, %c0_33] : memref<12x92x10xbf16, #tpu.memory_space<vmem>>, vector<1x92x10xbf16>
    %118 = vector.shape_cast %117 : vector<1x92x10xbf16> to vector<92x10xbf16>
    %cst_34 = arith.constant dense<0.000000e+00> : vector<2x10xf32>
    %119 = tpu.matmul %116, %118, %cst_34 {dimension_numbers = #tpu.dot_dimension_numbers<[1], [0], [0], [1], [0, 0, 1, 1], [], []>} : vector<2x92xbf16>, vector<92x10xbf16>, vector<2x10xf32> -> vector<2x10xf32>
    %120 = arith.addf %115, %119 : vector<2x10xf32>
    %121 = vector.extract_strided_slice %109 {offsets = [4, 0], sizes = [2, 92], strides = [1, 1]} : vector<24x92xbf16> to vector<2x92xbf16>
    %c2 = arith.constant 2 : index
    %c0_35 = arith.constant 0 : index
    %c0_36 = arith.constant 0 : index
    %122 = vector.load %arg9[%c2, %c0_35, %c0_36] : memref<12x92x10xbf16, #tpu.memory_space<vmem>>, vector<1x92x10xbf16>
    %123 = vector.shape_cast %122 : vector<1x92x10xbf16> to vector<92x10xbf16>
    %cst_37 = arith.constant dense<0.000000e+00> : vector<2x10xf32>
    %124 = tpu.matmul %121, %123, %cst_37 {dimension_numbers = #tpu.dot_dimension_numbers<[1], [0], [0], [1], [0, 0, 1, 1], [], []>} : vector<2x92xbf16>, vector<92x10xbf16>, vector<2x10xf32> -> vector<2x10xf32>
    %125 = arith.addf %120, %124 : vector<2x10xf32>
    %126 = vector.extract_strided_slice %109 {offsets = [6, 0], sizes = [2, 92], strides = [1, 1]} : vector<24x92xbf16> to vector<2x92xbf16>
    %c3 = arith.constant 3 : index
    %c0_38 = arith.constant 0 : index
    %c0_39 = arith.constant 0 : index
    %127 = vector.load %arg9[%c3, %c0_38, %c0_39] : memref<12x92x10xbf16, #tpu.memory_space<vmem>>, vector<1x92x10xbf16>
    %128 = vector.shape_cast %127 : vector<1x92x10xbf16> to vector<92x10xbf16>
    %cst_40 = arith.constant dense<0.000000e+00> : vector<2x10xf32>
    %129 = tpu.matmul %126, %128, %cst_40 {dimension_numbers = #tpu.dot_dimension_numbers<[1], [0], [0], [1], [0, 0, 1, 1], [], []>} : vector<2x92xbf16>, vector<92x10xbf16>, vector<2x10xf32> -> vector<2x10xf32>
    %130 = arith.addf %125, %129 : vector<2x10xf32>
    %131 = vector.extract_strided_slice %109 {offsets = [8, 0], sizes = [2, 92], strides = [1, 1]} : vector<24x92xbf16> to vector<2x92xbf16>
    %c4 = arith.constant 4 : index
    %c0_41 = arith.constant 0 : index
    %c0_42 = arith.constant 0 : index
    %132 = vector.load %arg9[%c4, %c0_41, %c0_42] : memref<12x92x10xbf16, #tpu.memory_space<vmem>>, vector<1x92x10xbf16>
    %133 = vector.shape_cast %132 : vector<1x92x10xbf16> to vector<92x10xbf16>
    %cst_43 = arith.constant dense<0.000000e+00> : vector<2x10xf32>
    %134 = tpu.matmul %131, %133, %cst_43 {dimension_numbers = #tpu.dot_dimension_numbers<[1], [0], [0], [1], [0, 0, 1, 1], [], []>} : vector<2x92xbf16>, vector<92x10xbf16>, vector<2x10xf32> -> vector<2x10xf32>
    %135 = arith.addf %130, %134 : vector<2x10xf32>
    %136 = vector.extract_strided_slice %109 {offsets = [10, 0], sizes = [2, 92], strides = [1, 1]} : vector<24x92xbf16> to vector<2x92xbf16>
    %c5 = arith.constant 5 : index
    %c0_44 = arith.constant 0 : index
    %c0_45 = arith.constant 0 : index
    %137 = vector.load %arg9[%c5, %c0_44, %c0_45] : memref<12x92x10xbf16, #tpu.memory_space<vmem>>, vector<1x92x10xbf16>
    %138 = vector.shape_cast %137 : vector<1x92x10xbf16> to vector<92x10xbf16>
    %cst_46 = arith.constant dense<0.000000e+00> : vector<2x10xf32>
    %139 = tpu.matmul %136, %138, %cst_46 {dimension_numbers = #tpu.dot_dimension_numbers<[1], [0], [0], [1], [0, 0, 1, 1], [], []>} : vector<2x92xbf16>, vector<92x10xbf16>, vector<2x10xf32> -> vector<2x10xf32>
    %140 = arith.addf %135, %139 : vector<2x10xf32>
    %141 = vector.extract_strided_slice %109 {offsets = [12, 0], sizes = [2, 92], strides = [1, 1]} : vector<24x92xbf16> to vector<2x92xbf16>
    %c6 = arith.constant 6 : index
    %c0_47 = arith.constant 0 : index
    %c0_48 = arith.constant 0 : index
    %142 = vector.load %arg9[%c6, %c0_47, %c0_48] : memref<12x92x10xbf16, #tpu.memory_space<vmem>>, vector<1x92x10xbf16>
    %143 = vector.shape_cast %142 : vector<1x92x10xbf16> to vector<92x10xbf16>
    %cst_49 = arith.constant dense<0.000000e+00> : vector<2x10xf32>
    %144 = tpu.matmul %141, %143, %cst_49 {dimension_numbers = #tpu.dot_dimension_numbers<[1], [0], [0], [1], [0, 0, 1, 1], [], []>} : vector<2x92xbf16>, vector<92x10xbf16>, vector<2x10xf32> -> vector<2x10xf32>
    %145 = arith.addf %140, %144 : vector<2x10xf32>
    %146 = vector.extract_strided_slice %109 {offsets = [14, 0], sizes = [2, 92], strides = [1, 1]} : vector<24x92xbf16> to vector<2x92xbf16>
    %c7 = arith.constant 7 : index
    %c0_50 = arith.constant 0 : index
    %c0_51 = arith.constant 0 : index
    %147 = vector.load %arg9[%c7, %c0_50, %c0_51] : memref<12x92x10xbf16, #tpu.memory_space<vmem>>, vector<1x92x10xbf16>
    %148 = vector.shape_cast %147 : vector<1x92x10xbf16> to vector<92x10xbf16>
    %cst_52 = arith.constant dense<0.000000e+00> : vector<2x10xf32>
    %149 = tpu.matmul %146, %148, %cst_52 {dimension_numbers = #tpu.dot_dimension_numbers<[1], [0], [0], [1], [0, 0, 1, 1], [], []>} : vector<2x92xbf16>, vector<92x10xbf16>, vector<2x10xf32> -> vector<2x10xf32>
    %150 = arith.addf %145, %149 : vector<2x10xf32>
    %151 = vector.extract_strided_slice %109 {offsets = [16, 0], sizes = [2, 92], strides = [1, 1]} : vector<24x92xbf16> to vector<2x92xbf16>
    %c8 = arith.constant 8 : index
    %c0_53 = arith.constant 0 : index
    %c0_54 = arith.constant 0 : index
    %152 = vector.load %arg9[%c8, %c0_53, %c0_54] : memref<12x92x10xbf16, #tpu.memory_space<vmem>>, vector<1x92x10xbf16>
    %153 = vector.shape_cast %152 : vector<1x92x10xbf16> to vector<92x10xbf16>
    %cst_55 = arith.constant dense<0.000000e+00> : vector<2x10xf32>
    %154 = tpu.matmul %151, %153, %cst_55 {dimension_numbers = #tpu.dot_dimension_numbers<[1], [0], [0], [1], [0, 0, 1, 1], [], []>} : vector<2x92xbf16>, vector<92x10xbf16>, vector<2x10xf32> -> vector<2x10xf32>
    %155 = arith.addf %150, %154 : vector<2x10xf32>
    %156 = vector.extract_strided_slice %109 {offsets = [18, 0], sizes = [2, 92], strides = [1, 1]} : vector<24x92xbf16> to vector<2x92xbf16>
    %c9 = arith.constant 9 : index
    %c0_56 = arith.constant 0 : index
    %c0_57 = arith.constant 0 : index
    %157 = vector.load %arg9[%c9, %c0_56, %c0_57] : memref<12x92x10xbf16, #tpu.memory_space<vmem>>, vector<1x92x10xbf16>
    %158 = vector.shape_cast %157 : vector<1x92x10xbf16> to vector<92x10xbf16>
    %cst_58 = arith.constant dense<0.000000e+00> : vector<2x10xf32>
    %159 = tpu.matmul %156, %158, %cst_58 {dimension_numbers = #tpu.dot_dimension_numbers<[1], [0], [0], [1], [0, 0, 1, 1], [], []>} : vector<2x92xbf16>, vector<92x10xbf16>, vector<2x10xf32> -> vector<2x10xf32>
    %160 = arith.addf %155, %159 : vector<2x10xf32>
    %161 = vector.extract_strided_slice %109 {offsets = [20, 0], sizes = [2, 92], strides = [1, 1]} : vector<24x92xbf16> to vector<2x92xbf16>
    %c10 = arith.constant 10 : index
    %c0_59 = arith.constant 0 : index
    %c0_60 = arith.constant 0 : index
    %162 = vector.load %arg9[%c10, %c0_59, %c0_60] : memref<12x92x10xbf16, #tpu.memory_space<vmem>>, vector<1x92x10xbf16>
    %163 = vector.shape_cast %162 : vector<1x92x10xbf16> to vector<92x10xbf16>
    %cst_61 = arith.constant dense<0.000000e+00> : vector<2x10xf32>
    %164 = tpu.matmul %161, %163, %cst_61 {dimension_numbers = #tpu.dot_dimension_numbers<[1], [0], [0], [1], [0, 0, 1, 1], [], []>} : vector<2x92xbf16>, vector<92x10xbf16>, vector<2x10xf32> -> vector<2x10xf32>
    %165 = arith.addf %160, %164 : vector<2x10xf32>
    %166 = vector.extract_strided_slice %109 {offsets = [22, 0], sizes = [2, 92], strides = [1, 1]} : vector<24x92xbf16> to vector<2x92xbf16>
    %c11 = arith.constant 11 : index
    %c0_62 = arith.constant 0 : index
    %c0_63 = arith.constant 0 : index
    %167 = vector.load %arg9[%c11, %c0_62, %c0_63] : memref<12x92x10xbf16, #tpu.memory_space<vmem>>, vector<1x92x10xbf16>
    %168 = vector.shape_cast %167 : vector<1x92x10xbf16> to vector<92x10xbf16>
    %cst_64 = arith.constant dense<0.000000e+00> : vector<2x10xf32>
    %169 = tpu.matmul %166, %168, %cst_64 {dimension_numbers = #tpu.dot_dimension_numbers<[1], [0], [0], [1], [0, 0, 1, 1], [], []>} : vector<2x92xbf16>, vector<92x10xbf16>, vector<2x10xf32> -> vector<2x10xf32>
    %170 = arith.addf %165, %169 : vector<2x10xf32>
    %c0_65 = arith.constant 0 : index
    %c0_66 = arith.constant 0 : index
    %171 = vector.load %arg10[%c0_65, %c0_66] : memref<1x10xf32, #tpu.memory_space<vmem>>, vector<1x10xf32>
    %172 = vector.broadcast %171 : vector<1x10xf32> to vector<2x10xf32>
    %173 = arith.addf %170, %172 : vector<2x10xf32>
    %c0_67 = arith.constant 0 : index
    %c0_68 = arith.constant 0 : index
    %174 = vector.load %arg11[%c0_67, %c0_68] : memref<2x10xf32, #tpu.memory_space<vmem>>, vector<2x10xf32>
    tpu.vector_store %arg11[%c0_67, %c0_68], %173 {strides = array<i32>} : memref<2x10xf32, #tpu.memory_space<vmem>>, vector<2x10xf32>,
    return
  }
}

</mosaic_0001>

<llo_original>
// kernel: forward.1
$region0: #{forward.1}
  #allocation0 [shape = 'u32[]', space=smem, size = 0x4, offset = 0x4, fixed_abs, tag = 'smem constant byte address 0x4 - core index']
  #allocation1 [shape = 'u32[144,128]{1,0:T(1,128)}', space=vmem, size = 0x12000, scoped, tag = 'internal scratch']
  %s0 = inlined_call_operand.vmem [shape: f32[24,324], index: 0, kind: input, shape index: {}]
  %s1 = inlined_call_operand.vmem [shape: bf16[24,216], index: 1, kind: input, shape index: {}]
  %s2 = inlined_call_operand.vmem [shape: f32[24,1], index: 2, kind: input, shape index: {}]
  %s3 = inlined_call_operand.vmem [shape: bf16[286,400], index: 3, kind: input, shape index: {}]
  %s4 = inlined_call_operand.vmem [shape: bf16[24,600], index: 4, kind: input, shape index: {}]
  %s5 = inlined_call_operand.vmem [shape: f32[24,1], index: 5, kind: input, shape index: {}]
  %s6 = inlined_call_operand.vmem [shape: bf16[316,144], index: 6, kind: input, shape index: {}]
  %s7 = inlined_call_operand.vmem [shape: bf16[24,600], index: 7, kind: input, shape index: {}]
  %s8 = inlined_call_operand.vmem [shape: f32[24,1], index: 8, kind: input, shape index: {}]
  %s9 = inlined_call_operand.vmem [shape: bf16[12,92,10], index: 9, kind: input, shape index: {}]
  %s10 = inlined_call_operand.vmem [shape: f32[1,10], index: 10, kind: input, shape index: {}]
  %s11 = inlined_call_operand.hbm [shape: f32[2,10], index: 11, kind: output, shape index: {}]
  %s12 = sld [smem:[#allocation0]]
  $region54: #{forward.1} parent=0
    _
  %s14 = ssub.s32 1, %s12
  %s15 = scalar_select 0, %s14, %s12
  $region1: #{forward.1} parent=0
    #allocation2 [shape = 'u8[1024]{0}', space=vmem, size = 0x400, scoped, tag = 'output window, operand 0, single buffered']
    #allocation3 [shape = 's32[1]{0}', space=sflag, size = 0x4, scoped, tag = 'scoped memory for forward.1']
    %16 = vsyncpa [#allocation3], 0
    // Predicated region
    $region2: #{forward.1} parent=1 // pred_check
      _
    $region3: #{forward.1} parent=1 // pred_check_branch
      %18 = sbr.rel (0) target = $region5
    $region4: #{forward.1} parent=1 // pred_region
      _
    $region5: #{forward.1} parent=1 // pred_fallthru
      _
    // Predicated region
    $region6: #{forward.1} parent=1 // pred_check
      _
    $region7: #{forward.1} parent=1 // pred_check_branch
      %20 = sbr.rel (0) target = $region9
    $region8: #{forward.1} parent=1 // pred_region
      _
    $region9: #{forward.1} parent=1 // pred_fallthru
      _
    // Predicated region
    $region10: #{forward.1} parent=1 // pred_check
      _
    $region11: #{forward.1} parent=1 // pred_check_branch
      %22 = sbr.rel (0) target = $region13
    $region12: #{forward.1} parent=1 // pred_region
      _
    $region13: #{forward.1} parent=1 // pred_fallthru
      _
    // Predicated region
    $region14: #{forward.1} parent=1 // pred_check
      _
    $region15: #{forward.1} parent=1 // pred_check_branch
      %24 = sbr.rel (0) target = $region17
    $region16: #{forward.1} parent=1 // pred_region
      _
    $region17: #{forward.1} parent=1 // pred_fallthru
      _
    // Predicated region
    $region18: #{forward.1} parent=1 // pred_check
      _
    $region19: #{forward.1} parent=1 // pred_check_branch
      %26 = sbr.rel (0) target = $region21
    $region20: #{forward.1} parent=1 // pred_region
      _
    $region21: #{forward.1} parent=1 // pred_fallthru
      _
    // Predicated region
    $region22: #{forward.1} parent=1 // pred_check
      _
    $region23: #{forward.1} parent=1 // pred_check_branch
      %28 = sbr.rel (0) target = $region25
    $region24: #{forward.1} parent=1 // pred_region
      _
    $region25: #{forward.1} parent=1 // pred_fallthru
      _
    // Predicated region
    $region26: #{forward.1} parent=1 // pred_check
      _
    $region27: #{forward.1} parent=1 // pred_check_branch
      %30 = sbr.rel (0) target = $region29
    $region28: #{forward.1} parent=1 // pred_region
      _
    $region29: #{forward.1} parent=1 // pred_fallthru
      _
    // Predicated region
    $region30: #{forward.1} parent=1 // pred_check
      _
    $region31: #{forward.1} parent=1 // pred_check_branch
      %32 = sbr.rel (0) target = $region33
    $region32: #{forward.1} parent=1 // pred_region
      _
    $region33: #{forward.1} parent=1 // pred_fallthru
      _
    // Predicated region
    $region34: #{forward.1} parent=1 // pred_check
      _
    $region35: #{forward.1} parent=1 // pred_check_branch
      %34 = sbr.rel (0) target = $region37
    $region36: #{forward.1} parent=1 // pred_region
      _
    $region37: #{forward.1} parent=1 // pred_fallthru
      _
    // Predicated region
    $region38: #{forward.1} parent=1 // pred_check
      _
    $region39: #{forward.1} parent=1 // pred_check_branch
      %36 = sbr.rel (0) target = $region41
    $region40: #{forward.1} parent=1 // pred_region
      _
    $region41: #{forward.1} parent=1 // pred_fallthru
      _
    // Predicated region
    $region42: #{forward.1} parent=1 // pred_check
      _
    $region43: #{forward.1} parent=1 // pred_check_branch
      %38 = sbr.rel (0) target = $region45
    $region44: #{forward.1} parent=1 // pred_region
      _
    $region45: #{forward.1} parent=1 // pred_fallthru
      _
    %v40 = vld [vmem:[%s0] sm:$0xff]
    %v41 = vld [vmem:[%s0 + $0x8] sm:$0xff]
    %v42 = vld [vmem:[%s0 + $0x10] sm:$0xff]
    %v43 = vld [vmem:[%s0 + $0x18] sm:$0xff]
    %v44 = vld [vmem:[%s0 + $0x20] sm:$0xff]
    %v45 = vld [vmem:[%s0 + $0x28] sm:$0xff]
    %v46 = vld [vmem:[%s0 + $0x30] sm:$0xff]
    %v47 = vld [vmem:[%s0 + $0x38] sm:$0xff]
    %v48 = vld [vmem:[%s0 + $0x40] sm:$0xff]
    %v49 = vld [vmem:[%s1] sm:$0xff]
    %v50 = vld [vmem:[%s1 + $0x8] sm:$0xff]
    %v51 = vld [vmem:[%s1 + $0x10] sm:$0xff]
    %61 = vrot.lane.b32.xlu0 %v40, 127
    %v62 = vpop.permute.xlu0 %61
    %63 = vrot.lane.b32.xlu0 %v41, 127
    %v64 = vpop.permute.xlu0 %63
    %65 = vrot.lane.b32.xlu0 %v42, 127
    %v66 = vpop.permute.xlu0 %65
    %67 = vrot.lane.b32.xlu0 %v43, 127
    %v68 = vpop.permute.xlu0 %67
    %69 = vrot.lane.b32.xlu0 %v44, 127
    %v70 = vpop.permute.xlu0 %69
    %71 = vrot.lane.b32.xlu0 %v45, 127
    %v72 = vpop.permute.xlu0 %71
    %73 = vrot.lane.b32.xlu0 %v46, 127
    %v74 = vpop.permute.xlu0 %73
    %75 = vrot.lane.b32.xlu0 %v47, 127
    %v76 = vpop.permute.xlu0 %75
    %77 = vrot.lane.b32.xlu0 %v48, 127
    %v78 = vpop.permute.xlu0 %77
    %vm79 = vcmask 1039360
    %v80 = vsel %vm79, %v62, %v64
    %v81 = vsel %vm79, %v64, %v66
    %v82 = vsel %vm79, %v68, %v70
    %v83 = vsel %vm79, %v70, %v72
    %v84 = vsel %vm79, %v74, %v76
    %v85 = vsel %vm79, %v76, %v78
    %95 = vrot.lane.b32.xlu0 %v40, 126
    %v96 = vpop.permute.xlu0 %95
    %97 = vrot.lane.b32.xlu0 %v41, 126
    %v98 = vpop.permute.xlu0 %97
    %99 = vrot.lane.b32.xlu0 %v42, 126
    %v100 = vpop.permute.xlu0 %99
    %101 = vrot.lane.b32.xlu0 %v43, 126
    %v102 = vpop.permute.xlu0 %101
    %103 = vrot.lane.b32.xlu0 %v44, 126
    %v104 = vpop.permute.xlu0 %103
    %105 = vrot.lane.b32.xlu0 %v45, 126
    %v106 = vpop.permute.xlu0 %105
    %107 = vrot.lane.b32.xlu0 %v46, 126
    %v108 = vpop.permute.xlu0 %107
    %109 = vrot.lane.b32.xlu0 %v47, 126
    %v110 = vpop.permute.xlu0 %109
    %111 = vrot.lane.b32.xlu0 %v48, 126
    %v112 = vpop.permute.xlu0 %111
    %vm113 = vcmask 1031168
    %v114 = vsel %vm113, %v96, %v98
    %v115 = vsel %vm113, %v98, %v100
    %v116 = vsel %vm113, %v102, %v104
    %v117 = vsel %vm113, %v104, %v106
    %v118 = vsel %vm113, %v108, %v110
    %v119 = vsel %vm113, %v110, %v112
    %129 = vrot.lane.b32.xlu0 %v40, 110
    %v130 = vpop.permute.xlu0 %129
    %131 = vrot.lane.b32.xlu0 %v41, 110
    %v132 = vpop.permute.xlu0 %131
    %133 = vrot.lane.b32.xlu0 %v42, 110
    %v134 = vpop.permute.xlu0 %133
    %135 = vrot.lane.b32.xlu0 %v43, 110
    %v136 = vpop.permute.xlu0 %135
    %137 = vrot.lane.b32.xlu0 %v44, 110
    %v138 = vpop.permute.xlu0 %137
    %139 = vrot.lane.b32.xlu0 %v45, 110
    %v140 = vpop.permute.xlu0 %139
    %141 = vrot.lane.b32.xlu0 %v46, 110
    %v142 = vpop.permute.xlu0 %141
    %143 = vrot.lane.b32.xlu0 %v47, 110
    %v144 = vpop.permute.xlu0 %143
    %145 = vrot.lane.b32.xlu0 %v48, 110
    %v146 = vpop.permute.xlu0 %145
    %vm147 = vcmask 900096
    %v148 = vsel %vm147, %v130, %v132
    %v149 = vsel %vm147, %v132, %v134
    %v150 = vsel %vm147, %v136, %v138
    %v151 = vsel %vm147, %v138, %v140
    %v152 = vsel %vm147, %v142, %v144
    %v153 = vsel %vm147, %v144, %v146
    %163 = vrot.lane.b32.xlu0 %v40, 109
    %v164 = vpop.permute.xlu0 %163
    %165 = vrot.lane.b32.xlu0 %v41, 109
    %v166 = vpop.permute.xlu0 %165
    %167 = vrot.lane.b32.xlu0 %v42, 109
    %v168 = vpop.permute.xlu0 %167
    %169 = vrot.lane.b32.xlu0 %v43, 109
    %v170 = vpop.permute.xlu0 %169
    %171 = vrot.lane.b32.xlu0 %v44, 109
    %v172 = vpop.permute.xlu0 %171
    %173 = vrot.lane.b32.xlu0 %v45, 109
    %v174 = vpop.permute.xlu0 %173
    %175 = vrot.lane.b32.xlu0 %v46, 109
    %v176 = vpop.permute.xlu0 %175
    %177 = vrot.lane.b32.xlu0 %v47, 109
    %v178 = vpop.permute.xlu0 %177
    %179 = vrot.lane.b32.xlu0 %v48, 109
    %v180 = vpop.permute.xlu0 %179
    %vm181 = vcmask 891904
    %v182 = vsel %vm181, %v164, %v166
    %v183 = vsel %vm181, %v166, %v168
    %v184 = vsel %vm181, %v170, %v172
    %v185 = vsel %vm181, %v172, %v174
    %v186 = vsel %vm181, %v176, %v178
    %v187 = vsel %vm181, %v178, %v180
    %197 = vrot.lane.b32.xlu0 %v40, 108
    %v198 = vpop.permute.xlu0 %197
    %199 = vrot.lane.b32.xlu0 %v41, 108
    %v200 = vpop.permute.xlu0 %199
    %201 = vrot.lane.b32.xlu0 %v42, 108
    %v202 = vpop.permute.xlu0 %201
    %203 = vrot.lane.b32.xlu0 %v43, 108
    %v204 = vpop.permute.xlu0 %203
    %205 = vrot.lane.b32.xlu0 %v44, 108
    %v206 = vpop.permute.xlu0 %205
    %207 = vrot.lane.b32.xlu0 %v45, 108
    %v208 = vpop.permute.xlu0 %207
    %209 = vrot.lane.b32.xlu0 %v46, 108
    %v210 = vpop.permute.xlu0 %209
    %211 = vrot.lane.b32.xlu0 %v47, 108
    %v212 = vpop.permute.xlu0 %211
    %213 = vrot.lane.b32.xlu0 %v48, 108
    %v214 = vpop.permute.xlu0 %213
    %vm215 = vcmask 883712
    %v216 = vsel %vm215, %v198, %v200
    %v217 = vsel %vm215, %v200, %v202
    %v218 = vsel %vm215, %v204, %v206
    %v219 = vsel %vm215, %v206, %v208
    %v220 = vsel %vm215, %v210, %v212
    %v221 = vsel %vm215, %v212, %v214
    %231 = vrot.lane.b32.xlu0 %v40, 92
    %v232 = vpop.permute.xlu0 %231
    %233 = vrot.lane.b32.xlu0 %v41, 92
    %v234 = vpop.permute.xlu0 %233
    %235 = vrot.lane.b32.xlu0 %v42, 92
    %v236 = vpop.permute.xlu0 %235
    %237 = vrot.lane.b32.xlu0 %v43, 92
    %v238 = vpop.permute.xlu0 %237
    %239 = vrot.lane.b32.xlu0 %v44, 92
    %v240 = vpop.permute.xlu0 %239
    %241 = vrot.lane.b32.xlu0 %v45, 92
    %v242 = vpop.permute.xlu0 %241
    %243 = vrot.lane.b32.xlu0 %v46, 92
    %v244 = vpop.permute.xlu0 %243
    %245 = vrot.lane.b32.xlu0 %v47, 92
    %v246 = vpop.permute.xlu0 %245
    %247 = vrot.lane.b32.xlu0 %v48, 92
    %v248 = vpop.permute.xlu0 %247
    %vm249 = vcmask 752640
    %v250 = vsel %vm249, %v232, %v234
    %v251 = vsel %vm249, %v234, %v236
    %v252 = vsel %vm249, %v238, %v240
    %v253 = vsel %vm249, %v240, %v242
    %v254 = vsel %vm249, %v244, %v246
    %v255 = vsel %vm249, %v246, %v248
    %265 = vrot.lane.b32.xlu0 %v40, 91
    %v266 = vpop.permute.xlu0 %265
    %267 = vrot.lane.b32.xlu0 %v41, 91
    %v268 = vpop.permute.xlu0 %267
    %269 = vrot.lane.b32.xlu0 %v42, 91
    %v270 = vpop.permute.xlu0 %269
    %271 = vrot.lane.b32.xlu0 %v43, 91
    %v272 = vpop.permute.xlu0 %271
    %273 = vrot.lane.b32.xlu0 %v44, 91
    %v274 = vpop.permute.xlu0 %273
    %275 = vrot.lane.b32.xlu0 %v45, 91
    %v276 = vpop.permute.xlu0 %275
    %277 = vrot.lane.b32.xlu0 %v46, 91
    %v278 = vpop.permute.xlu0 %277
    %279 = vrot.lane.b32.xlu0 %v47, 91
    %v280 = vpop.permute.xlu0 %279
    %281 = vrot.lane.b32.xlu0 %v48, 91
    %v282 = vpop.permute.xlu0 %281
    %vm283 = vcmask 744448
    %v284 = vsel %vm283, %v266, %v268
    %v285 = vsel %vm283, %v268, %v270
    %v286 = vsel %vm283, %v272, %v274
    %v287 = vsel %vm283, %v274, %v276
    %v288 = vsel %vm283, %v278, %v280
    %v289 = vsel %vm283, %v280, %v282
    %299 = vrot.lane.b32.xlu0 %v40, 90
    %v300 = vpop.permute.xlu0 %299
    %301 = vrot.lane.b32.xlu0 %v41, 90
    %v302 = vpop.permute.xlu0 %301
    %303 = vrot.lane.b32.xlu0 %v42, 90
    %v304 = vpop.permute.xlu0 %303
    %305 = vrot.lane.b32.xlu0 %v43, 90
    %v306 = vpop.permute.xlu0 %305
    %307 = vrot.lane.b32.xlu0 %v44, 90
    %v308 = vpop.permute.xlu0 %307
    %309 = vrot.lane.b32.xlu0 %v45, 90
    %v310 = vpop.permute.xlu0 %309
    %311 = vrot.lane.b32.xlu0 %v46, 90
    %v312 = vpop.permute.xlu0 %311
    %313 = vrot.lane.b32.xlu0 %v47, 90
    %v314 = vpop.permute.xlu0 %313
    %315 = vrot.lane.b32.xlu0 %v48, 90
    %v316 = vpop.permute.xlu0 %315
    %vm317 = vcmask 736256
    %v318 = vsel %vm317, %v300, %v302
    %v319 = vsel %vm317, %v302, %v304
    %v320 = vsel %vm317, %v306, %v308
    %v321 = vsel %vm317, %v308, %v310
    %v322 = vsel %vm317, %v312, %v314
    %v323 = vsel %vm317, %v314, %v316
    %v333 = vpack.c.bf16 %v43, %v40
    %v334 = vpack.c.bf16 %v44, %v41
    %v335 = vpack.c.bf16 %v45, %v42
    %v336 = vpack.c.bf16 %v80, %v46
    %v337 = vpack.c.bf16 %v81, %v47
    %v338 = vpack.c.bf16 %v66, %v48
    %v339 = vpack.c.bf16 %v84, %v82
    %v340 = vpack.c.bf16 %v85, %v83
    %v341 = vpack.c.bf16 %v78, %v72
    %v342 = vpack.c.bf16 %v116, %v114
    %v343 = vpack.c.bf16 %v117, %v115
    %v344 = vpack.c.bf16 %v106, %v100
    %v345 = vpack.c.bf16 %v148, %v118
    %v346 = vpack.c.bf16 %v149, %v119
    %v347 = vpack.c.bf16 %v134, %v112
    %v348 = vpack.c.bf16 %v152, %v150
    %v349 = vpack.c.bf16 %v153, %v151
    %v350 = vpack.c.bf16 %v146, %v140
    %v351 = vpack.c.bf16 %v184, %v182
    %v352 = vpack.c.bf16 %v185, %v183
    %v353 = vpack.c.bf16 %v174, %v168
    %v354 = vpack.c.bf16 %v216, %v186
    %v355 = vpack.c.bf16 %v217, %v187
    %v356 = vpack.c.bf16 %v202, %v180
    %v357 = vpack.c.bf16 %v220, %v218
    %v358 = vpack.c.bf16 %v221, %v219
    %v359 = vpack.c.bf16 %v214, %v208
    %v360 = vpack.c.bf16 %v252, %v250
    %v361 = vpack.c.bf16 %v253, %v251
    %v362 = vpack.c.bf16 %v242, %v236
    %v363 = vpack.c.bf16 %v284, %v254
    %v364 = vpack.c.bf16 %v285, %v255
    %v365 = vpack.c.bf16 %v270, %v248
    %v366 = vpack.c.bf16 %v288, %v286
    %v367 = vpack.c.bf16 %v289, %v287
    %v368 = vpack.c.bf16 %v282, %v276
    %v369 = vpack.c.bf16 %v320, %v318
    %v370 = vpack.c.bf16 %v321, %v319
    %v371 = vpack.c.bf16 %v310, %v304
    %v372 = vpack.c.bf16 %v322, %v322
    %v373 = vpack.c.bf16 %v323, %v323
    %v374 = vpack.c.bf16 %v316, %v316
    %v375 = vld [vmem:[%s2] sm:$0xff]
    %v376 = vld [vmem:[%s2 + $0x8] sm:$0xff]
    %v377 = vld [vmem:[%s2 + $0x10] sm:$0xff]
    %379 = vset.pattern.permute.xlu0 0
    %380 = vperm.xlu0 %379, %v375
    %v381 = vpop.permute.xlu0 %380
    %384 = vset.pattern.permute.xlu0 0
    %385 = vperm.xlu0 %384, %v376
    %v386 = vpop.permute.xlu0 %385
    %389 = vset.pattern.permute.xlu0 0
    %390 = vperm.xlu0 %389, %v377
    %v391 = vpop.permute.xlu0 %390
    %v396 = vunpack.c.l.b16 %v49
    %v397 = vunpack.c.h.b16 %v49
    %v398 = vunpack.c.l.b16 %v50
    %v399 = vunpack.c.h.b16 %v50
    %v400 = vunpack.c.l.b16 %v51
    %v401 = vunpack.c.h.b16 %v51
    %v402 = vpack.c.b16 %v398, %v396
    %v403 = vpack.c.b16 %v399, %v397
    %v404 = vpack.c.b16 %v400, %v400
    %v405 = vpack.c.b16 %v401, %v401
    %vm408 = vcmask 719872
    %v410 = vsel %vm408, %v403, 0
    %v413 = vsel %vm408, %v405, 0
    %vm415 = vcmask 1043456
    %v417 = vsel %vm415, %v372, 0
    %v420 = vsel %vm415, %v373, 0
    %v423 = vsel %vm415, %v374, 0
    %425 = vmatprep.subr.bf16.mxu0 %v355
    %426 = vmatpush1.bf16.msra.mxu0 %v354
    %427 = vmatprep.subr.bf16.mxu0 %v352
    %428 = vmatpush1.bf16.msra.mxu0 %v351
    %429 = vmatprep.subr.bf16.mxu0 %v349
    %430 = vmatpush1.bf16.msra.mxu0 %v348
    %431 = vmatprep.subr.bf16.mxu0 %v346
    %432 = vmatpush1.bf16.msra.mxu0 %v345
    %433 = vmatprep.subr.bf16.mxu0 %v343
    %434 = vmatpush1.bf16.msra.mxu0 %v342
    %435 = vmatprep.subr.bf16.mxu0 %v340
    %436 = vmatpush1.bf16.msra.mxu0 %v339
    %437 = vmatprep.subr.bf16.mxu0 %v337
    %438 = vmatpush1.bf16.msra.mxu0 %v336
    %439 = vmatprep.subr.bf16.mxu0 %v334
    %440 = vmatpush1.bf16.msra.mxu0 %v333
    %441 = vmatprep.subr.bf16.mxu0 0
    %442 = vmatpush2.bf16.msra.mxu0 0
    %443 = vmatprep.subr.bf16.mxu0 0
    %444 = vmatpush2.bf16.msra.mxu0 0
    %445 = vmatprep.subr.bf16.mxu0 %v420
    %446 = vmatpush2.bf16.msra.mxu0 %v417
    %447 = vmatprep.subr.bf16.mxu0 %v370
    %448 = vmatpush2.bf16.msra.mxu0 %v369
    %449 = vmatprep.subr.bf16.mxu0 %v367
    %450 = vmatpush2.bf16.msra.mxu0 %v366
    %451 = vmatprep.subr.bf16.mxu0 %v364
    %452 = vmatpush2.bf16.msra.mxu0 %v363
    %453 = vmatprep.subr.bf16.mxu0 %v361
    %454 = vmatpush2.bf16.msra.mxu0 %v360
    %455 = vmatprep.subr.bf16.mxu0 %v358
    %456 = vmatpush2.bf16.msra.mxu0 %v357
    %457 = vmatprep.mubr.bf16.mxu0 %v410
    %458 = vmatmul.mubr.bf16.gmra.mxu0 %v402
    %v459 = vpop.f32.mrf.mxu0
    %v460 = vadd.f32 %v381, %v459
    %v461 = vpop.f32.mrf.mxu0
    %v462 = vadd.f32 %v381, %v461
    %v463 = vpop.f32.mrf.mxu0
    %v464 = vadd.f32 %v386, %v463
    %v465 = vpop.f32.mrf.mxu0
    %v466 = vadd.f32 %v386, %v465
    %467 = vmatprep.mubr.bf16.mxu0 %v413
    %468 = vmatmul.mubr.bf16.gmra.mxu0 %v404
    %v469 = vpop.f32.mrf.mxu0
    %v470 = vadd.f32 %v391, %v469
    %v471 = vpop.f32.mrf.mxu0
    %v472 = vadd.f32 %v391, %v471
    %v473 = vpop.f32.mrf.mxu0
    %v474 = vpop.f32.mrf.mxu0
    %475 = vdwg.mxu0
    %476 = vmatprep.subr.bf16.mxu0 0
    %477 = vmatpush1.bf16.msra.mxu0 %v356
    %478 = vmatprep.subr.bf16.mxu0 0
    %479 = vmatpush1.bf16.msra.mxu0 %v353
    %480 = vmatprep.subr.bf16.mxu0 0
    %481 = vmatpush1.bf16.msra.mxu0 %v350
    %482 = vmatprep.subr.bf16.mxu0 0
    %483 = vmatpush1.bf16.msra.mxu0 %v347
    %484 = vmatprep.subr.bf16.mxu0 0
    %485 = vmatpush1.bf16.msra.mxu0 %v344
    %486 = vmatprep.subr.bf16.mxu0 0
    %487 = vmatpush1.bf16.msra.mxu0 %v341
    %488 = vmatprep.subr.bf16.mxu0 0
    %489 = vmatpush1.bf16.msra.mxu0 %v338
    %490 = vmatprep.subr.bf16.mxu0 0
    %491 = vmatpush1.bf16.msra.mxu0 %v335
    %492 = vmatprep.subr.bf16.mxu0 0
    %493 = vmatpush2.bf16.msra.mxu0 0
    %494 = vmatprep.subr.bf16.mxu0 0
    %495 = vmatpush2.bf16.msra.mxu0 0
    %496 = vmatprep.subr.bf16.mxu0 0
    %497 = vmatpush2.bf16.msra.mxu0 %v423
    %498 = vmatprep.subr.bf16.mxu0 0
    %499 = vmatpush2.bf16.msra.mxu0 %v371
    %500 = vmatprep.subr.bf16.mxu0 0
    %501 = vmatpush2.bf16.msra.mxu0 %v368
    %502 = vmatprep.subr.bf16.mxu0 0
    %503 = vmatpush2.bf16.msra.mxu0 %v365
    %504 = vmatprep.subr.bf16.mxu0 0
    %505 = vmatpush2.bf16.msra.mxu0 %v362
    %506 = vmatprep.subr.bf16.mxu0 0
    %507 = vmatpush2.bf16.msra.mxu0 %v359
    %508 = vmatprep.mubr.bf16.mxu0 %v410
    %509 = vmatmul.mubr.bf16.gmra.mxu0 %v402
    %v510 = vpop.f32.mrf.mxu0
    %v511 = vadd.f32 %v381, %v510
    %v512 = vpop.f32.mrf.mxu0
    %v513 = vpop.f32.mrf.mxu0
    %v514 = vadd.f32 %v386, %v513
    %v515 = vpop.f32.mrf.mxu0
    %516 = vmatprep.mubr.bf16.mxu0 %v413
    %517 = vmatmul.mubr.bf16.gmra.mxu0 %v404
    %v518 = vpop.f32.mrf.mxu0
    %v519 = vadd.f32 %v391, %v518
    %v520 = vpop.f32.mrf.mxu0
    %v521 = vpop.f32.mrf.mxu0
    %v522 = vpop.f32.mrf.mxu0
    %523 = vdwg.mxu0
    %v524 = vsub.f32 0.0, %v460
    %v525 = vsub.f32 0.0, %v462
    %v526 = vsub.f32 0.0, %v511
    %v527 = vsub.f32 0.0, %v464
    %v528 = vsub.f32 0.0, %v466
    %v529 = vsub.f32 0.0, %v514
    %v530 = vsub.f32 0.0, %v470
    %v531 = vsub.f32 0.0, %v472
    %v532 = vsub.f32 0.0, %v519
    %v533 = vmul.f32 %v524, 1.442695
    %v534 = vpow.pop %v533
    %v535 = vmul.f32 %v525, 1.442695
    %v536 = vpow.pop %v535
    %v537 = vmul.f32 %v526, 1.442695
    %v538 = vpow.pop %v537
    %v539 = vmul.f32 %v527, 1.442695
    %v540 = vpow.pop %v539
    %v541 = vmul.f32 %v528, 1.442695
    %v542 = vpow.pop %v541
    %v543 = vmul.f32 %v529, 1.442695
    %v544 = vpow.pop %v543
    %v545 = vmul.f32 %v530, 1.442695
    %v546 = vpow.pop %v545
    %v547 = vmul.f32 %v531, 1.442695
    %v548 = vpow.pop %v547
    %v549 = vmul.f32 %v532, 1.442695
    %v550 = vpow.pop %v549
    %v551 = vadd.f32 %v534, 1.0
    %v552 = vadd.f32 %v536, 1.0
    %v553 = vadd.f32 %v538, 1.0
    %v554 = vadd.f32 %v540, 1.0
    %v555 = vadd.f32 %v542, 1.0
    %v556 = vadd.f32 %v544, 1.0
    %v557 = vadd.f32 %v546, 1.0
    %v558 = vadd.f32 %v548, 1.0
    %v559 = vadd.f32 %v550, 1.0
    %v560 = vrcp.pop %v551
    %v561 = vrcp.pop %v552
    %v562 = vrcp.pop %v553
    %v563 = vrcp.pop %v554
    %v564 = vrcp.pop %v555
    %v565 = vrcp.pop %v556
    %v566 = vrcp.pop %v557
    %v567 = vrcp.pop %v558
    %v568 = vrcp.pop %v559
    %v569 = vpack.c.bf16 %v563, %v560
    %v570 = vpack.c.bf16 %v564, %v561
    %v571 = vpack.c.bf16 %v565, %v562
    %v572 = vpack.c.bf16 %v566, %v566
    %v573 = vpack.c.bf16 %v567, %v567
    %v574 = vpack.c.bf16 %v568, %v568
    %v575 = vld [vmem:[%s3] sm:$0xff]
    %v576 = vld [vmem:[%s3 + $0x8] sm:$0xff]
    %v577 = vld [vmem:[%s3 + $0x10] sm:$0xff]
    %v578 = vld [vmem:[%s3 + $0x18] sm:$0xff]
    %v579 = vld [vmem:[%s3 + $0x20] sm:$0xff]
    %v580 = vld [vmem:[%s3 + $0x28] sm:$0xff]
    %v581 = vld [vmem:[%s3 + $0x30] sm:$0xff]
    %v582 = vld [vmem:[%s3 + $0x38] sm:$0xff]
    %v583 = vld [vmem:[%s3 + $0x40] sm:$0xff]
    %v584 = vld [vmem:[%s3 + $0x48] sm:$0xff]
    %v585 = vld [vmem:[%s3 + $0x50] sm:$0xff]
    %v586 = vld [vmem:[%s3 + $0x58] sm:$0xff]
    %v587 = vld [vmem:[%s3 + $0x60] sm:$0xff]
    %v588 = vld [vmem:[%s3 + $0x68] sm:$0xff]
    %v589 = vld [vmem:[%s3 + $0x70] sm:$0xff]
    %v590 = vld [vmem:[%s3 + $0x78] sm:$0xff]
    %v591 = vld [vmem:[%s3 + $0x80] sm:$0xff]
    %v592 = vld [vmem:[%s3 + $0x88] sm:$0xff]
    %v593 = vld [vmem:[%s3 + $0x90] sm:$0xff]
    %v594 = vld [vmem:[%s3 + $0x98] sm:$0xff]
    %v595 = vld [vmem:[%s3 + $0xa0] sm:$0xff]
    %v596 = vld [vmem:[%s3 + $0xa8] sm:$0xff]
    %v597 = vld [vmem:[%s3 + $0xb0] sm:$0xff]
    %v598 = vld [vmem:[%s3 + $0xb8] sm:$0xff]
    %v599 = vld [vmem:[%s3 + $0xc0] sm:$0xff]
    %v600 = vld [vmem:[%s3 + $0xc8] sm:$0xff]
    %v601 = vld [vmem:[%s3 + $0xd0] sm:$0xff]
    %v602 = vld [vmem:[%s3 + $0xd8] sm:$0xff]
    %v603 = vld [vmem:[%s3 + $0xe0] sm:$0xff]
    %v604 = vld [vmem:[%s3 + $0xe8] sm:$0xff]
    %v605 = vld [vmem:[%s3 + $0xf0] sm:$0xff]
    %v606 = vld [vmem:[%s3 + $0xf8] sm:$0xff]
    %v607 = vld [vmem:[%s3 + $0x100] sm:$0xff]
    %v608 = vld [vmem:[%s3 + $0x108] sm:$0xff]
    %v609 = vld [vmem:[%s3 + $0x110] sm:$0xff]
    %v610 = vld [vmem:[%s3 + $0x118] sm:$0xff]
    %v611 = vld [vmem:[%s3 + $0x120] sm:$0xff]
    %v612 = vld [vmem:[%s3 + $0x128] sm:$0xff]
    %v613 = vld [vmem:[%s3 + $0x130] sm:$0xff]
    %v614 = vld [vmem:[%s3 + $0x138] sm:$0xff]
    %v615 = vld [vmem:[%s3 + $0x140] sm:$0xff]
    %v616 = vld [vmem:[%s3 + $0x148] sm:$0xff]
    %v617 = vld [vmem:[%s3 + $0x150] sm:$0xff]
    %v618 = vld [vmem:[%s3 + $0x158] sm:$0xff]
    %v619 = vld [vmem:[%s3 + $0x160] sm:$0xff]
    %v620 = vld [vmem:[%s3 + $0x168] sm:$0xff]
    %v621 = vld [vmem:[%s3 + $0x170] sm:$0xff]
    %v622 = vld [vmem:[%s3 + $0x178] sm:$0xff]
    %v623 = vld [vmem:[%s3 + $0x180] sm:$0xff]
    %v624 = vld [vmem:[%s3 + $0x188] sm:$0xff]
    %v625 = vld [vmem:[%s3 + $0x190] sm:$0xff]
    %v626 = vld [vmem:[%s3 + $0x198] sm:$0xff]
    %v627 = vld [vmem:[%s3 + $0x1a0] sm:$0xff]
    %v628 = vld [vmem:[%s3 + $0x1a8] sm:$0xff]
    %v629 = vld [vmem:[%s3 + $0x1b0] sm:$0xff]
    %v630 = vld [vmem:[%s3 + $0x1b8] sm:$0xff]
    %v631 = vld [vmem:[%s3 + $0x1c0] sm:$0xff]
    %v632 = vld [vmem:[%s3 + $0x1c8] sm:$0xff]
    %v633 = vld [vmem:[%s3 + $0x1d0] sm:$0xff]
    %v634 = vld [vmem:[%s3 + $0x1d8] sm:$0xff]
    %v635 = vld [vmem:[%s3 + $0x1e0] sm:$0xff]
    %v636 = vld [vmem:[%s3 + $0x1e8] sm:$0xff]
    %v637 = vld [vmem:[%s3 + $0x1f0] sm:$0xff]
    %v638 = vld [vmem:[%s3 + $0x1f8] sm:$0xff]
    %v639 = vld [vmem:[%s3 + $0x200] sm:$0xff]
    %v640 = vld [vmem:[%s3 + $0x208] sm:$0xff]
    %v641 = vld [vmem:[%s3 + $0x210] sm:$0xff]
    %v642 = vld [vmem:[%s3 + $0x218] sm:$0xff]
    %v643 = vld [vmem:[%s3 + $0x220] sm:$0xff]
    %v644 = vld [vmem:[%s3 + $0x228] sm:$0xff]
    %v645 = vld [vmem:[%s3 + $0x230] sm:$0x77]
    %v646 = vld [vmem:[%s3 + $0x238] sm:$0x77]
    %v719 = vunpack.c.l.b16 %v575
    %v720 = vunpack.c.h.b16 %v575
    %v721 = vunpack.c.l.b16 %v576
    %v722 = vunpack.c.h.b16 %v576
    %v723 = vunpack.c.l.b16 %v577
    %v724 = vunpack.c.h.b16 %v577
    %v725 = vunpack.c.l.b16 %v578
    %v726 = vunpack.c.h.b16 %v578
    %v727 = vunpack.c.l.b16 %v579
    %v728 = vunpack.c.h.b16 %v579
    %v729 = vunpack.c.l.b16 %v580
    %v730 = vunpack.c.h.b16 %v580
    %v731 = vunpack.c.l.b16 %v581
    %v732 = vunpack.c.h.b16 %v581
    %v733 = vunpack.c.l.b16 %v582
    %v734 = vunpack.c.h.b16 %v582
    %v735 = vunpack.c.l.b16 %v583
    %v736 = vunpack.c.h.b16 %v583
    %v737 = vunpack.c.l.b16 %v584
    %v738 = vunpack.c.h.b16 %v584
    %v739 = vunpack.c.l.b16 %v585
    %v740 = vunpack.c.h.b16 %v585
    %v741 = vunpack.c.l.b16 %v586
    %v742 = vunpack.c.h.b16 %v586
    %v743 = vunpack.c.l.b16 %v587
    %v744 = vunpack.c.h.b16 %v587
    %v745 = vunpack.c.l.b16 %v588
    %v746 = vunpack.c.h.b16 %v588
    %v747 = vunpack.c.l.b16 %v589
    %v748 = vunpack.c.h.b16 %v589
    %v749 = vunpack.c.l.b16 %v590
    %v750 = vunpack.c.h.b16 %v590
    %v751 = vunpack.c.l.b16 %v591
    %v752 = vunpack.c.h.b16 %v591
    %v753 = vunpack.c.l.b16 %v592
    %v754 = vunpack.c.h.b16 %v592
    %v755 = vunpack.c.l.b16 %v593
    %v756 = vunpack.c.h.b16 %v593
    %v757 = vunpack.c.l.b16 %v594
    %v758 = vunpack.c.h.b16 %v594
    %v759 = vunpack.c.l.b16 %v595
    %v760 = vunpack.c.h.b16 %v595
    %v761 = vunpack.c.l.b16 %v596
    %v762 = vunpack.c.h.b16 %v596
    %v763 = vunpack.c.l.b16 %v597
    %v764 = vunpack.c.h.b16 %v597
    %v765 = vunpack.c.l.b16 %v598
    %v766 = vunpack.c.h.b16 %v598
    %v767 = vunpack.c.l.b16 %v599
    %v768 = vunpack.c.h.b16 %v599
    %v769 = vunpack.c.l.b16 %v600
    %v770 = vunpack.c.h.b16 %v600
    %v771 = vunpack.c.l.b16 %v601
    %v772 = vunpack.c.h.b16 %v601
    %v773 = vunpack.c.l.b16 %v602
    %v774 = vunpack.c.h.b16 %v602
    %v775 = vunpack.c.l.b16 %v603
    %v776 = vunpack.c.h.b16 %v603
    %v777 = vunpack.c.l.b16 %v604
    %v778 = vunpack.c.h.b16 %v604
    %v779 = vunpack.c.l.b16 %v605
    %v780 = vunpack.c.h.b16 %v605
    %v781 = vunpack.c.l.b16 %v606
    %v782 = vunpack.c.h.b16 %v606
    %v783 = vunpack.c.l.b16 %v607
    %v784 = vunpack.c.h.b16 %v607
    %v785 = vunpack.c.l.b16 %v608
    %v786 = vunpack.c.h.b16 %v608
    %v787 = vunpack.c.l.b16 %v609
    %v788 = vunpack.c.h.b16 %v609
    %v789 = vunpack.c.l.b16 %v610
    %v790 = vunpack.c.h.b16 %v610
    %v791 = vunpack.c.l.b16 %v611
    %v792 = vunpack.c.h.b16 %v611
    %v793 = vunpack.c.l.b16 %v612
    %v794 = vunpack.c.h.b16 %v612
    %v795 = vunpack.c.l.b16 %v613
    %v796 = vunpack.c.h.b16 %v613
    %v797 = vunpack.c.l.b16 %v614
    %v798 = vunpack.c.h.b16 %v614
    %v799 = vunpack.c.l.b16 %v615
    %v800 = vunpack.c.h.b16 %v615
    %v801 = vunpack.c.l.b16 %v616
    %v802 = vunpack.c.h.b16 %v616
    %v803 = vunpack.c.l.b16 %v617
    %v804 = vunpack.c.h.b16 %v617
    %v805 = vunpack.c.l.b16 %v618
    %v806 = vunpack.c.h.b16 %v618
    %v807 = vunpack.c.l.b16 %v619
    %v808 = vunpack.c.h.b16 %v619
    %v809 = vunpack.c.l.b16 %v620
    %v810 = vunpack.c.h.b16 %v620
    %v811 = vunpack.c.l.b16 %v621
    %v812 = vunpack.c.h.b16 %v621
    %v813 = vunpack.c.l.b16 %v622
    %v814 = vunpack.c.h.b16 %v622
    %v815 = vunpack.c.l.b16 %v623
    %v816 = vunpack.c.h.b16 %v623
    %v817 = vunpack.c.l.b16 %v624
    %v818 = vunpack.c.h.b16 %v624
    %v819 = vunpack.c.l.b16 %v625
    %v820 = vunpack.c.h.b16 %v625
    %v821 = vunpack.c.l.b16 %v626
    %v822 = vunpack.c.h.b16 %v626
    %v823 = vunpack.c.l.b16 %v627
    %v824 = vunpack.c.h.b16 %v627
    %v825 = vunpack.c.l.b16 %v628
    %v826 = vunpack.c.h.b16 %v628
    %v827 = vunpack.c.l.b16 %v629
    %v828 = vunpack.c.h.b16 %v629
    %v829 = vunpack.c.l.b16 %v630
    %v830 = vunpack.c.h.b16 %v630
    %v831 = vunpack.c.l.b16 %v631
    %v832 = vunpack.c.h.b16 %v631
    %v833 = vunpack.c.l.b16 %v632
    %v834 = vunpack.c.h.b16 %v632
    %v835 = vunpack.c.l.b16 %v633
    %v836 = vunpack.c.h.b16 %v633
    %v837 = vunpack.c.l.b16 %v634
    %v838 = vunpack.c.h.b16 %v634
    %v839 = vunpack.c.l.b16 %v635
    %v840 = vunpack.c.h.b16 %v635
    %v841 = vunpack.c.l.b16 %v636
    %v842 = vunpack.c.h.b16 %v636
    %v843 = vunpack.c.l.b16 %v637
    %v844 = vunpack.c.h.b16 %v637
    %v845 = vunpack.c.l.b16 %v638
    %v846 = vunpack.c.h.b16 %v638
    %v847 = vunpack.c.l.b16 %v639
    %v848 = vunpack.c.h.b16 %v639
    %v849 = vunpack.c.l.b16 %v640
    %v850 = vunpack.c.h.b16 %v640
    %v851 = vunpack.c.l.b16 %v641
    %v852 = vunpack.c.h.b16 %v641
    %v853 = vunpack.c.l.b16 %v642
    %v854 = vunpack.c.h.b16 %v642
    %v855 = vunpack.c.l.b16 %v643
    %v856 = vunpack.c.h.b16 %v643
    %v857 = vunpack.c.l.b16 %v644
    %v858 = vunpack.c.h.b16 %v644
    %v859 = vunpack.c.l.b16 %v645
    %v860 = vunpack.c.h.b16 %v645
    %v861 = vunpack.c.l.b16 %v646
    %v862 = vunpack.c.h.b16 %v646
    %v863 = vpack.c.b16 %v723, %v719
    %v864 = vpack.c.b16 %v724, %v720
    %v865 = vpack.c.b16 %v725, %v721
    %v866 = vpack.c.b16 %v726, %v722
    %v867 = vpack.c.b16 %v731, %v727
    %v868 = vpack.c.b16 %v732, %v728
    %v869 = vpack.c.b16 %v733, %v729
    %v870 = vpack.c.b16 %v734, %v730
    %v871 = vpack.c.b16 %v739, %v735
    %v872 = vpack.c.b16 %v740, %v736
    %v873 = vpack.c.b16 %v741, %v737
    %v874 = vpack.c.b16 %v742, %v738
    %v875 = vpack.c.b16 %v747, %v743
    %v876 = vpack.c.b16 %v748, %v744
    %v877 = vpack.c.b16 %v749, %v745
    %v878 = vpack.c.b16 %v750, %v746
    %v879 = vpack.c.b16 %v755, %v751
    %v880 = vpack.c.b16 %v756, %v752
    %v881 = vpack.c.b16 %v757, %v753
    %v882 = vpack.c.b16 %v758, %v754
    %v883 = vpack.c.b16 %v763, %v759
    %v884 = vpack.c.b16 %v764, %v760
    %v885 = vpack.c.b16 %v765, %v761
    %v886 = vpack.c.b16 %v766, %v762
    %v887 = vpack.c.b16 %v771, %v767
    %v888 = vpack.c.b16 %v772, %v768
    %v889 = vpack.c.b16 %v773, %v769
    %v890 = vpack.c.b16 %v774, %v770
    %v891 = vpack.c.b16 %v779, %v775
    %v892 = vpack.c.b16 %v780, %v776
    %v893 = vpack.c.b16 %v781, %v777
    %v894 = vpack.c.b16 %v782, %v778
    %v895 = vpack.c.b16 %v787, %v783
    %v896 = vpack.c.b16 %v788, %v784
    %v897 = vpack.c.b16 %v789, %v785
    %v898 = vpack.c.b16 %v790, %v786
    %v899 = vpack.c.b16 %v795, %v791
    %v900 = vpack.c.b16 %v796, %v792
    %v901 = vpack.c.b16 %v797, %v793
    %v902 = vpack.c.b16 %v798, %v794
    %v903 = vpack.c.b16 %v803, %v799
    %v904 = vpack.c.b16 %v804, %v800
    %v905 = vpack.c.b16 %v805, %v801
    %v906 = vpack.c.b16 %v806, %v802
    %v907 = vpack.c.b16 %v811, %v807
    %v908 = vpack.c.b16 %v812, %v808
    %v909 = vpack.c.b16 %v813, %v809
    %v910 = vpack.c.b16 %v814, %v810
    %v911 = vpack.c.b16 %v819, %v815
    %v912 = vpack.c.b16 %v820, %v816
    %v913 = vpack.c.b16 %v821, %v817
    %v914 = vpack.c.b16 %v822, %v818
    %v915 = vpack.c.b16 %v827, %v823
    %v916 = vpack.c.b16 %v828, %v824
    %v917 = vpack.c.b16 %v829, %v825
    %v918 = vpack.c.b16 %v830, %v826
    %v919 = vpack.c.b16 %v835, %v831
    %v920 = vpack.c.b16 %v836, %v832
    %v921 = vpack.c.b16 %v837, %v833
    %v922 = vpack.c.b16 %v838, %v834
    %v923 = vpack.c.b16 %v843, %v839
    %v924 = vpack.c.b16 %v844, %v840
    %v925 = vpack.c.b16 %v845, %v841
    %v926 = vpack.c.b16 %v846, %v842
    %v927 = vpack.c.b16 %v851, %v847
    %v928 = vpack.c.b16 %v852, %v848
    %v929 = vpack.c.b16 %v853, %v849
    %v930 = vpack.c.b16 %v854, %v850
    %v931 = vpack.c.b16 %v859, %v855
    %v932 = vpack.c.b16 %v860, %v856
    %v933 = vpack.c.b16 %v861, %v857
    %v934 = vpack.c.b16 %v862, %v858
    %vm1003 = vcmask 244736
    %v1005 = vsel %vm1003, %v571, 0
    %v1008 = vsel %vm1003, %v574, 0
    %vm1010 = vcmask 1046528
    %v1012 = vsel %vm1010, %v931, 0
    %v1015 = vsel %vm1010, %v932, 0
    %v1018 = vsel %vm1010, %v933, 0
    %v1021 = vsel %vm1010, %v934, 0
    %1023 = vmatprep.subr.bf16.mxu0 %v892
    %1024 = vmatpush1.bf16.msra.mxu0 %v891
    %1025 = vmatprep.subr.bf16.mxu0 %v888
    %1026 = vmatpush1.bf16.msra.mxu0 %v887
    %1027 = vmatprep.subr.bf16.mxu0 %v884
    %1028 = vmatpush1.bf16.msra.mxu0 %v883
    %1029 = vmatprep.subr.bf16.mxu0 %v880
    %1030 = vmatpush1.bf16.msra.mxu0 %v879
    %1031 = vmatprep.subr.bf16.mxu0 %v876
    %1032 = vmatpush1.bf16.msra.mxu0 %v875
    %1033 = vmatprep.subr.bf16.mxu0 %v872
    %1034 = vmatpush1.bf16.msra.mxu0 %v871
    %1035 = vmatprep.subr.bf16.mxu0 %v868
    %1036 = vmatpush1.bf16.msra.mxu0 %v867
    %1037 = vmatprep.subr.bf16.mxu0 %v864
    %1038 = vmatpush1.bf16.msra.mxu0 %v863
    %1039 = vmatprep.subr.bf16.mxu0 %v924
    %1040 = vmatpush2.bf16.msra.mxu0 %v923
    %1041 = vmatprep.subr.bf16.mxu0 %v920
    %1042 = vmatpush2.bf16.msra.mxu0 %v919
    %1043 = vmatprep.subr.bf16.mxu0 %v916
    %1044 = vmatpush2.bf16.msra.mxu0 %v915
    %1045 = vmatprep.subr.bf16.mxu0 %v912
    %1046 = vmatpush2.bf16.msra.mxu0 %v911
    %1047 = vmatprep.subr.bf16.mxu0 %v908
    %1048 = vmatpush2.bf16.msra.mxu0 %v907
    %1049 = vmatprep.subr.bf16.mxu0 %v904
    %1050 = vmatpush2.bf16.msra.mxu0 %v903
    %1051 = vmatprep.subr.bf16.mxu0 %v900
    %1052 = vmatpush2.bf16.msra.mxu0 %v899
    %1053 = vmatprep.subr.bf16.mxu0 %v896
    %1054 = vmatpush2.bf16.msra.mxu0 %v895
    %1055 = vmatprep.mubr.bf16.mxu0 %v570
    %1056 = vmatmul.mubr.bf16.gmra.mxu0 %v569
    %v1057 = vpop.f32.mrf.mxu0
    %v1058 = vadd.f32 0.0, %v1057
    %v1059 = vpop.f32.mrf.mxu0
    %v1060 = vadd.f32 0.0, %v1059
    %v1061 = vpop.f32.mrf.mxu0
    %v1062 = vadd.f32 0.0, %v1061
    %v1063 = vpop.f32.mrf.mxu0
    %v1064 = vadd.f32 0.0, %v1063
    %1065 = vmatprep.mubr.bf16.mxu0 %v573
    %1066 = vmatmul.mubr.bf16.gmra.mxu0 %v572
    %v1067 = vpop.f32.mrf.mxu0
    %v1068 = vadd.f32 0.0, %v1067
    %v1069 = vpop.f32.mrf.mxu0
    %v1070 = vadd.f32 0.0, %v1069
    %v1071 = vpop.f32.mrf.mxu0
    %v1072 = vpop.f32.mrf.mxu0
    %1073 = vdwg.mxu0
    %1074 = vmatprep.subr.bf16.mxu0 0
    %1075 = vmatpush1.bf16.msra.mxu0 0
    %1076 = vmatprep.subr.bf16.mxu0 0
    %1077 = vmatpush1.bf16.msra.mxu0 0
    %1078 = vmatprep.subr.bf16.mxu0 0
    %1079 = vmatpush1.bf16.msra.mxu0 0
    %1080 = vmatprep.subr.bf16.mxu0 0
    %1081 = vmatpush1.bf16.msra.mxu0 0
    %1082 = vmatprep.subr.bf16.mxu0 0
    %1083 = vmatpush1.bf16.msra.mxu0 0
    %1084 = vmatprep.subr.bf16.mxu0 0
    %1085 = vmatpush1.bf16.msra.mxu0 0
    %1086 = vmatprep.subr.bf16.mxu0 %v1015
    %1087 = vmatpush1.bf16.msra.mxu0 %v1012
    %1088 = vmatprep.subr.bf16.mxu0 %v928
    %1089 = vmatpush1.bf16.msra.mxu0 %v927
    %1090 = vmatprep.subr.bf16.mxu0 0
    %1091 = vmatpush2.bf16.msra.mxu0 0
    %1092 = vmatprep.subr.bf16.mxu0 0
    %1093 = vmatpush2.bf16.msra.mxu0 0
    %1094 = vmatprep.subr.bf16.mxu0 0
    %1095 = vmatpush2.bf16.msra.mxu0 0
    %1096 = vmatprep.subr.bf16.mxu0 0
    %1097 = vmatpush2.bf16.msra.mxu0 0
    %1098 = vmatprep.subr.bf16.mxu0 0
    %1099 = vmatpush2.bf16.msra.mxu0 0
    %1100 = vmatprep.subr.bf16.mxu0 0
    %1101 = vmatpush2.bf16.msra.mxu0 0
    %1102 = vmatprep.subr.bf16.mxu0 0
    %1103 = vmatpush2.bf16.msra.mxu0 0
    %1104 = vmatprep.subr.bf16.mxu0 0
    %1105 = vmatpush2.bf16.msra.mxu0 0
    %1106 = vmatprep.mubr.bf16.mxu0 0
    %1107 = vmatmul.mubr.bf16.gmra.mxu0 %v1005
    %v1108 = vpop.f32.mrf.mxu0
    %v1109 = vadd.f32 %v1058, %v1108
    %v1110 = vpop.f32.mrf.mxu0
    %v1111 = vadd.f32 %v1060, %v1110
    %v1112 = vpop.f32.mrf.mxu0
    %v1113 = vadd.f32 %v1062, %v1112
    %v1114 = vpop.f32.mrf.mxu0
    %v1115 = vadd.f32 %v1064, %v1114
    %1116 = vmatprep.mubr.bf16.mxu0 0
    %1117 = vmatmul.mubr.bf16.gmra.mxu0 %v1008
    %v1118 = vpop.f32.mrf.mxu0
    %v1119 = vadd.f32 %v1068, %v1118
    %v1120 = vpop.f32.mrf.mxu0
    %v1121 = vadd.f32 %v1070, %v1120
    %v1122 = vpop.f32.mrf.mxu0
    %v1123 = vpop.f32.mrf.mxu0
    %1124 = vdwg.mxu0
    %1125 = vmatprep.subr.bf16.mxu0 %v894
    %1126 = vmatpush1.bf16.msra.mxu0 %v893
    %1127 = vmatprep.subr.bf16.mxu0 %v890
    %1128 = vmatpush1.bf16.msra.mxu0 %v889
    %1129 = vmatprep.subr.bf16.mxu0 %v886
    %1130 = vmatpush1.bf16.msra.mxu0 %v885
    %1131 = vmatprep.subr.bf16.mxu0 %v882
    %1132 = vmatpush1.bf16.msra.mxu0 %v881
    %1133 = vmatprep.subr.bf16.mxu0 %v878
    %1134 = vmatpush1.bf16.msra.mxu0 %v877
    %1135 = vmatprep.subr.bf16.mxu0 %v874
    %1136 = vmatpush1.bf16.msra.mxu0 %v873
    %1137 = vmatprep.subr.bf16.mxu0 %v870
    %1138 = vmatpush1.bf16.msra.mxu0 %v869
    %1139 = vmatprep.subr.bf16.mxu0 %v866
    %1140 = vmatpush1.bf16.msra.mxu0 %v865
    %1141 = vmatprep.subr.bf16.mxu0 %v926
    %1142 = vmatpush2.bf16.msra.mxu0 %v925
    %1143 = vmatprep.subr.bf16.mxu0 %v922
    %1144 = vmatpush2.bf16.msra.mxu0 %v921
    %1145 = vmatprep.subr.bf16.mxu0 %v918
    %1146 = vmatpush2.bf16.msra.mxu0 %v917
    %1147 = vmatprep.subr.bf16.mxu0 %v914
    %1148 = vmatpush2.bf16.msra.mxu0 %v913
    %1149 = vmatprep.subr.bf16.mxu0 %v910
    %1150 = vmatpush2.bf16.msra.mxu0 %v909
    %1151 = vmatprep.subr.bf16.mxu0 %v906
    %1152 = vmatpush2.bf16.msra.mxu0 %v905
    %1153 = vmatprep.subr.bf16.mxu0 %v902
    %1154 = vmatpush2.bf16.msra.mxu0 %v901
    %1155 = vmatprep.subr.bf16.mxu0 %v898
    %1156 = vmatpush2.bf16.msra.mxu0 %v897
    %1157 = vmatprep.mubr.bf16.mxu0 %v570
    %1158 = vmatmul.mubr.bf16.gmra.mxu0 %v569
    %v1159 = vpop.f32.mrf.mxu0
    %v1160 = vadd.f32 0.0, %v1159
    %v1161 = vpop.f32.mrf.mxu0
    %v1162 = vadd.f32 0.0, %v1161
    %v1163 = vpop.f32.mrf.mxu0
    %v1164 = vadd.f32 0.0, %v1163
    %v1165 = vpop.f32.mrf.mxu0
    %v1166 = vadd.f32 0.0, %v1165
    %1167 = vmatprep.mubr.bf16.mxu0 %v573
    %1168 = vmatmul.mubr.bf16.gmra.mxu0 %v572
    %v1169 = vpop.f32.mrf.mxu0
    %v1170 = vadd.f32 0.0, %v1169
    %v1171 = vpop.f32.mrf.mxu0
    %v1172 = vadd.f32 0.0, %v1171
    %v1173 = vpop.f32.mrf.mxu0
    %v1174 = vpop.f32.mrf.mxu0
    %1175 = vdwg.mxu0
    %1176 = vmatprep.subr.bf16.mxu0 0
    %1177 = vmatpush1.bf16.msra.mxu0 0
    %1178 = vmatprep.subr.bf16.mxu0 0
    %1179 = vmatpush1.bf16.msra.mxu0 0
    %1180 = vmatprep.subr.bf16.mxu0 0
    %1181 = vmatpush1.bf16.msra.mxu0 0
    %1182 = vmatprep.subr.bf16.mxu0 0
    %1183 = vmatpush1.bf16.msra.mxu0 0
    %1184 = vmatprep.subr.bf16.mxu0 0
    %1185 = vmatpush1.bf16.msra.mxu0 0
    %1186 = vmatprep.subr.bf16.mxu0 0
    %1187 = vmatpush1.bf16.msra.mxu0 0
    %1188 = vmatprep.subr.bf16.mxu0 %v1021
    %1189 = vmatpush1.bf16.msra.mxu0 %v1018
    %1190 = vmatprep.subr.bf16.mxu0 %v930
    %1191 = vmatpush1.bf16.msra.mxu0 %v929
    %1192 = vmatprep.subr.bf16.mxu0 0
    %1193 = vmatpush2.bf16.msra.mxu0 0
    %1194 = vmatprep.subr.bf16.mxu0 0
    %1195 = vmatpush2.bf16.msra.mxu0 0
    %1196 = vmatprep.subr.bf16.mxu0 0
    %1197 = vmatpush2.bf16.msra.mxu0 0
    %1198 = vmatprep.subr.bf16.mxu0 0
    %1199 = vmatpush2.bf16.msra.mxu0 0
    %1200 = vmatprep.subr.bf16.mxu0 0
    %1201 = vmatpush2.bf16.msra.mxu0 0
    %1202 = vmatprep.subr.bf16.mxu0 0
    %1203 = vmatpush2.bf16.msra.mxu0 0
    %1204 = vmatprep.subr.bf16.mxu0 0
    %1205 = vmatpush2.bf16.msra.mxu0 0
    %1206 = vmatprep.subr.bf16.mxu0 0
    %1207 = vmatpush2.bf16.msra.mxu0 0
    %1208 = vmatprep.mubr.bf16.mxu0 0
    %1209 = vmatmul.mubr.bf16.gmra.mxu0 %v1005
    %v1210 = vpop.f32.mrf.mxu0
    %v1211 = vadd.f32 %v1160, %v1210
    %v1212 = vpop.f32.mrf.mxu0
    %v1213 = vadd.f32 %v1162, %v1212
    %v1214 = vpop.f32.mrf.mxu0
    %v1215 = vadd.f32 %v1164, %v1214
    %v1216 = vpop.f32.mrf.mxu0
    %v1217 = vadd.f32 %v1166, %v1216
    %1218 = vmatprep.mubr.bf16.mxu0 0
    %1219 = vmatmul.mubr.bf16.gmra.mxu0 %v1008
    %v1220 = vpop.f32.mrf.mxu0
    %v1221 = vadd.f32 %v1170, %v1220
    %v1222 = vpop.f32.mrf.mxu0
    %v1223 = vadd.f32 %v1172, %v1222
    %v1224 = vpop.f32.mrf.mxu0
    %v1225 = vpop.f32.mrf.mxu0
    %1226 = vdwg.mxu0
    %v1227 = vld [vmem:[%s4] sm:$0xff]
    %v1228 = vld [vmem:[%s4 + $0x8] sm:$0xff]
    %v1229 = vld [vmem:[%s4 + $0x10] sm:$0xf]
    %v1230 = vld [vmem:[%s4 + $0x14] sm:$0xff]
    %v1231 = vld [vmem:[%s4 + $0x1c] sm:$0xff]
    %v1232 = vld [vmem:[%s4 + $0x24] sm:$0xf]
    %v1233 = vld [vmem:[%s4 + $0x28] sm:$0xff]
    %v1234 = vld [vmem:[%s4 + $0x30] sm:$0xff]
    %v1235 = vld [vmem:[%s4 + $0x38] sm:$0xf]
    %1245 = vrot.lane.b32.xlu0 %v1109, 127
    %v1246 = vpop.permute.xlu0 %1245
    %1247 = vrot.lane.b32.xlu0 %v1111, 127
    %v1248 = vpop.permute.xlu0 %1247
    %1249 = vrot.lane.b32.xlu0 %v1211, 127
    %v1250 = vpop.permute.xlu0 %1249
    %1251 = vrot.lane.b32.xlu0 %v1113, 127
    %v1252 = vpop.permute.xlu0 %1251
    %1253 = vrot.lane.b32.xlu0 %v1115, 127
    %v1254 = vpop.permute.xlu0 %1253
    %1255 = vrot.lane.b32.xlu0 %v1215, 127
    %v1256 = vpop.permute.xlu0 %1255
    %1257 = vrot.lane.b32.xlu0 %v1119, 127
    %v1258 = vpop.permute.xlu0 %1257
    %1259 = vrot.lane.b32.xlu0 %v1121, 127
    %v1260 = vpop.permute.xlu0 %1259
    %1261 = vrot.lane.b32.xlu0 %v1221, 127
    %v1262 = vpop.permute.xlu0 %1261
    %v1263 = vsel %vm79, %v1246, %v1248
    %v1264 = vsel %vm79, %v1248, %v1250
    %v1265 = vsel %vm79, %v1252, %v1254
    %v1266 = vsel %vm79, %v1254, %v1256
    %v1267 = vsel %vm79, %v1258, %v1260
    %v1268 = vsel %vm79, %v1260, %v1262
    %1278 = vrot.lane.b32.xlu0 %v1109, 126
    %v1279 = vpop.permute.xlu0 %1278
    %1280 = vrot.lane.b32.xlu0 %v1111, 126
    %v1281 = vpop.permute.xlu0 %1280
    %1282 = vrot.lane.b32.xlu0 %v1211, 126
    %v1283 = vpop.permute.xlu0 %1282
    %1284 = vrot.lane.b32.xlu0 %v1113, 126
    %v1285 = vpop.permute.xlu0 %1284
    %1286 = vrot.lane.b32.xlu0 %v1115, 126
    %v1287 = vpop.permute.xlu0 %1286
    %1288 = vrot.lane.b32.xlu0 %v1215, 126
    %v1289 = vpop.permute.xlu0 %1288
    %1290 = vrot.lane.b32.xlu0 %v1119, 126
    %v1291 = vpop.permute.xlu0 %1290
    %1292 = vrot.lane.b32.xlu0 %v1121, 126
    %v1293 = vpop.permute.xlu0 %1292
    %1294 = vrot.lane.b32.xlu0 %v1221, 126
    %v1295 = vpop.permute.xlu0 %1294
    %v1296 = vsel %vm113, %v1279, %v1281
    %v1297 = vsel %vm113, %v1281, %v1283
    %v1298 = vsel %vm113, %v1285, %v1287
    %v1299 = vsel %vm113, %v1287, %v1289
    %v1300 = vsel %vm113, %v1291, %v1293
    %v1301 = vsel %vm113, %v1293, %v1295
    %1311 = vrot.lane.b32.xlu0 %v1109, 125
    %v1312 = vpop.permute.xlu0 %1311
    %1313 = vrot.lane.b32.xlu0 %v1111, 125
    %v1314 = vpop.permute.xlu0 %1313
    %1315 = vrot.lane.b32.xlu0 %v1211, 125
    %v1316 = vpop.permute.xlu0 %1315
    %1317 = vrot.lane.b32.xlu0 %v1113, 125
    %v1318 = vpop.permute.xlu0 %1317
    %1319 = vrot.lane.b32.xlu0 %v1115, 125
    %v1320 = vpop.permute.xlu0 %1319
    %1321 = vrot.lane.b32.xlu0 %v1215, 125
    %v1322 = vpop.permute.xlu0 %1321
    %1323 = vrot.lane.b32.xlu0 %v1119, 125
    %v1324 = vpop.permute.xlu0 %1323
    %1325 = vrot.lane.b32.xlu0 %v1121, 125
    %v1326 = vpop.permute.xlu0 %1325
    %1327 = vrot.lane.b32.xlu0 %v1221, 125
    %v1328 = vpop.permute.xlu0 %1327
    %vm1329 = vcmask 1022976
    %v1330 = vsel %vm1329, %v1312, %v1314
    %v1331 = vsel %vm1329, %v1314, %v1316
    %v1332 = vsel %vm1329, %v1318, %v1320
    %v1333 = vsel %vm1329, %v1320, %v1322
    %v1334 = vsel %vm1329, %v1324, %v1326
    %v1335 = vsel %vm1329, %v1326, %v1328
    %1345 = vrot.lane.b32.xlu0 %v1109, 124
    %v1346 = vpop.permute.xlu0 %1345
    %1347 = vrot.lane.b32.xlu0 %v1111, 124
    %v1348 = vpop.permute.xlu0 %1347
    %1349 = vrot.lane.b32.xlu0 %v1211, 124
    %v1350 = vpop.permute.xlu0 %1349
    %1351 = vrot.lane.b32.xlu0 %v1113, 124
    %v1352 = vpop.permute.xlu0 %1351
    %1353 = vrot.lane.b32.xlu0 %v1115, 124
    %v1354 = vpop.permute.xlu0 %1353
    %1355 = vrot.lane.b32.xlu0 %v1215, 124
    %v1356 = vpop.permute.xlu0 %1355
    %1357 = vrot.lane.b32.xlu0 %v1119, 124
    %v1358 = vpop.permute.xlu0 %1357
    %1359 = vrot.lane.b32.xlu0 %v1121, 124
    %v1360 = vpop.permute.xlu0 %1359
    %1361 = vrot.lane.b32.xlu0 %v1221, 124
    %v1362 = vpop.permute.xlu0 %1361
    %vm1363 = vcmask 1014784
    %v1364 = vsel %vm1363, %v1346, %v1348
    %v1365 = vsel %vm1363, %v1348, %v1350
    %v1366 = vsel %vm1363, %v1352, %v1354
    %v1367 = vsel %vm1363, %v1354, %v1356
    %v1368 = vsel %vm1363, %v1358, %v1360
    %v1369 = vsel %vm1363, %v1360, %v1362
    %1379 = vrot.lane.b32.xlu0 %v1109, 108
    %v1380 = vpop.permute.xlu0 %1379
    %1381 = vrot.lane.b32.xlu0 %v1111, 108
    %v1382 = vpop.permute.xlu0 %1381
    %1383 = vrot.lane.b32.xlu0 %v1211, 108
    %v1384 = vpop.permute.xlu0 %1383
    %1385 = vrot.lane.b32.xlu0 %v1113, 108
    %v1386 = vpop.permute.xlu0 %1385
    %1387 = vrot.lane.b32.xlu0 %v1115, 108
    %v1388 = vpop.permute.xlu0 %1387
    %1389 = vrot.lane.b32.xlu0 %v1215, 108
    %v1390 = vpop.permute.xlu0 %1389
    %1391 = vrot.lane.b32.xlu0 %v1119, 108
    %v1392 = vpop.permute.xlu0 %1391
    %1393 = vrot.lane.b32.xlu0 %v1121, 108
    %v1394 = vpop.permute.xlu0 %1393
    %1395 = vrot.lane.b32.xlu0 %v1221, 108
    %v1396 = vpop.permute.xlu0 %1395
    %v1397 = vsel %vm215, %v1380, %v1382
    %v1398 = vsel %vm215, %v1382, %v1384
    %v1399 = vsel %vm215, %v1386, %v1388
    %v1400 = vsel %vm215, %v1388, %v1390
    %v1401 = vsel %vm215, %v1392, %v1394
    %v1402 = vsel %vm215, %v1394, %v1396
    %1412 = vrot.lane.b32.xlu0 %v1109, 107
    %v1413 = vpop.permute.xlu0 %1412
    %1414 = vrot.lane.b32.xlu0 %v1111, 107
    %v1415 = vpop.permute.xlu0 %1414
    %1416 = vrot.lane.b32.xlu0 %v1211, 107
    %v1417 = vpop.permute.xlu0 %1416
    %1418 = vrot.lane.b32.xlu0 %v1113, 107
    %v1419 = vpop.permute.xlu0 %1418
    %1420 = vrot.lane.b32.xlu0 %v1115, 107
    %v1421 = vpop.permute.xlu0 %1420
    %1422 = vrot.lane.b32.xlu0 %v1215, 107
    %v1423 = vpop.permute.xlu0 %1422
    %1424 = vrot.lane.b32.xlu0 %v1119, 107
    %v1425 = vpop.permute.xlu0 %1424
    %1426 = vrot.lane.b32.xlu0 %v1121, 107
    %v1427 = vpop.permute.xlu0 %1426
    %1428 = vrot.lane.b32.xlu0 %v1221, 107
    %v1429 = vpop.permute.xlu0 %1428
    %vm1430 = vcmask 875520
    %v1431 = vsel %vm1430, %v1413, %v1415
    %v1432 = vsel %vm1430, %v1415, %v1417
    %v1433 = vsel %vm1430, %v1419, %v1421
    %v1434 = vsel %vm1430, %v1421, %v1423
    %v1435 = vsel %vm1430, %v1425, %v1427
    %v1436 = vsel %vm1430, %v1427, %v1429
    %1446 = vrot.lane.b32.xlu0 %v1109, 106
    %v1447 = vpop.permute.xlu0 %1446
    %1448 = vrot.lane.b32.xlu0 %v1111, 106
    %v1449 = vpop.permute.xlu0 %1448
    %1450 = vrot.lane.b32.xlu0 %v1211, 106
    %v1451 = vpop.permute.xlu0 %1450
    %1452 = vrot.lane.b32.xlu0 %v1113, 106
    %v1453 = vpop.permute.xlu0 %1452
    %1454 = vrot.lane.b32.xlu0 %v1115, 106
    %v1455 = vpop.permute.xlu0 %1454
    %1456 = vrot.lane.b32.xlu0 %v1215, 106
    %v1457 = vpop.permute.xlu0 %1456
    %1458 = vrot.lane.b32.xlu0 %v1119, 106
    %v1459 = vpop.permute.xlu0 %1458
    %1460 = vrot.lane.b32.xlu0 %v1121, 106
    %v1461 = vpop.permute.xlu0 %1460
    %1462 = vrot.lane.b32.xlu0 %v1221, 106
    %v1463 = vpop.permute.xlu0 %1462
    %vm1464 = vcmask 867328
    %v1465 = vsel %vm1464, %v1447, %v1449
    %v1466 = vsel %vm1464, %v1449, %v1451
    %v1467 = vsel %vm1464, %v1453, %v1455
    %v1468 = vsel %vm1464, %v1455, %v1457
    %v1469 = vsel %vm1464, %v1459, %v1461
    %v1470 = vsel %vm1464, %v1461, %v1463
    %1480 = vrot.lane.b32.xlu0 %v1109, 105
    %v1481 = vpop.permute.xlu0 %1480
    %1482 = vrot.lane.b32.xlu0 %v1111, 105
    %v1483 = vpop.permute.xlu0 %1482
    %1484 = vrot.lane.b32.xlu0 %v1211, 105
    %v1485 = vpop.permute.xlu0 %1484
    %1486 = vrot.lane.b32.xlu0 %v1113, 105
    %v1487 = vpop.permute.xlu0 %1486
    %1488 = vrot.lane.b32.xlu0 %v1115, 105
    %v1489 = vpop.permute.xlu0 %1488
    %1490 = vrot.lane.b32.xlu0 %v1215, 105
    %v1491 = vpop.permute.xlu0 %1490
    %1492 = vrot.lane.b32.xlu0 %v1119, 105
    %v1493 = vpop.permute.xlu0 %1492
    %1494 = vrot.lane.b32.xlu0 %v1121, 105
    %v1495 = vpop.permute.xlu0 %1494
    %1496 = vrot.lane.b32.xlu0 %v1221, 105
    %v1497 = vpop.permute.xlu0 %1496
    %vm1498 = vcmask 859136
    %v1499 = vsel %vm1498, %v1481, %v1483
    %v1500 = vsel %vm1498, %v1483, %v1485
    %v1501 = vsel %vm1498, %v1487, %v1489
    %v1502 = vsel %vm1498, %v1489, %v1491
    %v1503 = vsel %vm1498, %v1493, %v1495
    %v1504 = vsel %vm1498, %v1495, %v1497
    %1514 = vrot.lane.b32.xlu0 %v1109, 104
    %v1515 = vpop.permute.xlu0 %1514
    %1516 = vrot.lane.b32.xlu0 %v1111, 104
    %v1517 = vpop.permute.xlu0 %1516
    %1518 = vrot.lane.b32.xlu0 %v1211, 104
    %v1519 = vpop.permute.xlu0 %1518
    %1520 = vrot.lane.b32.xlu0 %v1113, 104
    %v1521 = vpop.permute.xlu0 %1520
    %1522 = vrot.lane.b32.xlu0 %v1115, 104
    %v1523 = vpop.permute.xlu0 %1522
    %1524 = vrot.lane.b32.xlu0 %v1215, 104
    %v1525 = vpop.permute.xlu0 %1524
    %1526 = vrot.lane.b32.xlu0 %v1119, 104
    %v1527 = vpop.permute.xlu0 %1526
    %1528 = vrot.lane.b32.xlu0 %v1121, 104
    %v1529 = vpop.permute.xlu0 %1528
    %1530 = vrot.lane.b32.xlu0 %v1221, 104
    %v1531 = vpop.permute.xlu0 %1530
    %vm1532 = vcmask 850944
    %v1533 = vsel %vm1532, %v1515, %v1517
    %v1534 = vsel %vm1532, %v1517, %v1519
    %v1535 = vsel %vm1532, %v1521, %v1523
    %v1536 = vsel %vm1532, %v1523, %v1525
    %v1537 = vsel %vm1532, %v1527, %v1529
    %v1538 = vsel %vm1532, %v1529, %v1531
    %1548 = vrot.lane.b32.xlu0 %v1109, 88
    %v1549 = vpop.permute.xlu0 %1548
    %1550 = vrot.lane.b32.xlu0 %v1111, 88
    %v1551 = vpop.permute.xlu0 %1550
    %1552 = vrot.lane.b32.xlu0 %v1211, 88
    %v1553 = vpop.permute.xlu0 %1552
    %1554 = vrot.lane.b32.xlu0 %v1113, 88
    %v1555 = vpop.permute.xlu0 %1554
    %1556 = vrot.lane.b32.xlu0 %v1115, 88
    %v1557 = vpop.permute.xlu0 %1556
    %1558 = vrot.lane.b32.xlu0 %v1215, 88
    %v1559 = vpop.permute.xlu0 %1558
    %1560 = vrot.lane.b32.xlu0 %v1119, 88
    %v1561 = vpop.permute.xlu0 %1560
    %1562 = vrot.lane.b32.xlu0 %v1121, 88
    %v1563 = vpop.permute.xlu0 %1562
    %1564 = vrot.lane.b32.xlu0 %v1221, 88
    %v1565 = vpop.permute.xlu0 %1564
    %v1566 = vsel %vm408, %v1549, %v1551
    %v1567 = vsel %vm408, %v1551, %v1553
    %v1568 = vsel %vm408, %v1555, %v1557
    %v1569 = vsel %vm408, %v1557, %v1559
    %v1570 = vsel %vm408, %v1561, %v1563
    %v1571 = vsel %vm408, %v1563, %v1565
    %1581 = vrot.lane.b32.xlu0 %v1109, 87
    %v1582 = vpop.permute.xlu0 %1581
    %1583 = vrot.lane.b32.xlu0 %v1111, 87
    %v1584 = vpop.permute.xlu0 %1583
    %1585 = vrot.lane.b32.xlu0 %v1211, 87
    %v1586 = vpop.permute.xlu0 %1585
    %1587 = vrot.lane.b32.xlu0 %v1113, 87
    %v1588 = vpop.permute.xlu0 %1587
    %1589 = vrot.lane.b32.xlu0 %v1115, 87
    %v1590 = vpop.permute.xlu0 %1589
    %1591 = vrot.lane.b32.xlu0 %v1215, 87
    %v1592 = vpop.permute.xlu0 %1591
    %1593 = vrot.lane.b32.xlu0 %v1119, 87
    %v1594 = vpop.permute.xlu0 %1593
    %1595 = vrot.lane.b32.xlu0 %v1121, 87
    %v1596 = vpop.permute.xlu0 %1595
    %1597 = vrot.lane.b32.xlu0 %v1221, 87
    %v1598 = vpop.permute.xlu0 %1597
    %vm1599 = vcmask 711680
    %v1600 = vsel %vm1599, %v1582, %v1584
    %v1601 = vsel %vm1599, %v1584, %v1586
    %v1602 = vsel %vm1599, %v1588, %v1590
    %v1603 = vsel %vm1599, %v1590, %v1592
    %v1604 = vsel %vm1599, %v1594, %v1596
    %v1605 = vsel %vm1599, %v1596, %v1598
    %1615 = vrot.lane.b32.xlu0 %v1109, 86
    %v1616 = vpop.permute.xlu0 %1615
    %1617 = vrot.lane.b32.xlu0 %v1111, 86
    %v1618 = vpop.permute.xlu0 %1617
    %1619 = vrot.lane.b32.xlu0 %v1211, 86
    %v1620 = vpop.permute.xlu0 %1619
    %1621 = vrot.lane.b32.xlu0 %v1113, 86
    %v1622 = vpop.permute.xlu0 %1621
    %1623 = vrot.lane.b32.xlu0 %v1115, 86
    %v1624 = vpop.permute.xlu0 %1623
    %1625 = vrot.lane.b32.xlu0 %v1215, 86
    %v1626 = vpop.permute.xlu0 %1625
    %1627 = vrot.lane.b32.xlu0 %v1119, 86
    %v1628 = vpop.permute.xlu0 %1627
    %1629 = vrot.lane.b32.xlu0 %v1121, 86
    %v1630 = vpop.permute.xlu0 %1629
    %1631 = vrot.lane.b32.xlu0 %v1221, 86
    %v1632 = vpop.permute.xlu0 %1631
    %vm1633 = vcmask 703488
    %v1634 = vsel %vm1633, %v1616, %v1618
    %v1635 = vsel %vm1633, %v1618, %v1620
    %v1636 = vsel %vm1633, %v1622, %v1624
    %v1637 = vsel %vm1633, %v1624, %v1626
    %v1638 = vsel %vm1633, %v1628, %v1630
    %v1639 = vsel %vm1633, %v1630, %v1632
    %1649 = vrot.lane.b32.xlu0 %v1109, 85
    %v1650 = vpop.permute.xlu0 %1649
    %1651 = vrot.lane.b32.xlu0 %v1111, 85
    %v1652 = vpop.permute.xlu0 %1651
    %1653 = vrot.lane.b32.xlu0 %v1211, 85
    %v1654 = vpop.permute.xlu0 %1653
    %1655 = vrot.lane.b32.xlu0 %v1113, 85
    %v1656 = vpop.permute.xlu0 %1655
    %1657 = vrot.lane.b32.xlu0 %v1115, 85
    %v1658 = vpop.permute.xlu0 %1657
    %1659 = vrot.lane.b32.xlu0 %v1215, 85
    %v1660 = vpop.permute.xlu0 %1659
    %1661 = vrot.lane.b32.xlu0 %v1119, 85
    %v1662 = vpop.permute.xlu0 %1661
    %1663 = vrot.lane.b32.xlu0 %v1121, 85
    %v1664 = vpop.permute.xlu0 %1663
    %1665 = vrot.lane.b32.xlu0 %v1221, 85
    %v1666 = vpop.permute.xlu0 %1665
    %vm1667 = vcmask 695296
    %v1668 = vsel %vm1667, %v1650, %v1652
    %v1669 = vsel %vm1667, %v1652, %v1654
    %v1670 = vsel %vm1667, %v1656, %v1658
    %v1671 = vsel %vm1667, %v1658, %v1660
    %v1672 = vsel %vm1667, %v1662, %v1664
    %v1673 = vsel %vm1667, %v1664, %v1666
    %1683 = vrot.lane.b32.xlu0 %v1109, 84
    %v1684 = vpop.permute.xlu0 %1683
    %1685 = vrot.lane.b32.xlu0 %v1111, 84
    %v1686 = vpop.permute.xlu0 %1685
    %1687 = vrot.lane.b32.xlu0 %v1211, 84
    %v1688 = vpop.permute.xlu0 %1687
    %1689 = vrot.lane.b32.xlu0 %v1113, 84
    %v1690 = vpop.permute.xlu0 %1689
    %1691 = vrot.lane.b32.xlu0 %v1115, 84
    %v1692 = vpop.permute.xlu0 %1691
    %1693 = vrot.lane.b32.xlu0 %v1215, 84
    %v1694 = vpop.permute.xlu0 %1693
    %1695 = vrot.lane.b32.xlu0 %v1119, 84
    %v1696 = vpop.permute.xlu0 %1695
    %1697 = vrot.lane.b32.xlu0 %v1121, 84
    %v1698 = vpop.permute.xlu0 %1697
    %1699 = vrot.lane.b32.xlu0 %v1221, 84
    %v1700 = vpop.permute.xlu0 %1699
    %vm1701 = vcmask 687104
    %v1702 = vsel %vm1701, %v1684, %v1686
    %v1703 = vsel %vm1701, %v1686, %v1688
    %v1704 = vsel %vm1701, %v1690, %v1692
    %v1705 = vsel %vm1701, %v1692, %v1694
    %v1706 = vsel %vm1701, %v1696, %v1698
    %v1707 = vsel %vm1701, %v1698, %v1700
    %1717 = vrot.lane.b32.xlu0 %v1109, 68
    %v1718 = vpop.permute.xlu0 %1717
    %1719 = vrot.lane.b32.xlu0 %v1111, 68
    %v1720 = vpop.permute.xlu0 %1719
    %1721 = vrot.lane.b32.xlu0 %v1211, 68
    %v1722 = vpop.permute.xlu0 %1721
    %1723 = vrot.lane.b32.xlu0 %v1113, 68
    %v1724 = vpop.permute.xlu0 %1723
    %1725 = vrot.lane.b32.xlu0 %v1115, 68
    %v1726 = vpop.permute.xlu0 %1725
    %1727 = vrot.lane.b32.xlu0 %v1215, 68
    %v1728 = vpop.permute.xlu0 %1727
    %1729 = vrot.lane.b32.xlu0 %v1119, 68
    %v1730 = vpop.permute.xlu0 %1729
    %1731 = vrot.lane.b32.xlu0 %v1121, 68
    %v1732 = vpop.permute.xlu0 %1731
    %1733 = vrot.lane.b32.xlu0 %v1221, 68
    %v1734 = vpop.permute.xlu0 %1733
    %vm1735 = vcmask 556032
    %v1736 = vsel %vm1735, %v1718, %v1720
    %v1737 = vsel %vm1735, %v1720, %v1722
    %v1738 = vsel %vm1735, %v1724, %v1726
    %v1739 = vsel %vm1735, %v1726, %v1728
    %v1740 = vsel %vm1735, %v1730, %v1732
    %v1741 = vsel %vm1735, %v1732, %v1734
    %1754 = vrot.lane.b32.xlu0 %v1109, 109
    %v1755 = vpop.permute.xlu0 %1754
    %1756 = vrot.lane.b32.xlu0 %v1111, 109
    %v1757 = vpop.permute.xlu0 %1756
    %1758 = vrot.lane.b32.xlu0 %v1211, 109
    %v1759 = vpop.permute.xlu0 %1758
    %1760 = vrot.lane.b32.xlu0 %v1213, 109
    %v1761 = vpop.permute.xlu0 %1760
    %1762 = vrot.lane.b32.xlu0 %v1113, 109
    %v1763 = vpop.permute.xlu0 %1762
    %1764 = vrot.lane.b32.xlu0 %v1115, 109
    %v1765 = vpop.permute.xlu0 %1764
    %1766 = vrot.lane.b32.xlu0 %v1215, 109
    %v1767 = vpop.permute.xlu0 %1766
    %1768 = vrot.lane.b32.xlu0 %v1217, 109
    %v1769 = vpop.permute.xlu0 %1768
    %1770 = vrot.lane.b32.xlu0 %v1119, 109
    %v1771 = vpop.permute.xlu0 %1770
    %1772 = vrot.lane.b32.xlu0 %v1121, 109
    %v1773 = vpop.permute.xlu0 %1772
    %1774 = vrot.lane.b32.xlu0 %v1221, 109
    %v1775 = vpop.permute.xlu0 %1774
    %1776 = vrot.lane.b32.xlu0 %v1223, 109
    %v1777 = vpop.permute.xlu0 %1776
    %v1778 = vsel %vm181, %v1755, %v1757
    %v1779 = vsel %vm181, %v1757, %v1759
    %v1780 = vsel %vm181, %v1759, %v1761
    %v1781 = vsel %vm181, %v1763, %v1765
    %v1782 = vsel %vm181, %v1765, %v1767
    %v1783 = vsel %vm181, %v1767, %v1769
    %v1784 = vsel %vm181, %v1771, %v1773
    %v1785 = vsel %vm181, %v1773, %v1775
    %v1786 = vsel %vm181, %v1775, %v1777
    %1787 = vrot.lane.b32.xlu0 %v1213, 108
    %v1788 = vpop.permute.xlu0 %1787
    %1789 = vrot.lane.b32.xlu0 %v1217, 108
    %v1790 = vpop.permute.xlu0 %1789
    %1791 = vrot.lane.b32.xlu0 %v1223, 108
    %v1792 = vpop.permute.xlu0 %1791
    %v1793 = vsel %vm215, %v1384, %v1788
    %v1794 = vsel %vm215, %v1390, %v1790
    %v1795 = vsel %vm215, %v1396, %v1792
    %1796 = vrot.lane.b32.xlu0 %v1213, 107
    %v1797 = vpop.permute.xlu0 %1796
    %1798 = vrot.lane.b32.xlu0 %v1217, 107
    %v1799 = vpop.permute.xlu0 %1798
    %1800 = vrot.lane.b32.xlu0 %v1223, 107
    %v1801 = vpop.permute.xlu0 %1800
    %v1802 = vsel %vm1430, %v1417, %v1797
    %v1803 = vsel %vm1430, %v1423, %v1799
    %v1804 = vsel %vm1430, %v1429, %v1801
    %1805 = vrot.lane.b32.xlu0 %v1213, 106
    %v1806 = vpop.permute.xlu0 %1805
    %1807 = vrot.lane.b32.xlu0 %v1217, 106
    %v1808 = vpop.permute.xlu0 %1807
    %1809 = vrot.lane.b32.xlu0 %v1223, 106
    %v1810 = vpop.permute.xlu0 %1809
    %v1811 = vsel %vm1464, %v1451, %v1806
    %v1812 = vsel %vm1464, %v1457, %v1808
    %v1813 = vsel %vm1464, %v1463, %v1810
    %1814 = vrot.lane.b32.xlu0 %v1213, 105
    %v1815 = vpop.permute.xlu0 %1814
    %1816 = vrot.lane.b32.xlu0 %v1217, 105
    %v1817 = vpop.permute.xlu0 %1816
    %1818 = vrot.lane.b32.xlu0 %v1223, 105
    %v1819 = vpop.permute.xlu0 %1818
    %v1820 = vsel %vm1498, %v1485, %v1815
    %v1821 = vsel %vm1498, %v1491, %v1817
    %v1822 = vsel %vm1498, %v1497, %v1819
    %1823 = vrot.lane.b32.xlu0 %v1109, 67
    %v1824 = vpop.permute.xlu0 %1823
    %1825 = vrot.lane.b32.xlu0 %v1111, 67
    %v1826 = vpop.permute.xlu0 %1825
    %1827 = vrot.lane.b32.xlu0 %v1211, 67
    %v1828 = vpop.permute.xlu0 %1827
    %1829 = vrot.lane.b32.xlu0 %v1113, 67
    %v1830 = vpop.permute.xlu0 %1829
    %1831 = vrot.lane.b32.xlu0 %v1115, 67
    %v1832 = vpop.permute.xlu0 %1831
    %1833 = vrot.lane.b32.xlu0 %v1215, 67
    %v1834 = vpop.permute.xlu0 %1833
    %1835 = vrot.lane.b32.xlu0 %v1119, 67
    %v1836 = vpop.permute.xlu0 %1835
    %1837 = vrot.lane.b32.xlu0 %v1121, 67
    %v1838 = vpop.permute.xlu0 %1837
    %1839 = vrot.lane.b32.xlu0 %v1221, 67
    %v1840 = vpop.permute.xlu0 %1839
    %1841 = vrot.lane.b32.xlu0 %v1263, 67
    %v1842 = vpop.permute.xlu0 %1841
    %1843 = vrot.lane.b32.xlu0 %v1264, 67
    %v1844 = vpop.permute.xlu0 %1843
    %1845 = vrot.lane.b32.xlu0 %v1250, 67
    %v1846 = vpop.permute.xlu0 %1845
    %1847 = vrot.lane.b32.xlu0 %v1265, 67
    %v1848 = vpop.permute.xlu0 %1847
    %1849 = vrot.lane.b32.xlu0 %v1266, 67
    %v1850 = vpop.permute.xlu0 %1849
    %1851 = vrot.lane.b32.xlu0 %v1256, 67
    %v1852 = vpop.permute.xlu0 %1851
    %1853 = vrot.lane.b32.xlu0 %v1267, 67
    %v1854 = vpop.permute.xlu0 %1853
    %1855 = vrot.lane.b32.xlu0 %v1268, 67
    %v1856 = vpop.permute.xlu0 %1855
    %1857 = vrot.lane.b32.xlu0 %v1262, 67
    %v1858 = vpop.permute.xlu0 %1857
    %1859 = vrot.lane.b32.xlu0 %v1296, 67
    %v1860 = vpop.permute.xlu0 %1859
    %1861 = vrot.lane.b32.xlu0 %v1297, 67
    %v1862 = vpop.permute.xlu0 %1861
    %1863 = vrot.lane.b32.xlu0 %v1283, 67
    %v1864 = vpop.permute.xlu0 %1863
    %1865 = vrot.lane.b32.xlu0 %v1298, 67
    %v1866 = vpop.permute.xlu0 %1865
    %1867 = vrot.lane.b32.xlu0 %v1299, 67
    %v1868 = vpop.permute.xlu0 %1867
    %1869 = vrot.lane.b32.xlu0 %v1289, 67
    %v1870 = vpop.permute.xlu0 %1869
    %1871 = vrot.lane.b32.xlu0 %v1300, 67
    %v1872 = vpop.permute.xlu0 %1871
    %1873 = vrot.lane.b32.xlu0 %v1301, 67
    %v1874 = vpop.permute.xlu0 %1873
    %1875 = vrot.lane.b32.xlu0 %v1295, 67
    %v1876 = vpop.permute.xlu0 %1875
    %1877 = vrot.lane.b32.xlu0 %v1330, 67
    %v1878 = vpop.permute.xlu0 %1877
    %1879 = vrot.lane.b32.xlu0 %v1331, 67
    %v1880 = vpop.permute.xlu0 %1879
    %1881 = vrot.lane.b32.xlu0 %v1316, 67
    %v1882 = vpop.permute.xlu0 %1881
    %1883 = vrot.lane.b32.xlu0 %v1332, 67
    %v1884 = vpop.permute.xlu0 %1883
    %1885 = vrot.lane.b32.xlu0 %v1333, 67
    %v1886 = vpop.permute.xlu0 %1885
    %1887 = vrot.lane.b32.xlu0 %v1322, 67
    %v1888 = vpop.permute.xlu0 %1887
    %1889 = vrot.lane.b32.xlu0 %v1334, 67
    %v1890 = vpop.permute.xlu0 %1889
    %1891 = vrot.lane.b32.xlu0 %v1335, 67
    %v1892 = vpop.permute.xlu0 %1891
    %1893 = vrot.lane.b32.xlu0 %v1328, 67
    %v1894 = vpop.permute.xlu0 %1893
    %1895 = vrot.lane.b32.xlu0 %v1778, 67
    %v1896 = vpop.permute.xlu0 %1895
    %1897 = vrot.lane.b32.xlu0 %v1779, 67
    %v1898 = vpop.permute.xlu0 %1897
    %1899 = vrot.lane.b32.xlu0 %v1780, 67
    %v1900 = vpop.permute.xlu0 %1899
    %1901 = vrot.lane.b32.xlu0 %v1781, 67
    %v1902 = vpop.permute.xlu0 %1901
    %1903 = vrot.lane.b32.xlu0 %v1782, 67
    %v1904 = vpop.permute.xlu0 %1903
    %1905 = vrot.lane.b32.xlu0 %v1783, 67
    %v1906 = vpop.permute.xlu0 %1905
    %1907 = vrot.lane.b32.xlu0 %v1784, 67
    %v1908 = vpop.permute.xlu0 %1907
    %1909 = vrot.lane.b32.xlu0 %v1785, 67
    %v1910 = vpop.permute.xlu0 %1909
    %1911 = vrot.lane.b32.xlu0 %v1786, 67
    %v1912 = vpop.permute.xlu0 %1911
    %1913 = vrot.lane.b32.xlu0 %v1397, 67
    %v1914 = vpop.permute.xlu0 %1913
    %1915 = vrot.lane.b32.xlu0 %v1398, 67
    %v1916 = vpop.permute.xlu0 %1915
    %1917 = vrot.lane.b32.xlu0 %v1793, 67
    %v1918 = vpop.permute.xlu0 %1917
    %1919 = vrot.lane.b32.xlu0 %v1399, 67
    %v1920 = vpop.permute.xlu0 %1919
    %1921 = vrot.lane.b32.xlu0 %v1400, 67
    %v1922 = vpop.permute.xlu0 %1921
    %1923 = vrot.lane.b32.xlu0 %v1794, 67
    %v1924 = vpop.permute.xlu0 %1923
    %1925 = vrot.lane.b32.xlu0 %v1401, 67
    %v1926 = vpop.permute.xlu0 %1925
    %1927 = vrot.lane.b32.xlu0 %v1402, 67
    %v1928 = vpop.permute.xlu0 %1927
    %1929 = vrot.lane.b32.xlu0 %v1795, 67
    %v1930 = vpop.permute.xlu0 %1929
    %1931 = vrot.lane.b32.xlu0 %v1431, 67
    %v1932 = vpop.permute.xlu0 %1931
    %1933 = vrot.lane.b32.xlu0 %v1432, 67
    %v1934 = vpop.permute.xlu0 %1933
    %1935 = vrot.lane.b32.xlu0 %v1802, 67
    %v1936 = vpop.permute.xlu0 %1935
    %1937 = vrot.lane.b32.xlu0 %v1433, 67
    %v1938 = vpop.permute.xlu0 %1937
    %1939 = vrot.lane.b32.xlu0 %v1434, 67
    %v1940 = vpop.permute.xlu0 %1939
    %1941 = vrot.lane.b32.xlu0 %v1803, 67
    %v1942 = vpop.permute.xlu0 %1941
    %1943 = vrot.lane.b32.xlu0 %v1435, 67
    %v1944 = vpop.permute.xlu0 %1943
    %1945 = vrot.lane.b32.xlu0 %v1436, 67
    %v1946 = vpop.permute.xlu0 %1945
    %1947 = vrot.lane.b32.xlu0 %v1804, 67
    %v1948 = vpop.permute.xlu0 %1947
    %1949 = vrot.lane.b32.xlu0 %v1465, 67
    %v1950 = vpop.permute.xlu0 %1949
    %1951 = vrot.lane.b32.xlu0 %v1466, 67
    %v1952 = vpop.permute.xlu0 %1951
    %1953 = vrot.lane.b32.xlu0 %v1811, 67
    %v1954 = vpop.permute.xlu0 %1953
    %1955 = vrot.lane.b32.xlu0 %v1467, 67
    %v1956 = vpop.permute.xlu0 %1955
    %1957 = vrot.lane.b32.xlu0 %v1468, 67
    %v1958 = vpop.permute.xlu0 %1957
    %1959 = vrot.lane.b32.xlu0 %v1812, 67
    %v1960 = vpop.permute.xlu0 %1959
    %1961 = vrot.lane.b32.xlu0 %v1469, 67
    %v1962 = vpop.permute.xlu0 %1961
    %1963 = vrot.lane.b32.xlu0 %v1470, 67
    %v1964 = vpop.permute.xlu0 %1963
    %1965 = vrot.lane.b32.xlu0 %v1813, 67
    %v1966 = vpop.permute.xlu0 %1965
    %1967 = vrot.lane.b32.xlu0 %v1499, 67
    %v1968 = vpop.permute.xlu0 %1967
    %1969 = vrot.lane.b32.xlu0 %v1500, 67
    %v1970 = vpop.permute.xlu0 %1969
    %1971 = vrot.lane.b32.xlu0 %v1820, 67
    %v1972 = vpop.permute.xlu0 %1971
    %1973 = vrot.lane.b32.xlu0 %v1501, 67
    %v1974 = vpop.permute.xlu0 %1973
    %1975 = vrot.lane.b32.xlu0 %v1502, 67
    %v1976 = vpop.permute.xlu0 %1975
    %1977 = vrot.lane.b32.xlu0 %v1821, 67
    %v1978 = vpop.permute.xlu0 %1977
    %1979 = vrot.lane.b32.xlu0 %v1503, 67
    %v1980 = vpop.permute.xlu0 %1979
    %1981 = vrot.lane.b32.xlu0 %v1504, 67
    %v1982 = vpop.permute.xlu0 %1981
    %1983 = vrot.lane.b32.xlu0 %v1822, 67
    %v1984 = vpop.permute.xlu0 %1983
    %vm1985 = vcmask 547840
    %v1986 = vsel %vm1985, %v1824, %v1826
    %v1987 = vsel %vm1985, %v1826, %v1828
    %v1988 = vsel %vm1985, %v1830, %v1832
    %v1989 = vsel %vm1985, %v1832, %v1834
    %v1990 = vsel %vm1985, %v1836, %v1838
    %v1991 = vsel %vm1985, %v1838, %v1840
    %v1992 = vsel %vm1985, %v1842, %v1844
    %v1993 = vsel %vm1985, %v1844, %v1846
    %v1994 = vsel %vm1985, %v1848, %v1850
    %v1995 = vsel %vm1985, %v1850, %v1852
    %v1996 = vsel %vm1985, %v1854, %v1856
    %v1997 = vsel %vm1985, %v1856, %v1858
    %v1998 = vsel %vm1985, %v1860, %v1862
    %v1999 = vsel %vm1985, %v1862, %v1864
    %v2000 = vsel %vm1985, %v1866, %v1868
    %v2001 = vsel %vm1985, %v1868, %v1870
    %v2002 = vsel %vm1985, %v1872, %v1874
    %v2003 = vsel %vm1985, %v1874, %v1876
    %v2004 = vsel %vm1985, %v1878, %v1880
    %v2005 = vsel %vm1985, %v1880, %v1882
    %v2006 = vsel %vm1985, %v1884, %v1886
    %v2007 = vsel %vm1985, %v1886, %v1888
    %v2008 = vsel %vm1985, %v1890, %v1892
    %v2009 = vsel %vm1985, %v1892, %v1894
    %v2010 = vsel %vm1985, %v1896, %v1898
    %v2011 = vsel %vm1985, %v1898, %v1900
    %v2012 = vsel %vm1985, %v1902, %v1904
    %v2013 = vsel %vm1985, %v1904, %v1906
    %v2014 = vsel %vm1985, %v1908, %v1910
    %v2015 = vsel %vm1985, %v1910, %v1912
    %v2016 = vsel %vm1985, %v1914, %v1916
    %v2017 = vsel %vm1985, %v1916, %v1918
    %v2018 = vsel %vm1985, %v1920, %v1922
    %v2019 = vsel %vm1985, %v1922, %v1924
    %v2020 = vsel %vm1985, %v1926, %v1928
    %v2021 = vsel %vm1985, %v1928, %v1930
    %v2022 = vsel %vm1985, %v1932, %v1934
    %v2023 = vsel %vm1985, %v1934, %v1936
    %v2024 = vsel %vm1985, %v1938, %v1940
    %v2025 = vsel %vm1985, %v1940, %v1942
    %v2026 = vsel %vm1985, %v1944, %v1946
    %v2027 = vsel %vm1985, %v1946, %v1948
    %v2028 = vsel %vm1985, %v1950, %v1952
    %v2029 = vsel %vm1985, %v1952, %v1954
    %v2030 = vsel %vm1985, %v1956, %v1958
    %v2031 = vsel %vm1985, %v1958, %v1960
    %v2032 = vsel %vm1985, %v1962, %v1964
    %v2033 = vsel %vm1985, %v1964, %v1966
    %v2034 = vsel %vm1985, %v1968, %v1970
    %v2035 = vsel %vm1985, %v1970, %v1972
    %v2036 = vsel %vm1985, %v1974, %v1976
    %v2037 = vsel %vm1985, %v1976, %v1978
    %v2038 = vsel %vm1985, %v1980, %v1982
    %v2039 = vsel %vm1985, %v1982, %v1984
    %v2121 = vpack.c.bf16 %v1113, %v1109
    %v2122 = vpack.c.bf16 %v1115, %v1111
    %v2123 = vpack.c.bf16 %v1215, %v1211
    %v2124 = vpack.c.bf16 %v1263, %v1119
    %v2125 = vpack.c.bf16 %v1264, %v1121
    %v2126 = vpack.c.bf16 %v1250, %v1221
    %v2127 = vpack.c.bf16 %v1267, %v1265
    %v2128 = vpack.c.bf16 %v1268, %v1266
    %v2129 = vpack.c.bf16 %v1262, %v1256
    %v2130 = vpack.c.bf16 %v1298, %v1296
    %v2131 = vpack.c.bf16 %v1299, %v1297
    %v2132 = vpack.c.bf16 %v1289, %v1283
    %v2133 = vpack.c.bf16 %v1330, %v1300
    %v2134 = vpack.c.bf16 %v1331, %v1301
    %v2135 = vpack.c.bf16 %v1316, %v1295
    %v2136 = vpack.c.bf16 %v1334, %v1332
    %v2137 = vpack.c.bf16 %v1335, %v1333
    %v2138 = vpack.c.bf16 %v1328, %v1322
    %v2139 = vpack.c.bf16 %v1366, %v1364
    %v2140 = vpack.c.bf16 %v1367, %v1365
    %v2141 = vpack.c.bf16 %v1356, %v1350
    %v2142 = vpack.c.bf16 %v1397, %v1368
    %v2143 = vpack.c.bf16 %v1398, %v1369
    %v2144 = vpack.c.bf16 %v1384, %v1362
    %v2145 = vpack.c.bf16 %v1401, %v1399
    %v2146 = vpack.c.bf16 %v1402, %v1400
    %v2147 = vpack.c.bf16 %v1396, %v1390
    %v2148 = vpack.c.bf16 %v1433, %v1431
    %v2149 = vpack.c.bf16 %v1434, %v1432
    %v2150 = vpack.c.bf16 %v1423, %v1417
    %v2151 = vpack.c.bf16 %v1465, %v1435
    %v2152 = vpack.c.bf16 %v1466, %v1436
    %v2153 = vpack.c.bf16 %v1451, %v1429
    %v2154 = vpack.c.bf16 %v1469, %v1467
    %v2155 = vpack.c.bf16 %v1470, %v1468
    %v2156 = vpack.c.bf16 %v1463, %v1457
    %v2157 = vpack.c.bf16 %v1501, %v1499
    %v2158 = vpack.c.bf16 %v1502, %v1500
    %v2159 = vpack.c.bf16 %v1491, %v1485
    %v2160 = vpack.c.bf16 %v1533, %v1503
    %v2161 = vpack.c.bf16 %v1534, %v1504
    %v2162 = vpack.c.bf16 %v1519, %v1497
    %v2163 = vpack.c.bf16 %v1537, %v1535
    %v2164 = vpack.c.bf16 %v1538, %v1536
    %v2165 = vpack.c.bf16 %v1531, %v1525
    %v2166 = vpack.c.bf16 %v1568, %v1566
    %v2167 = vpack.c.bf16 %v1569, %v1567
    %v2168 = vpack.c.bf16 %v1559, %v1553
    %v2169 = vpack.c.bf16 %v1600, %v1570
    %v2170 = vpack.c.bf16 %v1601, %v1571
    %v2171 = vpack.c.bf16 %v1586, %v1565
    %v2172 = vpack.c.bf16 %v1604, %v1602
    %v2173 = vpack.c.bf16 %v1605, %v1603
    %v2174 = vpack.c.bf16 %v1598, %v1592
    %v2175 = vpack.c.bf16 %v1636, %v1634
    %v2176 = vpack.c.bf16 %v1637, %v1635
    %v2177 = vpack.c.bf16 %v1626, %v1620
    %v2178 = vpack.c.bf16 %v1668, %v1638
    %v2179 = vpack.c.bf16 %v1669, %v1639
    %v2180 = vpack.c.bf16 %v1654, %v1632
    %v2181 = vpack.c.bf16 %v1672, %v1670
    %v2182 = vpack.c.bf16 %v1673, %v1671
    %v2183 = vpack.c.bf16 %v1666, %v1660
    %v2184 = vpack.c.bf16 %v1704, %v1702
    %v2185 = vpack.c.bf16 %v1705, %v1703
    %v2186 = vpack.c.bf16 %v1694, %v1688
    %v2187 = vpack.c.bf16 %v1736, %v1706
    %v2188 = vpack.c.bf16 %v1737, %v1707
    %v2189 = vpack.c.bf16 %v1722, %v1700
    %v2190 = vpack.c.bf16 %v1740, %v1738
    %v2191 = vpack.c.bf16 %v1741, %v1739
    %v2192 = vpack.c.bf16 %v1734, %v1728
    %v2193 = vpack.c.bf16 %v1988, %v1986
    %v2194 = vpack.c.bf16 %v1989, %v1987
    %v2195 = vpack.c.bf16 %v1834, %v1828
    %v2196 = vpack.c.bf16 %v1992, %v1990
    %v2197 = vpack.c.bf16 %v1993, %v1991
    %v2198 = vpack.c.bf16 %v1846, %v1840
    %v2199 = vpack.c.bf16 %v1996, %v1994
    %v2200 = vpack.c.bf16 %v1997, %v1995
    %v2201 = vpack.c.bf16 %v1858, %v1852
    %v2202 = vpack.c.bf16 %v2000, %v1998
    %v2203 = vpack.c.bf16 %v2001, %v1999
    %v2204 = vpack.c.bf16 %v1870, %v1864
    %v2205 = vpack.c.bf16 %v2004, %v2002
    %v2206 = vpack.c.bf16 %v2005, %v2003
    %v2207 = vpack.c.bf16 %v1882, %v1876
    %v2208 = vpack.c.bf16 %v2008, %v2006
    %v2209 = vpack.c.bf16 %v2009, %v2007
    %v2210 = vpack.c.bf16 %v1894, %v1888
    %v2211 = vpack.c.bf16 %v2012, %v2010
    %v2212 = vpack.c.bf16 %v2013, %v2011
    %v2213 = vpack.c.bf16 %v1906, %v1900
    %v2214 = vpack.c.bf16 %v2016, %v2014
    %v2215 = vpack.c.bf16 %v2017, %v2015
    %v2216 = vpack.c.bf16 %v1918, %v1912
    %v2217 = vpack.c.bf16 %v2020, %v2018
    %v2218 = vpack.c.bf16 %v2021, %v2019
    %v2219 = vpack.c.bf16 %v1930, %v1924
    %v2220 = vpack.c.bf16 %v2024, %v2022
    %v2221 = vpack.c.bf16 %v2025, %v2023
    %v2222 = vpack.c.bf16 %v1942, %v1936
    %v2223 = vpack.c.bf16 %v2028, %v2026
    %v2224 = vpack.c.bf16 %v2029, %v2027
    %v2225 = vpack.c.bf16 %v1954, %v1948
    %v2226 = vpack.c.bf16 %v2032, %v2030
    %v2227 = vpack.c.bf16 %v2033, %v2031
    %v2228 = vpack.c.bf16 %v1966, %v1960
    %v2229 = vpack.c.bf16 %v2036, %v2034
    %v2230 = vpack.c.bf16 %v2037, %v2035
    %v2231 = vpack.c.bf16 %v1978, %v1972
    %v2232 = vpack.c.bf16 %v2038, %v2038
    %v2233 = vpack.c.bf16 %v2039, %v2039
    %v2234 = vpack.c.bf16 %v1984, %v1984
    %v2235 = vld [vmem:[%s5] sm:$0xff]
    %v2236 = vld [vmem:[%s5 + $0x8] sm:$0xff]
    %v2237 = vld [vmem:[%s5 + $0x10] sm:$0xff]
    %2239 = vset.pattern.permute.xlu0 0
    %2240 = vperm.xlu0 %2239, %v2235
    %v2241 = vpop.permute.xlu0 %2240
    %2244 = vset.pattern.permute.xlu0 0
    %2245 = vperm.xlu0 %2244, %v2236
    %v2246 = vpop.permute.xlu0 %2245
    %2249 = vset.pattern.permute.xlu0 0
    %2250 = vperm.xlu0 %2249, %v2237
    %v2251 = vpop.permute.xlu0 %2250
    %v2262 = vunpack.c.l.b16 %v1227
    %v2263 = vunpack.c.h.b16 %v1227
    %v2264 = vunpack.c.l.b16 %v1228
    %v2265 = vunpack.c.h.b16 %v1228
    %v2266 = vunpack.c.l.b16 %v1229
    %v2267 = vunpack.c.l.b16 %v1230
    %v2268 = vunpack.c.h.b16 %v1230
    %v2269 = vunpack.c.l.b16 %v1231
    %v2270 = vunpack.c.h.b16 %v1231
    %v2271 = vunpack.c.l.b16 %v1232
    %v2272 = vunpack.c.l.b16 %v1233
    %v2273 = vunpack.c.h.b16 %v1233
    %v2274 = vunpack.c.l.b16 %v1234
    %v2275 = vunpack.c.h.b16 %v1234
    %v2276 = vunpack.c.l.b16 %v1235
    %v2277 = vpack.c.b16 %v2267, %v2262
    %v2278 = vpack.c.b16 %v2268, %v2263
    %v2279 = vpack.c.b16 %v2269, %v2264
    %v2280 = vpack.c.b16 %v2270, %v2265
    %v2281 = vpack.c.b16 %v2271, %v2266
    %v2282 = vpack.c.b16 %v2272, %v2272
    %v2283 = vpack.c.b16 %v2273, %v2273
    %v2284 = vpack.c.b16 %v2274, %v2274
    %v2285 = vpack.c.b16 %v2275, %v2275
    %v2286 = vpack.c.b16 %v2276, %v2276
    %v2296 = vsel %vm408, %v2281, 0
    %v2299 = vsel %vm408, %v2286, 0
    %v2302 = vsel %vm415, %v2232, 0
    %v2305 = vsel %vm415, %v2233, 0
    %v2308 = vsel %vm415, %v2234, 0
    %2310 = vmatprep.subr.bf16.mxu0 %v2143
    %2311 = vmatpush1.bf16.msra.mxu0 %v2142
    %2312 = vmatprep.subr.bf16.mxu0 %v2140
    %2313 = vmatpush1.bf16.msra.mxu0 %v2139
    %2314 = vmatprep.subr.bf16.mxu0 %v2137
    %2315 = vmatpush1.bf16.msra.mxu0 %v2136
    %2316 = vmatprep.subr.bf16.mxu0 %v2134
    %2317 = vmatpush1.bf16.msra.mxu0 %v2133
    %2318 = vmatprep.subr.bf16.mxu0 %v2131
    %2319 = vmatpush1.bf16.msra.mxu0 %v2130
    %2320 = vmatprep.subr.bf16.mxu0 %v2128
    %2321 = vmatpush1.bf16.msra.mxu0 %v2127
    %2322 = vmatprep.subr.bf16.mxu0 %v2125
    %2323 = vmatpush1.bf16.msra.mxu0 %v2124
    %2324 = vmatprep.subr.bf16.mxu0 %v2122
    %2325 = vmatpush1.bf16.msra.mxu0 %v2121
    %2326 = vmatprep.subr.bf16.mxu0 %v2167
    %2327 = vmatpush2.bf16.msra.mxu0 %v2166
    %2328 = vmatprep.subr.bf16.mxu0 %v2164
    %2329 = vmatpush2.bf16.msra.mxu0 %v2163
    %2330 = vmatprep.subr.bf16.mxu0 %v2161
    %2331 = vmatpush2.bf16.msra.mxu0 %v2160
    %2332 = vmatprep.subr.bf16.mxu0 %v2158
    %2333 = vmatpush2.bf16.msra.mxu0 %v2157
    %2334 = vmatprep.subr.bf16.mxu0 %v2155
    %2335 = vmatpush2.bf16.msra.mxu0 %v2154
    %2336 = vmatprep.subr.bf16.mxu0 %v2152
    %2337 = vmatpush2.bf16.msra.mxu0 %v2151
    %2338 = vmatprep.subr.bf16.mxu0 %v2149
    %2339 = vmatpush2.bf16.msra.mxu0 %v2148
    %2340 = vmatprep.subr.bf16.mxu0 %v2146
    %2341 = vmatpush2.bf16.msra.mxu0 %v2145
    %2342 = vmatprep.mubr.bf16.mxu0 %v2278
    %2343 = vmatmul.mubr.bf16.gmra.mxu0 %v2277
    %v2344 = vpop.f32.mrf.mxu0
    %v2345 = vadd.f32 %v2241, %v2344
    %v2346 = vpop.f32.mrf.mxu0
    %v2347 = vadd.f32 %v2241, %v2346
    %v2348 = vpop.f32.mrf.mxu0
    %v2349 = vadd.f32 %v2246, %v2348
    %v2350 = vpop.f32.mrf.mxu0
    %v2351 = vadd.f32 %v2246, %v2350
    %2352 = vmatprep.mubr.bf16.mxu0 %v2283
    %2353 = vmatmul.mubr.bf16.gmra.mxu0 %v2282
    %v2354 = vpop.f32.mrf.mxu0
    %v2355 = vadd.f32 %v2251, %v2354
    %v2356 = vpop.f32.mrf.mxu0
    %v2357 = vadd.f32 %v2251, %v2356
    %v2358 = vpop.f32.mrf.mxu0
    %v2359 = vpop.f32.mrf.mxu0
    %2360 = vdwg.mxu0
    %2361 = vmatprep.subr.bf16.mxu0 %v2191
    %2362 = vmatpush1.bf16.msra.mxu0 %v2190
    %2363 = vmatprep.subr.bf16.mxu0 %v2188
    %2364 = vmatpush1.bf16.msra.mxu0 %v2187
    %2365 = vmatprep.subr.bf16.mxu0 %v2185
    %2366 = vmatpush1.bf16.msra.mxu0 %v2184
    %2367 = vmatprep.subr.bf16.mxu0 %v2182
    %2368 = vmatpush1.bf16.msra.mxu0 %v2181
    %2369 = vmatprep.subr.bf16.mxu0 %v2179
    %2370 = vmatpush1.bf16.msra.mxu0 %v2178
    %2371 = vmatprep.subr.bf16.mxu0 %v2176
    %2372 = vmatpush1.bf16.msra.mxu0 %v2175
    %2373 = vmatprep.subr.bf16.mxu0 %v2173
    %2374 = vmatpush1.bf16.msra.mxu0 %v2172
    %2375 = vmatprep.subr.bf16.mxu0 %v2170
    %2376 = vmatpush1.bf16.msra.mxu0 %v2169
    %2377 = vmatprep.subr.bf16.mxu0 %v2215
    %2378 = vmatpush2.bf16.msra.mxu0 %v2214
    %2379 = vmatprep.subr.bf16.mxu0 %v2212
    %2380 = vmatpush2.bf16.msra.mxu0 %v2211
    %2381 = vmatprep.subr.bf16.mxu0 %v2209
    %2382 = vmatpush2.bf16.msra.mxu0 %v2208
    %2383 = vmatprep.subr.bf16.mxu0 %v2206
    %2384 = vmatpush2.bf16.msra.mxu0 %v2205
    %2385 = vmatprep.subr.bf16.mxu0 %v2203
    %2386 = vmatpush2.bf16.msra.mxu0 %v2202
    %2387 = vmatprep.subr.bf16.mxu0 %v2200
    %2388 = vmatpush2.bf16.msra.mxu0 %v2199
    %2389 = vmatprep.subr.bf16.mxu0 %v2197
    %2390 = vmatpush2.bf16.msra.mxu0 %v2196
    %2391 = vmatprep.subr.bf16.mxu0 %v2194
    %2392 = vmatpush2.bf16.msra.mxu0 %v2193
    %2393 = vmatprep.mubr.bf16.mxu0 %v2280
    %2394 = vmatmul.mubr.bf16.gmra.mxu0 %v2279
    %v2395 = vpop.f32.mrf.mxu0
    %v2396 = vadd.f32 %v2345, %v2395
    %v2397 = vpop.f32.mrf.mxu0
    %v2398 = vadd.f32 %v2347, %v2397
    %v2399 = vpop.f32.mrf.mxu0
    %v2400 = vadd.f32 %v2349, %v2399
    %v2401 = vpop.f32.mrf.mxu0
    %v2402 = vadd.f32 %v2351, %v2401
    %2403 = vmatprep.mubr.bf16.mxu0 %v2285
    %2404 = vmatmul.mubr.bf16.gmra.mxu0 %v2284
    %v2405 = vpop.f32.mrf.mxu0
    %v2406 = vadd.f32 %v2355, %v2405
    %v2407 = vpop.f32.mrf.mxu0
    %v2408 = vadd.f32 %v2357, %v2407
    %v2409 = vpop.f32.mrf.mxu0
    %v2410 = vpop.f32.mrf.mxu0
    %2411 = vdwg.mxu0
    %2412 = vmatprep.subr.bf16.mxu0 0
    %2413 = vmatpush1.bf16.msra.mxu0 0
    %2414 = vmatprep.subr.bf16.mxu0 0
    %2415 = vmatpush1.bf16.msra.mxu0 0
    %2416 = vmatprep.subr.bf16.mxu0 %v2305
    %2417 = vmatpush1.bf16.msra.mxu0 %v2302
    %2418 = vmatprep.subr.bf16.mxu0 %v2230
    %2419 = vmatpush1.bf16.msra.mxu0 %v2229
    %2420 = vmatprep.subr.bf16.mxu0 %v2227
    %2421 = vmatpush1.bf16.msra.mxu0 %v2226
    %2422 = vmatprep.subr.bf16.mxu0 %v2224
    %2423 = vmatpush1.bf16.msra.mxu0 %v2223
    %2424 = vmatprep.subr.bf16.mxu0 %v2221
    %2425 = vmatpush1.bf16.msra.mxu0 %v2220
    %2426 = vmatprep.subr.bf16.mxu0 %v2218
    %2427 = vmatpush1.bf16.msra.mxu0 %v2217
    %2428 = vmatprep.subr.bf16.mxu0 0
    %2429 = vmatpush2.bf16.msra.mxu0 0
    %2430 = vmatprep.subr.bf16.mxu0 0
    %2431 = vmatpush2.bf16.msra.mxu0 0
    %2432 = vmatprep.subr.bf16.mxu0 0
    %2433 = vmatpush2.bf16.msra.mxu0 0
    %2434 = vmatprep.subr.bf16.mxu0 0
    %2435 = vmatpush2.bf16.msra.mxu0 0
    %2436 = vmatprep.subr.bf16.mxu0 0
    %2437 = vmatpush2.bf16.msra.mxu0 0
    %2438 = vmatprep.subr.bf16.mxu0 0
    %2439 = vmatpush2.bf16.msra.mxu0 0
    %2440 = vmatprep.subr.bf16.mxu0 0
    %2441 = vmatpush2.bf16.msra.mxu0 0
    %2442 = vmatprep.subr.bf16.mxu0 0
    %2443 = vmatpush2.bf16.msra.mxu0 0
    %2444 = vmatprep.mubr.bf16.mxu0 0
    %2445 = vmatmul.mubr.bf16.gmra.mxu0 %v2296
    %v2446 = vpop.f32.mrf.mxu0
    %v2447 = vadd.f32 %v2396, %v2446
    %v2448 = vpop.f32.mrf.mxu0
    %v2449 = vadd.f32 %v2398, %v2448
    %v2450 = vpop.f32.mrf.mxu0
    %v2451 = vadd.f32 %v2400, %v2450
    %v2452 = vpop.f32.mrf.mxu0
    %v2453 = vadd.f32 %v2402, %v2452
    %2454 = vmatprep.mubr.bf16.mxu0 0
    %2455 = vmatmul.mubr.bf16.gmra.mxu0 %v2299
    %v2456 = vpop.f32.mrf.mxu0
    %v2457 = vadd.f32 %v2406, %v2456
    %v2458 = vpop.f32.mrf.mxu0
    %v2459 = vadd.f32 %v2408, %v2458
    %v2460 = vpop.f32.mrf.mxu0
    %v2461 = vpop.f32.mrf.mxu0
    %2462 = vdwg.mxu0
    %2463 = vmatprep.subr.bf16.mxu0 0
    %2464 = vmatpush1.bf16.msra.mxu0 %v2144
    %2465 = vmatprep.subr.bf16.mxu0 0
    %2466 = vmatpush1.bf16.msra.mxu0 %v2141
    %2467 = vmatprep.subr.bf16.mxu0 0
    %2468 = vmatpush1.bf16.msra.mxu0 %v2138
    %2469 = vmatprep.subr.bf16.mxu0 0
    %2470 = vmatpush1.bf16.msra.mxu0 %v2135
    %2471 = vmatprep.subr.bf16.mxu0 0
    %2472 = vmatpush1.bf16.msra.mxu0 %v2132
    %2473 = vmatprep.subr.bf16.mxu0 0
    %2474 = vmatpush1.bf16.msra.mxu0 %v2129
    %2475 = vmatprep.subr.bf16.mxu0 0
    %2476 = vmatpush1.bf16.msra.mxu0 %v2126
    %2477 = vmatprep.subr.bf16.mxu0 0
    %2478 = vmatpush1.bf16.msra.mxu0 %v2123
    %2479 = vmatprep.subr.bf16.mxu0 0
    %2480 = vmatpush2.bf16.msra.mxu0 %v2168
    %2481 = vmatprep.subr.bf16.mxu0 0
    %2482 = vmatpush2.bf16.msra.mxu0 %v2165
    %2483 = vmatprep.subr.bf16.mxu0 0
    %2484 = vmatpush2.bf16.msra.mxu0 %v2162
    %2485 = vmatprep.subr.bf16.mxu0 0
    %2486 = vmatpush2.bf16.msra.mxu0 %v2159
    %2487 = vmatprep.subr.bf16.mxu0 0
    %2488 = vmatpush2.bf16.msra.mxu0 %v2156
    %2489 = vmatprep.subr.bf16.mxu0 0
    %2490 = vmatpush2.bf16.msra.mxu0 %v2153
    %2491 = vmatprep.subr.bf16.mxu0 0
    %2492 = vmatpush2.bf16.msra.mxu0 %v2150
    %2493 = vmatprep.subr.bf16.mxu0 0
    %2494 = vmatpush2.bf16.msra.mxu0 %v2147
    %2495 = vmatprep.mubr.bf16.mxu0 %v2278
    %2496 = vmatmul.mubr.bf16.gmra.mxu0 %v2277
    %v2497 = vpop.f32.mrf.mxu0
    %v2498 = vadd.f32 %v2241, %v2497
    %v2499 = vpop.f32.mrf.mxu0
    %v2500 = vpop.f32.mrf.mxu0
    %v2501 = vadd.f32 %v2246, %v2500
    %v2502 = vpop.f32.mrf.mxu0
    %2503 = vmatprep.mubr.bf16.mxu0 %v2283
    %2504 = vmatmul.mubr.bf16.gmra.mxu0 %v2282
    %v2505 = vpop.f32.mrf.mxu0
    %v2506 = vadd.f32 %v2251, %v2505
    %v2507 = vpop.f32.mrf.mxu0
    %v2508 = vpop.f32.mrf.mxu0
    %v2509 = vpop.f32.mrf.mxu0
    %2510 = vdwg.mxu0
    %2511 = vmatprep.subr.bf16.mxu0 0
    %2512 = vmatpush1.bf16.msra.mxu0 %v2192
    %2513 = vmatprep.subr.bf16.mxu0 0
    %2514 = vmatpush1.bf16.msra.mxu0 %v2189
    %2515 = vmatprep.subr.bf16.mxu0 0
    %2516 = vmatpush1.bf16.msra.mxu0 %v2186
    %2517 = vmatprep.subr.bf16.mxu0 0
    %2518 = vmatpush1.bf16.msra.mxu0 %v2183
    %2519 = vmatprep.subr.bf16.mxu0 0
    %2520 = vmatpush1.bf16.msra.mxu0 %v2180
    %2521 = vmatprep.subr.bf16.mxu0 0
    %2522 = vmatpush1.bf16.msra.mxu0 %v2177
    %2523 = vmatprep.subr.bf16.mxu0 0
    %2524 = vmatpush1.bf16.msra.mxu0 %v2174
    %2525 = vmatprep.subr.bf16.mxu0 0
    %2526 = vmatpush1.bf16.msra.mxu0 %v2171
    %2527 = vmatprep.subr.bf16.mxu0 0
    %2528 = vmatpush2.bf16.msra.mxu0 %v2216
    %2529 = vmatprep.subr.bf16.mxu0 0
    %2530 = vmatpush2.bf16.msra.mxu0 %v2213
    %2531 = vmatprep.subr.bf16.mxu0 0
    %2532 = vmatpush2.bf16.msra.mxu0 %v2210
    %2533 = vmatprep.subr.bf16.mxu0 0
    %2534 = vmatpush2.bf16.msra.mxu0 %v2207
    %2535 = vmatprep.subr.bf16.mxu0 0
    %2536 = vmatpush2.bf16.msra.mxu0 %v2204
    %2537 = vmatprep.subr.bf16.mxu0 0
    %2538 = vmatpush2.bf16.msra.mxu0 %v2201
    %2539 = vmatprep.subr.bf16.mxu0 0
    %2540 = vmatpush2.bf16.msra.mxu0 %v2198
    %2541 = vmatprep.subr.bf16.mxu0 0
    %2542 = vmatpush2.bf16.msra.mxu0 %v2195
    %2543 = vmatprep.mubr.bf16.mxu0 %v2280
    %2544 = vmatmul.mubr.bf16.gmra.mxu0 %v2279
    %v2545 = vpop.f32.mrf.mxu0
    %v2546 = vadd.f32 %v2498, %v2545
    %v2547 = vpop.f32.mrf.mxu0
    %v2548 = vpop.f32.mrf.mxu0
    %v2549 = vadd.f32 %v2501, %v2548
    %v2550 = vpop.f32.mrf.mxu0
    %2551 = vmatprep.mubr.bf16.mxu0 %v2285
    %2552 = vmatmul.mubr.bf16.gmra.mxu0 %v2284
    %v2553 = vpop.f32.mrf.mxu0
    %v2554 = vadd.f32 %v2506, %v2553
    %v2555 = vpop.f32.mrf.mxu0
    %v2556 = vpop.f32.mrf.mxu0
    %v2557 = vpop.f32.mrf.mxu0
    %2558 = vdwg.mxu0
    %2559 = vmatprep.subr.bf16.mxu0 0
    %2560 = vmatpush1.bf16.msra.mxu0 0
    %2561 = vmatprep.subr.bf16.mxu0 0
    %2562 = vmatpush1.bf16.msra.mxu0 0
    %2563 = vmatprep.subr.bf16.mxu0 0
    %2564 = vmatpush1.bf16.msra.mxu0 %v2308
    %2565 = vmatprep.subr.bf16.mxu0 0
    %2566 = vmatpush1.bf16.msra.mxu0 %v2231
    %2567 = vmatprep.subr.bf16.mxu0 0
    %2568 = vmatpush1.bf16.msra.mxu0 %v2228
    %2569 = vmatprep.subr.bf16.mxu0 0
    %2570 = vmatpush1.bf16.msra.mxu0 %v2225
    %2571 = vmatprep.subr.bf16.mxu0 0
    %2572 = vmatpush1.bf16.msra.mxu0 %v2222
    %2573 = vmatprep.subr.bf16.mxu0 0
    %2574 = vmatpush1.bf16.msra.mxu0 %v2219
    %2575 = vmatprep.subr.bf16.mxu0 0
    %2576 = vmatpush2.bf16.msra.mxu0 0
    %2577 = vmatprep.subr.bf16.mxu0 0
    %2578 = vmatpush2.bf16.msra.mxu0 0
    %2579 = vmatprep.subr.bf16.mxu0 0
    %2580 = vmatpush2.bf16.msra.mxu0 0
    %2581 = vmatprep.subr.bf16.mxu0 0
    %2582 = vmatpush2.bf16.msra.mxu0 0
    %2583 = vmatprep.subr.bf16.mxu0 0
    %2584 = vmatpush2.bf16.msra.mxu0 0
    %2585 = vmatprep.subr.bf16.mxu0 0
    %2586 = vmatpush2.bf16.msra.mxu0 0
    %2587 = vmatprep.subr.bf16.mxu0 0
    %2588 = vmatpush2.bf16.msra.mxu0 0
    %2589 = vmatprep.subr.bf16.mxu0 0
    %2590 = vmatpush2.bf16.msra.mxu0 0
    %2591 = vmatprep.mubr.bf16.mxu0 0
    %2592 = vmatmul.mubr.bf16.gmra.mxu0 %v2296
    %v2593 = vpop.f32.mrf.mxu0
    %v2594 = vadd.f32 %v2546, %v2593
    %v2595 = vpop.f32.mrf.mxu0
    %v2596 = vpop.f32.mrf.mxu0
    %v2597 = vadd.f32 %v2549, %v2596
    %v2598 = vpop.f32.mrf.mxu0
    %2599 = vmatprep.mubr.bf16.mxu0 0
    %2600 = vmatmul.mubr.bf16.gmra.mxu0 %v2299
    %v2601 = vpop.f32.mrf.mxu0
    %v2602 = vadd.f32 %v2554, %v2601
    %v2603 = vpop.f32.mrf.mxu0
    %v2604 = vpop.f32.mrf.mxu0
    %v2605 = vpop.f32.mrf.mxu0
    %2606 = vdwg.mxu0
    %v2607 = vsub.f32 0.0, %v2447
    %v2608 = vsub.f32 0.0, %v2449
    %v2609 = vsub.f32 0.0, %v2594
    %v2610 = vsub.f32 0.0, %v2451
    %v2611 = vsub.f32 0.0, %v2453
    %v2612 = vsub.f32 0.0, %v2597
    %v2613 = vsub.f32 0.0, %v2457
    %v2614 = vsub.f32 0.0, %v2459
    %v2615 = vsub.f32 0.0, %v2602
    %v2616 = vmul.f32 %v2607, 1.442695
    %v2617 = vpow.pop %v2616
    %v2618 = vmul.f32 %v2608, 1.442695
    %v2619 = vpow.pop %v2618
    %v2620 = vmul.f32 %v2609, 1.442695
    %v2621 = vpow.pop %v2620
    %v2622 = vmul.f32 %v2610, 1.442695
    %v2623 = vpow.pop %v2622
    %v2624 = vmul.f32 %v2611, 1.442695
    %v2625 = vpow.pop %v2624
    %v2626 = vmul.f32 %v2612, 1.442695
    %v2627 = vpow.pop %v2626
    %v2628 = vmul.f32 %v2613, 1.442695
    %v2629 = vpow.pop %v2628
    %v2630 = vmul.f32 %v2614, 1.442695
    %v2631 = vpow.pop %v2630
    %v2632 = vmul.f32 %v2615, 1.442695
    %v2633 = vpow.pop %v2632
    %v2634 = vadd.f32 %v2617, 1.0
    %v2635 = vadd.f32 %v2619, 1.0
    %v2636 = vadd.f32 %v2621, 1.0
    %v2637 = vadd.f32 %v2623, 1.0
    %v2638 = vadd.f32 %v2625, 1.0
    %v2639 = vadd.f32 %v2627, 1.0
    %v2640 = vadd.f32 %v2629, 1.0
    %v2641 = vadd.f32 %v2631, 1.0
    %v2642 = vadd.f32 %v2633, 1.0
    %v2643 = vrcp.pop %v2634
    %v2644 = vrcp.pop %v2635
    %v2645 = vrcp.pop %v2636
    %v2646 = vrcp.pop %v2637
    %v2647 = vrcp.pop %v2638
    %v2648 = vrcp.pop %v2639
    %v2649 = vrcp.pop %v2640
    %v2650 = vrcp.pop %v2641
    %v2651 = vrcp.pop %v2642
    %v2652 = vpack.c.bf16 %v2646, %v2643
    %v2653 = vpack.c.bf16 %v2647, %v2644
    %v2654 = vpack.c.bf16 %v2648, %v2645
    %v2655 = vpack.c.bf16 %v2649, %v2649
    %v2656 = vpack.c.bf16 %v2650, %v2650
    %v2657 = vpack.c.bf16 %v2651, %v2651
    %v2658 = vld [vmem:[%s6] sm:$0xff]
    %v2659 = vld [vmem:[%s6 + $0x8] sm:$0xff]
    %v2660 = vld [vmem:[%s6 + $0x10] sm:$0xff]
    %v2661 = vld [vmem:[%s6 + $0x18] sm:$0xff]
    %v2662 = vld [vmem:[%s6 + $0x20] sm:$0xff]
    %v2663 = vld [vmem:[%s6 + $0x28] sm:$0xff]
    %v2664 = vld [vmem:[%s6 + $0x30] sm:$0xff]
    %v2665 = vld [vmem:[%s6 + $0x38] sm:$0xff]
    %v2666 = vld [vmem:[%s6 + $0x40] sm:$0xff]
    %v2667 = vld [vmem:[%s6 + $0x48] sm:$0xff]
    %v2668 = vld [vmem:[%s6 + $0x50] sm:$0xff]
    %v2669 = vld [vmem:[%s6 + $0x58] sm:$0xff]
    %v2670 = vld [vmem:[%s6 + $0x60] sm:$0xff]
    %v2671 = vld [vmem:[%s6 + $0x68] sm:$0xff]
    %v2672 = vld [vmem:[%s6 + $0x70] sm:$0xff]
    %v2673 = vld [vmem:[%s6 + $0x78] sm:$0xff]
    %v2674 = vld [vmem:[%s6 + $0x80] sm:$0xff]
    %v2675 = vld [vmem:[%s6 + $0x88] sm:$0xff]
    %v2676 = vld [vmem:[%s6 + $0x90] sm:$0xff]
    %v2677 = vld [vmem:[%s6 + $0x98] sm:$0xff]
    %v2678 = vld [vmem:[%s6 + $0xa0] sm:$0xff]
    %v2679 = vld [vmem:[%s6 + $0xa8] sm:$0xff]
    %v2680 = vld [vmem:[%s6 + $0xb0] sm:$0xff]
    %v2681 = vld [vmem:[%s6 + $0xb8] sm:$0xff]
    %v2682 = vld [vmem:[%s6 + $0xc0] sm:$0xff]
    %v2683 = vld [vmem:[%s6 + $0xc8] sm:$0xff]
    %v2684 = vld [vmem:[%s6 + $0xd0] sm:$0xff]
    %v2685 = vld [vmem:[%s6 + $0xd8] sm:$0xff]
    %v2686 = vld [vmem:[%s6 + $0xe0] sm:$0xff]
    %v2687 = vld [vmem:[%s6 + $0xe8] sm:$0xff]
    %v2688 = vld [vmem:[%s6 + $0xf0] sm:$0xff]
    %v2689 = vld [vmem:[%s6 + $0xf8] sm:$0xff]
    %v2690 = vld [vmem:[%s6 + $0x100] sm:$0xff]
    %v2691 = vld [vmem:[%s6 + $0x108] sm:$0xff]
    %v2692 = vld [vmem:[%s6 + $0x110] sm:$0xff]
    %v2693 = vld [vmem:[%s6 + $0x118] sm:$0xff]
    %v2694 = vld [vmem:[%s6 + $0x120] sm:$0xff]
    %v2695 = vld [vmem:[%s6 + $0x128] sm:$0xff]
    %v2696 = vld [vmem:[%s6 + $0x130] sm:$0xff]
    %v2697 = vld [vmem:[%s6 + $0x138] sm:$0x33]
    %v2738 = vunpack.c.l.b16 %v2658
    %v2739 = vunpack.c.h.b16 %v2658
    %v2740 = vunpack.c.l.b16 %v2659
    %v2741 = vunpack.c.h.b16 %v2659
    %v2742 = vunpack.c.l.b16 %v2660
    %v2743 = vunpack.c.h.b16 %v2660
    %v2744 = vunpack.c.l.b16 %v2661
    %v2745 = vunpack.c.h.b16 %v2661
    %v2746 = vunpack.c.l.b16 %v2662
    %v2747 = vunpack.c.h.b16 %v2662
    %v2748 = vunpack.c.l.b16 %v2663
    %v2749 = vunpack.c.h.b16 %v2663
    %v2750 = vunpack.c.l.b16 %v2664
    %v2751 = vunpack.c.h.b16 %v2664
    %v2752 = vunpack.c.l.b16 %v2665
    %v2753 = vunpack.c.h.b16 %v2665
    %v2754 = vunpack.c.l.b16 %v2666
    %v2755 = vunpack.c.h.b16 %v2666
    %v2756 = vunpack.c.l.b16 %v2667
    %v2757 = vunpack.c.h.b16 %v2667
    %v2758 = vunpack.c.l.b16 %v2668
    %v2759 = vunpack.c.h.b16 %v2668
    %v2760 = vunpack.c.l.b16 %v2669
    %v2761 = vunpack.c.h.b16 %v2669
    %v2762 = vunpack.c.l.b16 %v2670
    %v2763 = vunpack.c.h.b16 %v2670
    %v2764 = vunpack.c.l.b16 %v2671
    %v2765 = vunpack.c.h.b16 %v2671
    %v2766 = vunpack.c.l.b16 %v2672
    %v2767 = vunpack.c.h.b16 %v2672
    %v2768 = vunpack.c.l.b16 %v2673
    %v2769 = vunpack.c.h.b16 %v2673
    %v2770 = vunpack.c.l.b16 %v2674
    %v2771 = vunpack.c.h.b16 %v2674
    %v2772 = vunpack.c.l.b16 %v2675
    %v2773 = vunpack.c.h.b16 %v2675
    %v2774 = vunpack.c.l.b16 %v2676
    %v2775 = vunpack.c.h.b16 %v2676
    %v2776 = vunpack.c.l.b16 %v2677
    %v2777 = vunpack.c.h.b16 %v2677
    %v2778 = vunpack.c.l.b16 %v2678
    %v2779 = vunpack.c.h.b16 %v2678
    %v2780 = vunpack.c.l.b16 %v2679
    %v2781 = vunpack.c.h.b16 %v2679
    %v2782 = vunpack.c.l.b16 %v2680
    %v2783 = vunpack.c.h.b16 %v2680
    %v2784 = vunpack.c.l.b16 %v2681
    %v2785 = vunpack.c.h.b16 %v2681
    %v2786 = vunpack.c.l.b16 %v2682
    %v2787 = vunpack.c.h.b16 %v2682
    %v2788 = vunpack.c.l.b16 %v2683
    %v2789 = vunpack.c.h.b16 %v2683
    %v2790 = vunpack.c.l.b16 %v2684
    %v2791 = vunpack.c.h.b16 %v2684
    %v2792 = vunpack.c.l.b16 %v2685
    %v2793 = vunpack.c.h.b16 %v2685
    %v2794 = vunpack.c.l.b16 %v2686
    %v2795 = vunpack.c.h.b16 %v2686
    %v2796 = vunpack.c.l.b16 %v2687
    %v2797 = vunpack.c.h.b16 %v2687
    %v2798 = vunpack.c.l.b16 %v2688
    %v2799 = vunpack.c.h.b16 %v2688
    %v2800 = vunpack.c.l.b16 %v2689
    %v2801 = vunpack.c.h.b16 %v2689
    %v2802 = vunpack.c.l.b16 %v2690
    %v2803 = vunpack.c.h.b16 %v2690
    %v2804 = vunpack.c.l.b16 %v2691
    %v2805 = vunpack.c.h.b16 %v2691
    %v2806 = vunpack.c.l.b16 %v2692
    %v2807 = vunpack.c.h.b16 %v2692
    %v2808 = vunpack.c.l.b16 %v2693
    %v2809 = vunpack.c.h.b16 %v2693
    %v2810 = vunpack.c.l.b16 %v2694
    %v2811 = vunpack.c.h.b16 %v2694
    %v2812 = vunpack.c.l.b16 %v2695
    %v2813 = vunpack.c.h.b16 %v2695
    %v2814 = vunpack.c.l.b16 %v2696
    %v2815 = vunpack.c.h.b16 %v2696
    %v2816 = vunpack.c.l.b16 %v2697
    %v2817 = vunpack.c.h.b16 %v2697
    %v2818 = vpack.c.b16 %v2740, %v2738
    %v2819 = vpack.c.b16 %v2741, %v2739
    %v2820 = vpack.c.b16 %v2744, %v2742
    %v2821 = vpack.c.b16 %v2745, %v2743
    %v2822 = vpack.c.b16 %v2748, %v2746
    %v2823 = vpack.c.b16 %v2749, %v2747
    %v2824 = vpack.c.b16 %v2752, %v2750
    %v2825 = vpack.c.b16 %v2753, %v2751
    %v2826 = vpack.c.b16 %v2756, %v2754
    %v2827 = vpack.c.b16 %v2757, %v2755
    %v2828 = vpack.c.b16 %v2760, %v2758
    %v2829 = vpack.c.b16 %v2761, %v2759
    %v2830 = vpack.c.b16 %v2764, %v2762
    %v2831 = vpack.c.b16 %v2765, %v2763
    %v2832 = vpack.c.b16 %v2768, %v2766
    %v2833 = vpack.c.b16 %v2769, %v2767
    %v2834 = vpack.c.b16 %v2772, %v2770
    %v2835 = vpack.c.b16 %v2773, %v2771
    %v2836 = vpack.c.b16 %v2776, %v2774
    %v2837 = vpack.c.b16 %v2777, %v2775
    %v2838 = vpack.c.b16 %v2780, %v2778
    %v2839 = vpack.c.b16 %v2781, %v2779
    %v2840 = vpack.c.b16 %v2784, %v2782
    %v2841 = vpack.c.b16 %v2785, %v2783
    %v2842 = vpack.c.b16 %v2788, %v2786
    %v2843 = vpack.c.b16 %v2789, %v2787
    %v2844 = vpack.c.b16 %v2792, %v2790
    %v2845 = vpack.c.b16 %v2793, %v2791
    %v2846 = vpack.c.b16 %v2796, %v2794
    %v2847 = vpack.c.b16 %v2797, %v2795
    %v2848 = vpack.c.b16 %v2800, %v2798
    %v2849 = vpack.c.b16 %v2801, %v2799
    %v2850 = vpack.c.b16 %v2804, %v2802
    %v2851 = vpack.c.b16 %v2805, %v2803
    %v2852 = vpack.c.b16 %v2808, %v2806
    %v2853 = vpack.c.b16 %v2809, %v2807
    %v2854 = vpack.c.b16 %v2812, %v2810
    %v2855 = vpack.c.b16 %v2813, %v2811
    %v2856 = vpack.c.b16 %v2816, %v2814
    %v2857 = vpack.c.b16 %v2817, %v2815
    %vm2896 = vcmask 490496
    %v2898 = vsel %vm2896, %v2654, 0
    %v2901 = vsel %vm2896, %v2657, 0
    %vm2903 = vcmask 1045504
    %v2905 = vsel %vm2903, %v2856, 0
    %v2908 = vsel %vm2903, %v2857, 0
    %2910 = vmatprep.subr.bf16.mxu0 %v2833
    %2911 = vmatpush1.bf16.msra.mxu0 %v2832
    %2912 = vmatprep.subr.bf16.mxu0 %v2831
    %2913 = vmatpush1.bf16.msra.mxu0 %v2830
    %2914 = vmatprep.subr.bf16.mxu0 %v2829
    %2915 = vmatpush1.bf16.msra.mxu0 %v2828
    %2916 = vmatprep.subr.bf16.mxu0 %v2827
    %2917 = vmatpush1.bf16.msra.mxu0 %v2826
    %2918 = vmatprep.subr.bf16.mxu0 %v2825
    %2919 = vmatpush1.bf16.msra.mxu0 %v2824
    %2920 = vmatprep.subr.bf16.mxu0 %v2823
    %2921 = vmatpush1.bf16.msra.mxu0 %v2822
    %2922 = vmatprep.subr.bf16.mxu0 %v2821
    %2923 = vmatpush1.bf16.msra.mxu0 %v2820
    %2924 = vmatprep.subr.bf16.mxu0 %v2819
    %2925 = vmatpush1.bf16.msra.mxu0 %v2818
    %2926 = vmatprep.subr.bf16.mxu0 %v2849
    %2927 = vmatpush2.bf16.msra.mxu0 %v2848
    %2928 = vmatprep.subr.bf16.mxu0 %v2847
    %2929 = vmatpush2.bf16.msra.mxu0 %v2846
    %2930 = vmatprep.subr.bf16.mxu0 %v2845
    %2931 = vmatpush2.bf16.msra.mxu0 %v2844
    %2932 = vmatprep.subr.bf16.mxu0 %v2843
    %2933 = vmatpush2.bf16.msra.mxu0 %v2842
    %2934 = vmatprep.subr.bf16.mxu0 %v2841
    %2935 = vmatpush2.bf16.msra.mxu0 %v2840
    %2936 = vmatprep.subr.bf16.mxu0 %v2839
    %2937 = vmatpush2.bf16.msra.mxu0 %v2838
    %2938 = vmatprep.subr.bf16.mxu0 %v2837
    %2939 = vmatpush2.bf16.msra.mxu0 %v2836
    %2940 = vmatprep.subr.bf16.mxu0 %v2835
    %2941 = vmatpush2.bf16.msra.mxu0 %v2834
    %2942 = vmatprep.mubr.bf16.mxu0 %v2653
    %2943 = vmatmul.mubr.bf16.gmra.mxu0 %v2652
    %v2944 = vpop.f32.mrf.mxu0
    %v2945 = vadd.f32 0.0, %v2944
    %v2946 = vpop.f32.mrf.mxu0
    %v2947 = vadd.f32 0.0, %v2946
    %v2948 = vpop.f32.mrf.mxu0
    %v2949 = vadd.f32 0.0, %v2948
    %v2950 = vpop.f32.mrf.mxu0
    %v2951 = vadd.f32 0.0, %v2950
    %2952 = vmatprep.mubr.bf16.mxu0 %v2656
    %2953 = vmatmul.mubr.bf16.gmra.mxu0 %v2655
    %v2954 = vpop.f32.mrf.mxu0
    %v2955 = vadd.f32 0.0, %v2954
    %v2956 = vpop.f32.mrf.mxu0
    %v2957 = vadd.f32 0.0, %v2956
    %v2958 = vpop.f32.mrf.mxu0
    %v2959 = vpop.f32.mrf.mxu0
    %2960 = vdwg.mxu0
    %2961 = vmatprep.subr.bf16.mxu0 0
    %2962 = vmatpush1.bf16.msra.mxu0 0
    %2963 = vmatprep.subr.bf16.mxu0 0
    %2964 = vmatpush1.bf16.msra.mxu0 0
    %2965 = vmatprep.subr.bf16.mxu0 0
    %2966 = vmatpush1.bf16.msra.mxu0 0
    %2967 = vmatprep.subr.bf16.mxu0 0
    %2968 = vmatpush1.bf16.msra.mxu0 0
    %2969 = vmatprep.subr.bf16.mxu0 %v2908
    %2970 = vmatpush1.bf16.msra.mxu0 %v2905
    %2971 = vmatprep.subr.bf16.mxu0 %v2855
    %2972 = vmatpush1.bf16.msra.mxu0 %v2854
    %2973 = vmatprep.subr.bf16.mxu0 %v2853
    %2974 = vmatpush1.bf16.msra.mxu0 %v2852
    %2975 = vmatprep.subr.bf16.mxu0 %v2851
    %2976 = vmatpush1.bf16.msra.mxu0 %v2850
    %2977 = vmatprep.subr.bf16.mxu0 0
    %2978 = vmatpush2.bf16.msra.mxu0 0
    %2979 = vmatprep.subr.bf16.mxu0 0
    %2980 = vmatpush2.bf16.msra.mxu0 0
    %2981 = vmatprep.subr.bf16.mxu0 0
    %2982 = vmatpush2.bf16.msra.mxu0 0
    %2983 = vmatprep.subr.bf16.mxu0 0
    %2984 = vmatpush2.bf16.msra.mxu0 0
    %2985 = vmatprep.subr.bf16.mxu0 0
    %2986 = vmatpush2.bf16.msra.mxu0 0
    %2987 = vmatprep.subr.bf16.mxu0 0
    %2988 = vmatpush2.bf16.msra.mxu0 0
    %2989 = vmatprep.subr.bf16.mxu0 0
    %2990 = vmatpush2.bf16.msra.mxu0 0
    %2991 = vmatprep.subr.bf16.mxu0 0
    %2992 = vmatpush2.bf16.msra.mxu0 0
    %2993 = vmatprep.mubr.bf16.mxu0 0
    %2994 = vmatmul.mubr.bf16.gmra.mxu0 %v2898
    %v2995 = vpop.f32.mrf.mxu0
    %v2996 = vadd.f32 %v2945, %v2995
    %v2997 = vpop.f32.mrf.mxu0
    %v2998 = vadd.f32 %v2947, %v2997
    %v2999 = vpop.f32.mrf.mxu0
    %v3000 = vadd.f32 %v2949, %v2999
    %v3001 = vpop.f32.mrf.mxu0
    %v3002 = vadd.f32 %v2951, %v3001
    %3003 = vmatprep.mubr.bf16.mxu0 0
    %3004 = vmatmul.mubr.bf16.gmra.mxu0 %v2901
    %v3005 = vpop.f32.mrf.mxu0
    %v3006 = vadd.f32 %v2955, %v3005
    %v3007 = vpop.f32.mrf.mxu0
    %v3008 = vadd.f32 %v2957, %v3007
    %v3009 = vpop.f32.mrf.mxu0
    %v3010 = vpop.f32.mrf.mxu0
    %3011 = vdwg.mxu0
    %v3012 = vld [vmem:[%s7] sm:$0xff]
    %v3013 = vld [vmem:[%s7 + $0x8] sm:$0xff]
    %v3014 = vld [vmem:[%s7 + $0x10] sm:$0xf]
    %v3015 = vld [vmem:[%s7 + $0x14] sm:$0xff]
    %v3016 = vld [vmem:[%s7 + $0x1c] sm:$0xff]
    %v3017 = vld [vmem:[%s7 + $0x24] sm:$0xf]
    %v3018 = vld [vmem:[%s7 + $0x28] sm:$0xff]
    %v3019 = vld [vmem:[%s7 + $0x30] sm:$0xff]
    %v3020 = vld [vmem:[%s7 + $0x38] sm:$0xf]
    %3024 = vrot.lane.b32.xlu0 %v2996, 127
    %v3025 = vpop.permute.xlu0 %3024
    %3026 = vrot.lane.b32.xlu0 %v3000, 127
    %v3027 = vpop.permute.xlu0 %3026
    %3028 = vrot.lane.b32.xlu0 %v3006, 127
    %v3029 = vpop.permute.xlu0 %3028
    %3033 = vrot.lane.b32.xlu0 %v2996, 126
    %v3034 = vpop.permute.xlu0 %3033
    %3035 = vrot.lane.b32.xlu0 %v3000, 126
    %v3036 = vpop.permute.xlu0 %3035
    %3037 = vrot.lane.b32.xlu0 %v3006, 126
    %v3038 = vpop.permute.xlu0 %3037
    %3042 = vrot.lane.b32.xlu0 %v2996, 125
    %v3043 = vpop.permute.xlu0 %3042
    %3044 = vrot.lane.b32.xlu0 %v3000, 125
    %v3045 = vpop.permute.xlu0 %3044
    %3046 = vrot.lane.b32.xlu0 %v3006, 125
    %v3047 = vpop.permute.xlu0 %3046
    %3051 = vrot.lane.b32.xlu0 %v2996, 124
    %v3052 = vpop.permute.xlu0 %3051
    %3053 = vrot.lane.b32.xlu0 %v3000, 124
    %v3054 = vpop.permute.xlu0 %3053
    %3055 = vrot.lane.b32.xlu0 %v3006, 124
    %v3056 = vpop.permute.xlu0 %3055
    %3060 = vrot.lane.b32.xlu0 %v2996, 116
    %v3061 = vpop.permute.xlu0 %3060
    %3062 = vrot.lane.b32.xlu0 %v3000, 116
    %v3063 = vpop.permute.xlu0 %3062
    %3064 = vrot.lane.b32.xlu0 %v3006, 116
    %v3065 = vpop.permute.xlu0 %3064
    %3069 = vrot.lane.b32.xlu0 %v2996, 115
    %v3070 = vpop.permute.xlu0 %3069
    %3071 = vrot.lane.b32.xlu0 %v3000, 115
    %v3072 = vpop.permute.xlu0 %3071
    %3073 = vrot.lane.b32.xlu0 %v3006, 115
    %v3074 = vpop.permute.xlu0 %3073
    %3078 = vrot.lane.b32.xlu0 %v2996, 114
    %v3079 = vpop.permute.xlu0 %3078
    %3080 = vrot.lane.b32.xlu0 %v3000, 114
    %v3081 = vpop.permute.xlu0 %3080
    %3082 = vrot.lane.b32.xlu0 %v3006, 114
    %v3083 = vpop.permute.xlu0 %3082
    %3087 = vrot.lane.b32.xlu0 %v2996, 113
    %v3088 = vpop.permute.xlu0 %3087
    %3089 = vrot.lane.b32.xlu0 %v3000, 113
    %v3090 = vpop.permute.xlu0 %3089
    %3091 = vrot.lane.b32.xlu0 %v3006, 113
    %v3092 = vpop.permute.xlu0 %3091
    %3096 = vrot.lane.b32.xlu0 %v2996, 112
    %v3097 = vpop.permute.xlu0 %3096
    %3098 = vrot.lane.b32.xlu0 %v3000, 112
    %v3099 = vpop.permute.xlu0 %3098
    %3100 = vrot.lane.b32.xlu0 %v3006, 112
    %v3101 = vpop.permute.xlu0 %3100
    %3105 = vrot.lane.b32.xlu0 %v2996, 104
    %v3106 = vpop.permute.xlu0 %3105
    %3107 = vrot.lane.b32.xlu0 %v3000, 104
    %v3108 = vpop.permute.xlu0 %3107
    %3109 = vrot.lane.b32.xlu0 %v3006, 104
    %v3110 = vpop.permute.xlu0 %3109
    %3114 = vrot.lane.b32.xlu0 %v2996, 103
    %v3115 = vpop.permute.xlu0 %3114
    %3116 = vrot.lane.b32.xlu0 %v3000, 103
    %v3117 = vpop.permute.xlu0 %3116
    %3118 = vrot.lane.b32.xlu0 %v3006, 103
    %v3119 = vpop.permute.xlu0 %3118
    %3123 = vrot.lane.b32.xlu0 %v2996, 102
    %v3124 = vpop.permute.xlu0 %3123
    %3125 = vrot.lane.b32.xlu0 %v3000, 102
    %v3126 = vpop.permute.xlu0 %3125
    %3127 = vrot.lane.b32.xlu0 %v3006, 102
    %v3128 = vpop.permute.xlu0 %3127
    %3132 = vrot.lane.b32.xlu0 %v2996, 101
    %v3133 = vpop.permute.xlu0 %3132
    %3134 = vrot.lane.b32.xlu0 %v3000, 101
    %v3135 = vpop.permute.xlu0 %3134
    %3136 = vrot.lane.b32.xlu0 %v3006, 101
    %v3137 = vpop.permute.xlu0 %3136
    %3141 = vrot.lane.b32.xlu0 %v2996, 100
    %v3142 = vpop.permute.xlu0 %3141
    %3143 = vrot.lane.b32.xlu0 %v3000, 100
    %v3144 = vpop.permute.xlu0 %3143
    %3145 = vrot.lane.b32.xlu0 %v3006, 100
    %v3146 = vpop.permute.xlu0 %3145
    %3150 = vrot.lane.b32.xlu0 %v2996, 92
    %v3151 = vpop.permute.xlu0 %3150
    %3152 = vrot.lane.b32.xlu0 %v3000, 92
    %v3153 = vpop.permute.xlu0 %3152
    %3154 = vrot.lane.b32.xlu0 %v3006, 92
    %v3155 = vpop.permute.xlu0 %3154
    %3162 = vrot.lane.b32.xlu0 %v2998, 127
    %v3163 = vpop.permute.xlu0 %3162
    %3164 = vrot.lane.b32.xlu0 %v3002, 127
    %v3165 = vpop.permute.xlu0 %3164
    %3166 = vrot.lane.b32.xlu0 %v3008, 127
    %v3167 = vpop.permute.xlu0 %3166
    %v3168 = vsel %vm79, %v3025, %v3163
    %v3169 = vsel %vm79, %v3027, %v3165
    %v3170 = vsel %vm79, %v3029, %v3167
    %3171 = vrot.lane.b32.xlu0 %v2998, 126
    %v3172 = vpop.permute.xlu0 %3171
    %3173 = vrot.lane.b32.xlu0 %v3002, 126
    %v3174 = vpop.permute.xlu0 %3173
    %3175 = vrot.lane.b32.xlu0 %v3008, 126
    %v3176 = vpop.permute.xlu0 %3175
    %v3177 = vsel %vm113, %v3034, %v3172
    %v3178 = vsel %vm113, %v3036, %v3174
    %v3179 = vsel %vm113, %v3038, %v3176
    %3180 = vrot.lane.b32.xlu0 %v2998, 125
    %v3181 = vpop.permute.xlu0 %3180
    %3182 = vrot.lane.b32.xlu0 %v3002, 125
    %v3183 = vpop.permute.xlu0 %3182
    %3184 = vrot.lane.b32.xlu0 %v3008, 125
    %v3185 = vpop.permute.xlu0 %3184
    %v3186 = vsel %vm1329, %v3043, %v3181
    %v3187 = vsel %vm1329, %v3045, %v3183
    %v3188 = vsel %vm1329, %v3047, %v3185
    %3189 = vrot.lane.b32.xlu0 %v2996, 117
    %v3190 = vpop.permute.xlu0 %3189
    %3191 = vrot.lane.b32.xlu0 %v2998, 117
    %v3192 = vpop.permute.xlu0 %3191
    %3193 = vrot.lane.b32.xlu0 %v3000, 117
    %v3194 = vpop.permute.xlu0 %3193
    %3195 = vrot.lane.b32.xlu0 %v3002, 117
    %v3196 = vpop.permute.xlu0 %3195
    %3197 = vrot.lane.b32.xlu0 %v3006, 117
    %v3198 = vpop.permute.xlu0 %3197
    %3199 = vrot.lane.b32.xlu0 %v3008, 117
    %v3200 = vpop.permute.xlu0 %3199
    %vm3201 = vcmask 957440
    %v3202 = vsel %vm3201, %v3190, %v3192
    %v3203 = vsel %vm3201, %v3194, %v3196
    %v3204 = vsel %vm3201, %v3198, %v3200
    %3205 = vrot.lane.b32.xlu0 %v2998, 116
    %v3206 = vpop.permute.xlu0 %3205
    %3207 = vrot.lane.b32.xlu0 %v3002, 116
    %v3208 = vpop.permute.xlu0 %3207
    %3209 = vrot.lane.b32.xlu0 %v3008, 116
    %v3210 = vpop.permute.xlu0 %3209
    %vm3211 = vcmask 949248
    %v3212 = vsel %vm3211, %v3061, %v3206
    %v3213 = vsel %vm3211, %v3063, %v3208
    %v3214 = vsel %vm3211, %v3065, %v3210
    %3215 = vrot.lane.b32.xlu0 %v2998, 115
    %v3216 = vpop.permute.xlu0 %3215
    %3217 = vrot.lane.b32.xlu0 %v3002, 115
    %v3218 = vpop.permute.xlu0 %3217
    %3219 = vrot.lane.b32.xlu0 %v3008, 115
    %v3220 = vpop.permute.xlu0 %3219
    %vm3221 = vcmask 941056
    %v3222 = vsel %vm3221, %v3070, %v3216
    %v3223 = vsel %vm3221, %v3072, %v3218
    %v3224 = vsel %vm3221, %v3074, %v3220
    %3225 = vrot.lane.b32.xlu0 %v2998, 114
    %v3226 = vpop.permute.xlu0 %3225
    %3227 = vrot.lane.b32.xlu0 %v3002, 114
    %v3228 = vpop.permute.xlu0 %3227
    %3229 = vrot.lane.b32.xlu0 %v3008, 114
    %v3230 = vpop.permute.xlu0 %3229
    %vm3231 = vcmask 932864
    %v3232 = vsel %vm3231, %v3079, %v3226
    %v3233 = vsel %vm3231, %v3081, %v3228
    %v3234 = vsel %vm3231, %v3083, %v3230
    %3235 = vrot.lane.b32.xlu0 %v2998, 113
    %v3236 = vpop.permute.xlu0 %3235
    %3237 = vrot.lane.b32.xlu0 %v3002, 113
    %v3238 = vpop.permute.xlu0 %3237
    %3239 = vrot.lane.b32.xlu0 %v3008, 113
    %v3240 = vpop.permute.xlu0 %3239
    %vm3241 = vcmask 924672
    %v3242 = vsel %vm3241, %v3088, %v3236
    %v3243 = vsel %vm3241, %v3090, %v3238
    %v3244 = vsel %vm3241, %v3092, %v3240
    %3245 = vrot.lane.b32.xlu0 %v2996, 91
    %v3246 = vpop.permute.xlu0 %3245
    %3247 = vrot.lane.b32.xlu0 %v2998, 91
    %v3248 = vpop.permute.xlu0 %3247
    %3249 = vrot.lane.b32.xlu0 %v3000, 91
    %v3250 = vpop.permute.xlu0 %3249
    %3251 = vrot.lane.b32.xlu0 %v3002, 91
    %v3252 = vpop.permute.xlu0 %3251
    %3253 = vrot.lane.b32.xlu0 %v3006, 91
    %v3254 = vpop.permute.xlu0 %3253
    %3255 = vrot.lane.b32.xlu0 %v3008, 91
    %v3256 = vpop.permute.xlu0 %3255
    %3257 = vrot.lane.b32.xlu0 %v3168, 91
    %v3258 = vpop.permute.xlu0 %3257
    %3259 = vrot.lane.b32.xlu0 %v3163, 91
    %v3260 = vpop.permute.xlu0 %3259
    %3261 = vrot.lane.b32.xlu0 %v3169, 91
    %v3262 = vpop.permute.xlu0 %3261
    %3263 = vrot.lane.b32.xlu0 %v3165, 91
    %v3264 = vpop.permute.xlu0 %3263
    %3265 = vrot.lane.b32.xlu0 %v3170, 91
    %v3266 = vpop.permute.xlu0 %3265
    %3267 = vrot.lane.b32.xlu0 %v3167, 91
    %v3268 = vpop.permute.xlu0 %3267
    %3269 = vrot.lane.b32.xlu0 %v3177, 91
    %v3270 = vpop.permute.xlu0 %3269
    %3271 = vrot.lane.b32.xlu0 %v3172, 91
    %v3272 = vpop.permute.xlu0 %3271
    %3273 = vrot.lane.b32.xlu0 %v3178, 91
    %v3274 = vpop.permute.xlu0 %3273
    %3275 = vrot.lane.b32.xlu0 %v3174, 91
    %v3276 = vpop.permute.xlu0 %3275
    %3277 = vrot.lane.b32.xlu0 %v3179, 91
    %v3278 = vpop.permute.xlu0 %3277
    %3279 = vrot.lane.b32.xlu0 %v3176, 91
    %v3280 = vpop.permute.xlu0 %3279
    %3281 = vrot.lane.b32.xlu0 %v3186, 91
    %v3282 = vpop.permute.xlu0 %3281
    %3283 = vrot.lane.b32.xlu0 %v3181, 91
    %v3284 = vpop.permute.xlu0 %3283
    %3285 = vrot.lane.b32.xlu0 %v3187, 91
    %v3286 = vpop.permute.xlu0 %3285
    %3287 = vrot.lane.b32.xlu0 %v3183, 91
    %v3288 = vpop.permute.xlu0 %3287
    %3289 = vrot.lane.b32.xlu0 %v3188, 91
    %v3290 = vpop.permute.xlu0 %3289
    %3291 = vrot.lane.b32.xlu0 %v3185, 91
    %v3292 = vpop.permute.xlu0 %3291
    %3293 = vrot.lane.b32.xlu0 %v3202, 91
    %v3294 = vpop.permute.xlu0 %3293
    %3295 = vrot.lane.b32.xlu0 %v3192, 91
    %v3296 = vpop.permute.xlu0 %3295
    %3297 = vrot.lane.b32.xlu0 %v3203, 91
    %v3298 = vpop.permute.xlu0 %3297
    %3299 = vrot.lane.b32.xlu0 %v3196, 91
    %v3300 = vpop.permute.xlu0 %3299
    %3301 = vrot.lane.b32.xlu0 %v3204, 91
    %v3302 = vpop.permute.xlu0 %3301
    %3303 = vrot.lane.b32.xlu0 %v3200, 91
    %v3304 = vpop.permute.xlu0 %3303
    %3305 = vrot.lane.b32.xlu0 %v3212, 91
    %v3306 = vpop.permute.xlu0 %3305
    %3307 = vrot.lane.b32.xlu0 %v3206, 91
    %v3308 = vpop.permute.xlu0 %3307
    %3309 = vrot.lane.b32.xlu0 %v3213, 91
    %v3310 = vpop.permute.xlu0 %3309
    %3311 = vrot.lane.b32.xlu0 %v3208, 91
    %v3312 = vpop.permute.xlu0 %3311
    %3313 = vrot.lane.b32.xlu0 %v3214, 91
    %v3314 = vpop.permute.xlu0 %3313
    %3315 = vrot.lane.b32.xlu0 %v3210, 91
    %v3316 = vpop.permute.xlu0 %3315
    %3317 = vrot.lane.b32.xlu0 %v3222, 91
    %v3318 = vpop.permute.xlu0 %3317
    %3319 = vrot.lane.b32.xlu0 %v3216, 91
    %v3320 = vpop.permute.xlu0 %3319
    %3321 = vrot.lane.b32.xlu0 %v3223, 91
    %v3322 = vpop.permute.xlu0 %3321
    %3323 = vrot.lane.b32.xlu0 %v3218, 91
    %v3324 = vpop.permute.xlu0 %3323
    %3325 = vrot.lane.b32.xlu0 %v3224, 91
    %v3326 = vpop.permute.xlu0 %3325
    %3327 = vrot.lane.b32.xlu0 %v3220, 91
    %v3328 = vpop.permute.xlu0 %3327
    %3329 = vrot.lane.b32.xlu0 %v3232, 91
    %v3330 = vpop.permute.xlu0 %3329
    %3331 = vrot.lane.b32.xlu0 %v3226, 91
    %v3332 = vpop.permute.xlu0 %3331
    %3333 = vrot.lane.b32.xlu0 %v3233, 91
    %v3334 = vpop.permute.xlu0 %3333
    %3335 = vrot.lane.b32.xlu0 %v3228, 91
    %v3336 = vpop.permute.xlu0 %3335
    %3337 = vrot.lane.b32.xlu0 %v3234, 91
    %v3338 = vpop.permute.xlu0 %3337
    %3339 = vrot.lane.b32.xlu0 %v3230, 91
    %v3340 = vpop.permute.xlu0 %3339
    %3341 = vrot.lane.b32.xlu0 %v3242, 91
    %v3342 = vpop.permute.xlu0 %3341
    %3343 = vrot.lane.b32.xlu0 %v3236, 91
    %v3344 = vpop.permute.xlu0 %3343
    %3345 = vrot.lane.b32.xlu0 %v3243, 91
    %v3346 = vpop.permute.xlu0 %3345
    %3347 = vrot.lane.b32.xlu0 %v3238, 91
    %v3348 = vpop.permute.xlu0 %3347
    %3349 = vrot.lane.b32.xlu0 %v3244, 91
    %v3350 = vpop.permute.xlu0 %3349
    %3351 = vrot.lane.b32.xlu0 %v3240, 91
    %v3352 = vpop.permute.xlu0 %3351
    %v3353 = vsel %vm283, %v3246, %v3248
    %v3354 = vsel %vm283, %v3250, %v3252
    %v3355 = vsel %vm283, %v3254, %v3256
    %v3356 = vsel %vm283, %v3258, %v3260
    %v3357 = vsel %vm283, %v3262, %v3264
    %v3358 = vsel %vm283, %v3266, %v3268
    %v3359 = vsel %vm283, %v3270, %v3272
    %v3360 = vsel %vm283, %v3274, %v3276
    %v3361 = vsel %vm283, %v3278, %v3280
    %v3362 = vsel %vm283, %v3282, %v3284
    %v3363 = vsel %vm283, %v3286, %v3288
    %v3364 = vsel %vm283, %v3290, %v3292
    %v3365 = vsel %vm283, %v3294, %v3296
    %v3366 = vsel %vm283, %v3298, %v3300
    %v3367 = vsel %vm283, %v3302, %v3304
    %v3368 = vsel %vm283, %v3306, %v3308
    %v3369 = vsel %vm283, %v3310, %v3312
    %v3370 = vsel %vm283, %v3314, %v3316
    %v3371 = vsel %vm283, %v3318, %v3320
    %v3372 = vsel %vm283, %v3322, %v3324
    %v3373 = vsel %vm283, %v3326, %v3328
    %v3374 = vsel %vm283, %v3330, %v3332
    %v3375 = vsel %vm283, %v3334, %v3336
    %v3376 = vsel %vm283, %v3338, %v3340
    %v3377 = vsel %vm283, %v3342, %v3344
    %v3378 = vsel %vm283, %v3346, %v3348
    %v3379 = vsel %vm283, %v3350, %v3352
    %v3407 = vpack.c.bf16 %v3000, %v2996
    %v3408 = vpack.c.bf16 %v3025, %v3006
    %v3409 = vpack.c.bf16 %v3029, %v3027
    %v3410 = vpack.c.bf16 %v3036, %v3034
    %v3411 = vpack.c.bf16 %v3043, %v3038
    %v3412 = vpack.c.bf16 %v3047, %v3045
    %v3413 = vpack.c.bf16 %v3054, %v3052
    %v3414 = vpack.c.bf16 %v3061, %v3056
    %v3415 = vpack.c.bf16 %v3065, %v3063
    %v3416 = vpack.c.bf16 %v3072, %v3070
    %v3417 = vpack.c.bf16 %v3079, %v3074
    %v3418 = vpack.c.bf16 %v3083, %v3081
    %v3419 = vpack.c.bf16 %v3090, %v3088
    %v3420 = vpack.c.bf16 %v3097, %v3092
    %v3421 = vpack.c.bf16 %v3101, %v3099
    %v3422 = vpack.c.bf16 %v3108, %v3106
    %v3423 = vpack.c.bf16 %v3115, %v3110
    %v3424 = vpack.c.bf16 %v3119, %v3117
    %v3425 = vpack.c.bf16 %v3126, %v3124
    %v3426 = vpack.c.bf16 %v3133, %v3128
    %v3427 = vpack.c.bf16 %v3137, %v3135
    %v3428 = vpack.c.bf16 %v3144, %v3142
    %v3429 = vpack.c.bf16 %v3151, %v3146
    %v3430 = vpack.c.bf16 %v3155, %v3153
    %v3431 = vpack.c.bf16 %v3354, %v3353
    %v3432 = vpack.c.bf16 %v3356, %v3355
    %v3433 = vpack.c.bf16 %v3358, %v3357
    %v3434 = vpack.c.bf16 %v3360, %v3359
    %v3435 = vpack.c.bf16 %v3362, %v3361
    %v3436 = vpack.c.bf16 %v3364, %v3363
    %v3437 = vpack.c.bf16 %v3366, %v3365
    %v3438 = vpack.c.bf16 %v3368, %v3367
    %v3439 = vpack.c.bf16 %v3370, %v3369
    %v3440 = vpack.c.bf16 %v3372, %v3371
    %v3441 = vpack.c.bf16 %v3374, %v3373
    %v3442 = vpack.c.bf16 %v3376, %v3375
    %v3443 = vpack.c.bf16 %v3378, %v3377
    %v3444 = vpack.c.bf16 %v3379, %v3379
    %v3445 = vld [vmem:[%s8] sm:$0xff]
    %v3446 = vld [vmem:[%s8 + $0x8] sm:$0xff]
    %v3447 = vld [vmem:[%s8 + $0x10] sm:$0xff]
    %3449 = vset.pattern.permute.xlu0 0
    %3450 = vperm.xlu0 %3449, %v3445
    %v3451 = vpop.permute.xlu0 %3450
    %3454 = vset.pattern.permute.xlu0 0
    %3455 = vperm.xlu0 %3454, %v3446
    %v3456 = vpop.permute.xlu0 %3455
    %3459 = vset.pattern.permute.xlu0 0
    %3460 = vperm.xlu0 %3459, %v3447
    %v3461 = vpop.permute.xlu0 %3460
    %v3472 = vunpack.c.l.b16 %v3012
    %v3473 = vunpack.c.h.b16 %v3012
    %v3474 = vunpack.c.l.b16 %v3013
    %v3475 = vunpack.c.h.b16 %v3013
    %v3476 = vunpack.c.l.b16 %v3014
    %v3477 = vunpack.c.l.b16 %v3015
    %v3478 = vunpack.c.h.b16 %v3015
    %v3479 = vunpack.c.l.b16 %v3016
    %v3480 = vunpack.c.h.b16 %v3016
    %v3481 = vunpack.c.l.b16 %v3017
    %v3482 = vunpack.c.l.b16 %v3018
    %v3483 = vunpack.c.h.b16 %v3018
    %v3484 = vunpack.c.l.b16 %v3019
    %v3485 = vunpack.c.h.b16 %v3019
    %v3486 = vunpack.c.l.b16 %v3020
    %v3487 = vpack.c.b16 %v3477, %v3472
    %v3488 = vpack.c.b16 %v3478, %v3473
    %v3489 = vpack.c.b16 %v3479, %v3474
    %v3490 = vpack.c.b16 %v3480, %v3475
    %v3491 = vpack.c.b16 %v3481, %v3476
    %v3492 = vpack.c.b16 %v3482, %v3482
    %v3493 = vpack.c.b16 %v3483, %v3483
    %v3494 = vpack.c.b16 %v3484, %v3484
    %v3495 = vpack.c.b16 %v3485, %v3485
    %v3496 = vpack.c.b16 %v3486, %v3486
    %v3506 = vsel %vm408, %v3491, 0
    %v3509 = vsel %vm408, %v3496, 0
    %v3512 = vsel %vm415, %v3444, 0
    %3514 = vmatprep.subr.bf16.mxu0 0
    %3515 = vmatpush1.bf16.msra.mxu0 %v3414
    %3516 = vmatprep.subr.bf16.mxu0 0
    %3517 = vmatpush1.bf16.msra.mxu0 %v3413
    %3518 = vmatprep.subr.bf16.mxu0 0
    %3519 = vmatpush1.bf16.msra.mxu0 %v3412
    %3520 = vmatprep.subr.bf16.mxu0 0
    %3521 = vmatpush1.bf16.msra.mxu0 %v3411
    %3522 = vmatprep.subr.bf16.mxu0 0
    %3523 = vmatpush1.bf16.msra.mxu0 %v3410
    %3524 = vmatprep.subr.bf16.mxu0 0
    %3525 = vmatpush1.bf16.msra.mxu0 %v3409
    %3526 = vmatprep.subr.bf16.mxu0 0
    %3527 = vmatpush1.bf16.msra.mxu0 %v3408
    %3528 = vmatprep.subr.bf16.mxu0 0
    %3529 = vmatpush1.bf16.msra.mxu0 %v3407
    %3530 = vmatprep.subr.bf16.mxu0 0
    %3531 = vmatpush2.bf16.msra.mxu0 %v3422
    %3532 = vmatprep.subr.bf16.mxu0 0
    %3533 = vmatpush2.bf16.msra.mxu0 %v3421
    %3534 = vmatprep.subr.bf16.mxu0 0
    %3535 = vmatpush2.bf16.msra.mxu0 %v3420
    %3536 = vmatprep.subr.bf16.mxu0 0
    %3537 = vmatpush2.bf16.msra.mxu0 %v3419
    %3538 = vmatprep.subr.bf16.mxu0 0
    %3539 = vmatpush2.bf16.msra.mxu0 %v3418
    %3540 = vmatprep.subr.bf16.mxu0 0
    %3541 = vmatpush2.bf16.msra.mxu0 %v3417
    %3542 = vmatprep.subr.bf16.mxu0 0
    %3543 = vmatpush2.bf16.msra.mxu0 %v3416
    %3544 = vmatprep.subr.bf16.mxu0 0
    %3545 = vmatpush2.bf16.msra.mxu0 %v3415
    %3546 = vmatprep.mubr.bf16.mxu0 %v3488
    %3547 = vmatmul.mubr.bf16.gmra.mxu0 %v3487
    %v3548 = vpop.f32.mrf.mxu0
    %v3549 = vadd.f32 %v3451, %v3548
    %v3550 = vpop.f32.mrf.mxu0
    %v3551 = vpop.f32.mrf.mxu0
    %v3552 = vadd.f32 %v3456, %v3551
    %v3553 = vpop.f32.mrf.mxu0
    %3554 = vmatprep.mubr.bf16.mxu0 %v3493
    %3555 = vmatmul.mubr.bf16.gmra.mxu0 %v3492
    %v3556 = vpop.f32.mrf.mxu0
    %v3557 = vadd.f32 %v3461, %v3556
    %v3558 = vpop.f32.mrf.mxu0
    %v3559 = vpop.f32.mrf.mxu0
    %v3560 = vpop.f32.mrf.mxu0
    %3561 = vdwg.mxu0
    %3562 = vmatprep.subr.bf16.mxu0 0
    %3563 = vmatpush1.bf16.msra.mxu0 %v3430
    %3564 = vmatprep.subr.bf16.mxu0 0
    %3565 = vmatpush1.bf16.msra.mxu0 %v3429
    %3566 = vmatprep.subr.bf16.mxu0 0
    %3567 = vmatpush1.bf16.msra.mxu0 %v3428
    %3568 = vmatprep.subr.bf16.mxu0 0
    %3569 = vmatpush1.bf16.msra.mxu0 %v3427
    %3570 = vmatprep.subr.bf16.mxu0 0
    %3571 = vmatpush1.bf16.msra.mxu0 %v3426
    %3572 = vmatprep.subr.bf16.mxu0 0
    %3573 = vmatpush1.bf16.msra.mxu0 %v3425
    %3574 = vmatprep.subr.bf16.mxu0 0
    %3575 = vmatpush1.bf16.msra.mxu0 %v3424
    %3576 = vmatprep.subr.bf16.mxu0 0
    %3577 = vmatpush1.bf16.msra.mxu0 %v3423
    %3578 = vmatprep.subr.bf16.mxu0 0
    %3579 = vmatpush2.bf16.msra.mxu0 %v3438
    %3580 = vmatprep.subr.bf16.mxu0 0
    %3581 = vmatpush2.bf16.msra.mxu0 %v3437
    %3582 = vmatprep.subr.bf16.mxu0 0
    %3583 = vmatpush2.bf16.msra.mxu0 %v3436
    %3584 = vmatprep.subr.bf16.mxu0 0
    %3585 = vmatpush2.bf16.msra.mxu0 %v3435
    %3586 = vmatprep.subr.bf16.mxu0 0
    %3587 = vmatpush2.bf16.msra.mxu0 %v3434
    %3588 = vmatprep.subr.bf16.mxu0 0
    %3589 = vmatpush2.bf16.msra.mxu0 %v3433
    %3590 = vmatprep.subr.bf16.mxu0 0
    %3591 = vmatpush2.bf16.msra.mxu0 %v3432
    %3592 = vmatprep.subr.bf16.mxu0 0
    %3593 = vmatpush2.bf16.msra.mxu0 %v3431
    %3594 = vmatprep.mubr.bf16.mxu0 %v3490
    %3595 = vmatmul.mubr.bf16.gmra.mxu0 %v3489
    %v3596 = vpop.f32.mrf.mxu0
    %v3597 = vadd.f32 %v3549, %v3596
    %v3598 = vpop.f32.mrf.mxu0
    %v3599 = vpop.f32.mrf.mxu0
    %v3600 = vadd.f32 %v3552, %v3599
    %v3601 = vpop.f32.mrf.mxu0
    %3602 = vmatprep.mubr.bf16.mxu0 %v3495
    %3603 = vmatmul.mubr.bf16.gmra.mxu0 %v3494
    %v3604 = vpop.f32.mrf.mxu0
    %v3605 = vadd.f32 %v3557, %v3604
    %v3606 = vpop.f32.mrf.mxu0
    %v3607 = vpop.f32.mrf.mxu0
    %v3608 = vpop.f32.mrf.mxu0
    %3609 = vdwg.mxu0
    %3610 = vmatprep.subr.bf16.mxu0 0
    %3611 = vmatpush1.bf16.msra.mxu0 0
    %3612 = vmatprep.subr.bf16.mxu0 0
    %3613 = vmatpush1.bf16.msra.mxu0 0
    %3614 = vmatprep.subr.bf16.mxu0 0
    %3615 = vmatpush1.bf16.msra.mxu0 %v3512
    %3616 = vmatprep.subr.bf16.mxu0 0
    %3617 = vmatpush1.bf16.msra.mxu0 %v3443
    %3618 = vmatprep.subr.bf16.mxu0 0
    %3619 = vmatpush1.bf16.msra.mxu0 %v3442
    %3620 = vmatprep.subr.bf16.mxu0 0
    %3621 = vmatpush1.bf16.msra.mxu0 %v3441
    %3622 = vmatprep.subr.bf16.mxu0 0
    %3623 = vmatpush1.bf16.msra.mxu0 %v3440
    %3624 = vmatprep.subr.bf16.mxu0 0
    %3625 = vmatpush1.bf16.msra.mxu0 %v3439
    %3626 = vmatprep.subr.bf16.mxu0 0
    %3627 = vmatpush2.bf16.msra.mxu0 0
    %3628 = vmatprep.subr.bf16.mxu0 0
    %3629 = vmatpush2.bf16.msra.mxu0 0
    %3630 = vmatprep.subr.bf16.mxu0 0
    %3631 = vmatpush2.bf16.msra.mxu0 0
    %3632 = vmatprep.subr.bf16.mxu0 0
    %3633 = vmatpush2.bf16.msra.mxu0 0
    %3634 = vmatprep.subr.bf16.mxu0 0
    %3635 = vmatpush2.bf16.msra.mxu0 0
    %3636 = vmatprep.subr.bf16.mxu0 0
    %3637 = vmatpush2.bf16.msra.mxu0 0
    %3638 = vmatprep.subr.bf16.mxu0 0
    %3639 = vmatpush2.bf16.msra.mxu0 0
    %3640 = vmatprep.subr.bf16.mxu0 0
    %3641 = vmatpush2.bf16.msra.mxu0 0
    %3642 = vmatprep.mubr.bf16.mxu0 0
    %3643 = vmatmul.mubr.bf16.gmra.mxu0 %v3506
    %v3644 = vpop.f32.mrf.mxu0
    %v3645 = vadd.f32 %v3597, %v3644
    %v3646 = vpop.f32.mrf.mxu0
    %v3647 = vpop.f32.mrf.mxu0
    %v3648 = vadd.f32 %v3600, %v3647
    %v3649 = vpop.f32.mrf.mxu0
    %3650 = vmatprep.mubr.bf16.mxu0 0
    %3651 = vmatmul.mubr.bf16.gmra.mxu0 %v3509
    %v3652 = vpop.f32.mrf.mxu0
    %v3653 = vadd.f32 %v3605, %v3652
    %v3654 = vpop.f32.mrf.mxu0
    %v3655 = vpop.f32.mrf.mxu0
    %v3656 = vpop.f32.mrf.mxu0
    %3657 = vdwg.mxu0
    %v3658 = vsub.f32 0.0, %v3645
    %v3659 = vsub.f32 0.0, %v3648
    %v3660 = vsub.f32 0.0, %v3653
    %v3661 = vmul.f32 %v3658, 1.442695
    %v3662 = vpow.pop %v3661
    %v3663 = vmul.f32 %v3659, 1.442695
    %v3664 = vpow.pop %v3663
    %v3665 = vmul.f32 %v3660, 1.442695
    %v3666 = vpow.pop %v3665
    %v3667 = vadd.f32 %v3662, 1.0
    %v3668 = vadd.f32 %v3664, 1.0
    %v3669 = vadd.f32 %v3666, 1.0
    %v3670 = vrcp.pop %v3667
    %v3671 = vrcp.pop %v3668
    %v3672 = vrcp.pop %v3669
    %v3673 = vpack.c.bf16 %v3671, %v3670
    %v3674 = vpack.c.bf16 %v3672, %v3672
    %v3675 = vld [vmem:[%s9] sm:$0xf]
    %v3676 = vld [vmem:[%s9 + $0x4] sm:$0xf]
    %v3677 = vld [vmem:[%s9 + $0x8] sm:$0xf]
    %v3678 = vld [vmem:[%s9 + $0xc] sm:$0xf]
    %v3679 = vld [vmem:[%s9 + $0x10] sm:$0xf]
    %v3680 = vld [vmem:[%s9 + $0x14] sm:$0xf]
    %v3681 = vld [vmem:[%s9 + $0x18] sm:$0xf]
    %v3682 = vld [vmem:[%s9 + $0x1c] sm:$0xf]
    %v3683 = vld [vmem:[%s9 + $0x20] sm:$0xf]
    %v3684 = vld [vmem:[%s9 + $0x24] sm:$0xf]
    %v3685 = vld [vmem:[%s9 + $0x28] sm:$0xf]
    %v3686 = vld [vmem:[%s9 + $0x2c] sm:$0x3]
    %s3687 = scalar_lea.vmem %s9, 48
    %v3688 = vld [vmem:[%s3687] sm:$0xf]
    %v3689 = vld [vmem:[%s3687 + $0x4] sm:$0xf]
    %v3690 = vld [vmem:[%s3687 + $0x8] sm:$0xf]
    %v3691 = vld [vmem:[%s3687 + $0xc] sm:$0xf]
    %v3692 = vld [vmem:[%s3687 + $0x10] sm:$0xf]
    %v3693 = vld [vmem:[%s3687 + $0x14] sm:$0xf]
    %v3694 = vld [vmem:[%s3687 + $0x18] sm:$0xf]
    %v3695 = vld [vmem:[%s3687 + $0x1c] sm:$0xf]
    %v3696 = vld [vmem:[%s3687 + $0x20] sm:$0xf]
    %v3697 = vld [vmem:[%s3687 + $0x24] sm:$0xf]
    %v3698 = vld [vmem:[%s3687 + $0x28] sm:$0xf]
    %v3699 = vld [vmem:[%s3687 + $0x2c] sm:$0x3]
    %v3701 = vrot.slane %v3673, 1
    %v3714 = vunpack.c.l.b16 %v3688
    %v3715 = vunpack.c.l.b16 %v3689
    %v3716 = vunpack.c.l.b16 %v3690
    %v3717 = vunpack.c.l.b16 %v3691
    %v3718 = vunpack.c.l.b16 %v3692
    %v3719 = vunpack.c.l.b16 %v3693
    %v3720 = vunpack.c.l.b16 %v3694
    %v3721 = vunpack.c.l.b16 %v3695
    %v3722 = vunpack.c.l.b16 %v3696
    %v3723 = vunpack.c.l.b16 %v3697
    %v3724 = vunpack.c.l.b16 %v3698
    %v3725 = vunpack.c.l.b16 %v3699
    %v3726 = vpack.c.b16 %v3715, %v3714
    %v3727 = vpack.c.b16 %v3717, %v3716
    %v3728 = vpack.c.b16 %v3719, %v3718
    %v3729 = vpack.c.b16 %v3721, %v3720
    %v3730 = vpack.c.b16 %v3723, %v3722
    %v3731 = vpack.c.b16 %v3725, %v3724
    %v3738 = vsel %vm249, %v3701, 0
    %v3741 = vsel %vm2903, %v3731, 0
    %3743 = vmatprep.subr.bf16.mxu0 0
    %3744 = vmatpush1.bf16.msra.mxu0 0
    %3745 = vmatprep.subr.bf16.mxu0 0
    %3746 = vmatpush1.bf16.msra.mxu0 0
    %3747 = vmatprep.subr.bf16.mxu0 0
    %3748 = vmatpush1.bf16.msra.mxu0 %v3741
    %3749 = vmatprep.subr.bf16.mxu0 0
    %3750 = vmatpush1.bf16.msra.mxu0 %v3730
    %3751 = vmatprep.subr.bf16.mxu0 0
    %3752 = vmatpush1.bf16.msra.mxu0 %v3729
    %3753 = vmatprep.subr.bf16.mxu0 0
    %3754 = vmatpush1.bf16.msra.mxu0 %v3728
    %3755 = vmatprep.subr.bf16.mxu0 0
    %3756 = vmatpush1.bf16.msra.mxu0 %v3727
    %3757 = vmatprep.subr.bf16.mxu0 0
    %3758 = vmatpush1.bf16.msra.mxu0 %v3726
    %3759 = vmatprep.subr.bf16.mxu0 0
    %3760 = vmatpush2.bf16.msra.mxu0 0
    %3761 = vmatprep.subr.bf16.mxu0 0
    %3762 = vmatpush2.bf16.msra.mxu0 0
    %3763 = vmatprep.subr.bf16.mxu0 0
    %3764 = vmatpush2.bf16.msra.mxu0 0
    %3765 = vmatprep.subr.bf16.mxu0 0
    %3766 = vmatpush2.bf16.msra.mxu0 0
    %3767 = vmatprep.subr.bf16.mxu0 0
    %3768 = vmatpush2.bf16.msra.mxu0 0
    %3769 = vmatprep.subr.bf16.mxu0 0
    %3770 = vmatpush2.bf16.msra.mxu0 0
    %3771 = vmatprep.subr.bf16.mxu0 0
    %3772 = vmatpush2.bf16.msra.mxu0 0
    %3773 = vmatprep.subr.bf16.mxu0 0
    %3774 = vmatpush2.bf16.msra.mxu0 0
    %3775 = vmatprep.mubr.bf16.mxu0 0
    %3776 = vmatmul.mubr.bf16.gmra.mxu0 %v3738
    %v3777 = vpop.f32.mrf.mxu0
    %v3778 = vadd.f32 0.0, %v3777
    %v3779 = vpop.f32.mrf.mxu0
    %v3780 = vpop.f32.mrf.mxu0
    %v3781 = vpop.f32.mrf.mxu0
    %3782 = vdwg.mxu0
    %v3795 = vunpack.c.l.b16 %v3675
    %v3796 = vunpack.c.l.b16 %v3676
    %v3797 = vunpack.c.l.b16 %v3677
    %v3798 = vunpack.c.l.b16 %v3678
    %v3799 = vunpack.c.l.b16 %v3679
    %v3800 = vunpack.c.l.b16 %v3680
    %v3801 = vunpack.c.l.b16 %v3681
    %v3802 = vunpack.c.l.b16 %v3682
    %v3803 = vunpack.c.l.b16 %v3683
    %v3804 = vunpack.c.l.b16 %v3684
    %v3805 = vunpack.c.l.b16 %v3685
    %v3806 = vunpack.c.l.b16 %v3686
    %v3807 = vpack.c.b16 %v3796, %v3795
    %v3808 = vpack.c.b16 %v3798, %v3797
    %v3809 = vpack.c.b16 %v3800, %v3799
    %v3810 = vpack.c.b16 %v3802, %v3801
    %v3811 = vpack.c.b16 %v3804, %v3803
    %v3812 = vpack.c.b16 %v3806, %v3805
    %v3819 = vsel %vm249, %v3673, 0
    %v3822 = vsel %vm2903, %v3812, 0
    %3824 = vmatprep.subr.bf16.mxu0 0
    %3825 = vmatpush1.bf16.msra.mxu0 0
    %3826 = vmatprep.subr.bf16.mxu0 0
    %3827 = vmatpush1.bf16.msra.mxu0 0
    %3828 = vmatprep.subr.bf16.mxu0 0
    %3829 = vmatpush1.bf16.msra.mxu0 %v3822
    %3830 = vmatprep.subr.bf16.mxu0 0
    %3831 = vmatpush1.bf16.msra.mxu0 %v3811
    %3832 = vmatprep.subr.bf16.mxu0 0
    %3833 = vmatpush1.bf16.msra.mxu0 %v3810
    %3834 = vmatprep.subr.bf16.mxu0 0
    %3835 = vmatpush1.bf16.msra.mxu0 %v3809
    %3836 = vmatprep.subr.bf16.mxu0 0
    %3837 = vmatpush1.bf16.msra.mxu0 %v3808
    %3838 = vmatprep.subr.bf16.mxu0 0
    %3839 = vmatpush1.bf16.msra.mxu0 %v3807
    %3840 = vmatprep.subr.bf16.mxu0 0
    %3841 = vmatpush2.bf16.msra.mxu0 0
    %3842 = vmatprep.subr.bf16.mxu0 0
    %3843 = vmatpush2.bf16.msra.mxu0 0
    %3844 = vmatprep.subr.bf16.mxu0 0
    %3845 = vmatpush2.bf16.msra.mxu0 0
    %3846 = vmatprep.subr.bf16.mxu0 0
    %3847 = vmatpush2.bf16.msra.mxu0 0
    %3848 = vmatprep.subr.bf16.mxu0 0
    %3849 = vmatpush2.bf16.msra.mxu0 0
    %3850 = vmatprep.subr.bf16.mxu0 0
    %3851 = vmatpush2.bf16.msra.mxu0 0
    %3852 = vmatprep.subr.bf16.mxu0 0
    %3853 = vmatpush2.bf16.msra.mxu0 0
    %3854 = vmatprep.subr.bf16.mxu0 0
    %3855 = vmatpush2.bf16.msra.mxu0 0
    %3856 = vmatprep.mubr.bf16.mxu0 0
    %3857 = vmatmul.mubr.bf16.gmra.mxu0 %v3819
    %v3858 = vpop.f32.mrf.mxu0
    %v3859 = vadd.f32 %v3778, %v3858
    %v3860 = vpop.f32.mrf.mxu0
    %v3861 = vpop.f32.mrf.mxu0
    %v3862 = vpop.f32.mrf.mxu0
    %3863 = vdwg.mxu0
    %s3864 = scalar_lea.vmem %s9, 96
    %v3865 = vld [vmem:[%s3864] sm:$0xf]
    %v3866 = vld [vmem:[%s3864 + $0x4] sm:$0xf]
    %v3867 = vld [vmem:[%s3864 + $0x8] sm:$0xf]
    %v3868 = vld [vmem:[%s3864 + $0xc] sm:$0xf]
    %v3869 = vld [vmem:[%s3864 + $0x10] sm:$0xf]
    %v3870 = vld [vmem:[%s3864 + $0x14] sm:$0xf]
    %v3871 = vld [vmem:[%s3864 + $0x18] sm:$0xf]
    %v3872 = vld [vmem:[%s3864 + $0x1c] sm:$0xf]
    %v3873 = vld [vmem:[%s3864 + $0x20] sm:$0xf]
    %v3874 = vld [vmem:[%s3864 + $0x24] sm:$0xf]
    %v3875 = vld [vmem:[%s3864 + $0x28] sm:$0xf]
    %v3876 = vld [vmem:[%s3864 + $0x2c] sm:$0x3]
    %v3877 = vrot.slane %v3673, 2
    %v3890 = vunpack.c.l.b16 %v3865
    %v3891 = vunpack.c.l.b16 %v3866
    %v3892 = vunpack.c.l.b16 %v3867
    %v3893 = vunpack.c.l.b16 %v3868
    %v3894 = vunpack.c.l.b16 %v3869
    %v3895 = vunpack.c.l.b16 %v3870
    %v3896 = vunpack.c.l.b16 %v3871
    %v3897 = vunpack.c.l.b16 %v3872
    %v3898 = vunpack.c.l.b16 %v3873
    %v3899 = vunpack.c.l.b16 %v3874
    %v3900 = vunpack.c.l.b16 %v3875
    %v3901 = vunpack.c.l.b16 %v3876
    %v3902 = vpack.c.b16 %v3891, %v3890
    %v3903 = vpack.c.b16 %v3893, %v3892
    %v3904 = vpack.c.b16 %v3895, %v3894
    %v3905 = vpack.c.b16 %v3897, %v3896
    %v3906 = vpack.c.b16 %v3899, %v3898
    %v3907 = vpack.c.b16 %v3901, %v3900
    %v3914 = vsel %vm249, %v3877, 0
    %v3917 = vsel %vm2903, %v3907, 0
    %3919 = vmatprep.subr.bf16.mxu0 0
    %3920 = vmatpush1.bf16.msra.mxu0 0
    %3921 = vmatprep.subr.bf16.mxu0 0
    %3922 = vmatpush1.bf16.msra.mxu0 0
    %3923 = vmatprep.subr.bf16.mxu0 0
    %3924 = vmatpush1.bf16.msra.mxu0 %v3917
    %3925 = vmatprep.subr.bf16.mxu0 0
    %3926 = vmatpush1.bf16.msra.mxu0 %v3906
    %3927 = vmatprep.subr.bf16.mxu0 0
    %3928 = vmatpush1.bf16.msra.mxu0 %v3905
    %3929 = vmatprep.subr.bf16.mxu0 0
    %3930 = vmatpush1.bf16.msra.mxu0 %v3904
    %3931 = vmatprep.subr.bf16.mxu0 0
    %3932 = vmatpush1.bf16.msra.mxu0 %v3903
    %3933 = vmatprep.subr.bf16.mxu0 0
    %3934 = vmatpush1.bf16.msra.mxu0 %v3902
    %3935 = vmatprep.subr.bf16.mxu0 0
    %3936 = vmatpush2.bf16.msra.mxu0 0
    %3937 = vmatprep.subr.bf16.mxu0 0
    %3938 = vmatpush2.bf16.msra.mxu0 0
    %3939 = vmatprep.subr.bf16.mxu0 0
    %3940 = vmatpush2.bf16.msra.mxu0 0
    %3941 = vmatprep.subr.bf16.mxu0 0
    %3942 = vmatpush2.bf16.msra.mxu0 0
    %3943 = vmatprep.subr.bf16.mxu0 0
    %3944 = vmatpush2.bf16.msra.mxu0 0
    %3945 = vmatprep.subr.bf16.mxu0 0
    %3946 = vmatpush2.bf16.msra.mxu0 0
    %3947 = vmatprep.subr.bf16.mxu0 0
    %3948 = vmatpush2.bf16.msra.mxu0 0
    %3949 = vmatprep.subr.bf16.mxu0 0
    %3950 = vmatpush2.bf16.msra.mxu0 0
    %3951 = vmatprep.mubr.bf16.mxu0 0
    %3952 = vmatmul.mubr.bf16.gmra.mxu0 %v3914
    %v3953 = vpop.f32.mrf.mxu0
    %v3954 = vadd.f32 0.0, %v3953
    %v3955 = vpop.f32.mrf.mxu0
    %v3956 = vpop.f32.mrf.mxu0
    %v3957 = vpop.f32.mrf.mxu0
    %3958 = vdwg.mxu0
    %v3959 = vadd.f32 %v3859, %v3954
    %s3960 = scalar_lea.vmem %s9, 144
    %v3961 = vld [vmem:[%s3960] sm:$0xf]
    %v3962 = vld [vmem:[%s3960 + $0x4] sm:$0xf]
    %v3963 = vld [vmem:[%s3960 + $0x8] sm:$0xf]
    %v3964 = vld [vmem:[%s3960 + $0xc] sm:$0xf]
    %v3965 = vld [vmem:[%s3960 + $0x10] sm:$0xf]
    %v3966 = vld [vmem:[%s3960 + $0x14] sm:$0xf]
    %v3967 = vld [vmem:[%s3960 + $0x18] sm:$0xf]
    %v3968 = vld [vmem:[%s3960 + $0x1c] sm:$0xf]
    %v3969 = vld [vmem:[%s3960 + $0x20] sm:$0xf]
    %v3970 = vld [vmem:[%s3960 + $0x24] sm:$0xf]
    %v3971 = vld [vmem:[%s3960 + $0x28] sm:$0xf]
    %v3972 = vld [vmem:[%s3960 + $0x2c] sm:$0x3]
    %v3973 = vrot.slane %v3673, 3
    %v3986 = vunpack.c.l.b16 %v3961
    %v3987 = vunpack.c.l.b16 %v3962
    %v3988 = vunpack.c.l.b16 %v3963
    %v3989 = vunpack.c.l.b16 %v3964
    %v3990 = vunpack.c.l.b16 %v3965
    %v3991 = vunpack.c.l.b16 %v3966
    %v3992 = vunpack.c.l.b16 %v3967
    %v3993 = vunpack.c.l.b16 %v3968
    %v3994 = vunpack.c.l.b16 %v3969
    %v3995 = vunpack.c.l.b16 %v3970
    %v3996 = vunpack.c.l.b16 %v3971
    %v3997 = vunpack.c.l.b16 %v3972
    %v3998 = vpack.c.b16 %v3987, %v3986
    %v3999 = vpack.c.b16 %v3989, %v3988
    %v4000 = vpack.c.b16 %v3991, %v3990
    %v4001 = vpack.c.b16 %v3993, %v3992
    %v4002 = vpack.c.b16 %v3995, %v3994
    %v4003 = vpack.c.b16 %v3997, %v3996
    %v4010 = vsel %vm249, %v3973, 0
    %v4013 = vsel %vm2903, %v4003, 0
    %4015 = vmatprep.subr.bf16.mxu0 0
    %4016 = vmatpush1.bf16.msra.mxu0 0
    %4017 = vmatprep.subr.bf16.mxu0 0
    %4018 = vmatpush1.bf16.msra.mxu0 0
    %4019 = vmatprep.subr.bf16.mxu0 0
    %4020 = vmatpush1.bf16.msra.mxu0 %v4013
    %4021 = vmatprep.subr.bf16.mxu0 0
    %4022 = vmatpush1.bf16.msra.mxu0 %v4002
    %4023 = vmatprep.subr.bf16.mxu0 0
    %4024 = vmatpush1.bf16.msra.mxu0 %v4001
    %4025 = vmatprep.subr.bf16.mxu0 0
    %4026 = vmatpush1.bf16.msra.mxu0 %v4000
    %4027 = vmatprep.subr.bf16.mxu0 0
    %4028 = vmatpush1.bf16.msra.mxu0 %v3999
    %4029 = vmatprep.subr.bf16.mxu0 0
    %4030 = vmatpush1.bf16.msra.mxu0 %v3998
    %4031 = vmatprep.subr.bf16.mxu0 0
    %4032 = vmatpush2.bf16.msra.mxu0 0
    %4033 = vmatprep.subr.bf16.mxu0 0
    %4034 = vmatpush2.bf16.msra.mxu0 0
    %4035 = vmatprep.subr.bf16.mxu0 0
    %4036 = vmatpush2.bf16.msra.mxu0 0
    %4037 = vmatprep.subr.bf16.mxu0 0
    %4038 = vmatpush2.bf16.msra.mxu0 0
    %4039 = vmatprep.subr.bf16.mxu0 0
    %4040 = vmatpush2.bf16.msra.mxu0 0
    %4041 = vmatprep.subr.bf16.mxu0 0
    %4042 = vmatpush2.bf16.msra.mxu0 0
    %4043 = vmatprep.subr.bf16.mxu0 0
    %4044 = vmatpush2.bf16.msra.mxu0 0
    %4045 = vmatprep.subr.bf16.mxu0 0
    %4046 = vmatpush2.bf16.msra.mxu0 0
    %4047 = vmatprep.mubr.bf16.mxu0 0
    %4048 = vmatmul.mubr.bf16.gmra.mxu0 %v4010
    %v4049 = vpop.f32.mrf.mxu0
    %v4050 = vadd.f32 0.0, %v4049
    %v4051 = vpop.f32.mrf.mxu0
    %v4052 = vpop.f32.mrf.mxu0
    %v4053 = vpop.f32.mrf.mxu0
    %4054 = vdwg.mxu0
    %v4055 = vadd.f32 %v3959, %v4050
    %s4056 = scalar_lea.vmem %s9, 192
    %v4057 = vld [vmem:[%s4056] sm:$0xf]
    %v4058 = vld [vmem:[%s4056 + $0x4] sm:$0xf]
    %v4059 = vld [vmem:[%s4056 + $0x8] sm:$0xf]
    %v4060 = vld [vmem:[%s4056 + $0xc] sm:$0xf]
    %v4061 = vld [vmem:[%s4056 + $0x10] sm:$0xf]
    %v4062 = vld [vmem:[%s4056 + $0x14] sm:$0xf]
    %v4063 = vld [vmem:[%s4056 + $0x18] sm:$0xf]
    %v4064 = vld [vmem:[%s4056 + $0x1c] sm:$0xf]
    %v4065 = vld [vmem:[%s4056 + $0x20] sm:$0xf]
    %v4066 = vld [vmem:[%s4056 + $0x24] sm:$0xf]
    %v4067 = vld [vmem:[%s4056 + $0x28] sm:$0xf]
    %v4068 = vld [vmem:[%s4056 + $0x2c] sm:$0x3]
    %v4069 = vrot.slane %v3673, 4
    %v4082 = vunpack.c.l.b16 %v4057
    %v4083 = vunpack.c.l.b16 %v4058
    %v4084 = vunpack.c.l.b16 %v4059
    %v4085 = vunpack.c.l.b16 %v4060
    %v4086 = vunpack.c.l.b16 %v4061
    %v4087 = vunpack.c.l.b16 %v4062
    %v4088 = vunpack.c.l.b16 %v4063
    %v4089 = vunpack.c.l.b16 %v4064
    %v4090 = vunpack.c.l.b16 %v4065
    %v4091 = vunpack.c.l.b16 %v4066
    %v4092 = vunpack.c.l.b16 %v4067
    %v4093 = vunpack.c.l.b16 %v4068
    %v4094 = vpack.c.b16 %v4083, %v4082
    %v4095 = vpack.c.b16 %v4085, %v4084
    %v4096 = vpack.c.b16 %v4087, %v4086
    %v4097 = vpack.c.b16 %v4089, %v4088
    %v4098 = vpack.c.b16 %v4091, %v4090
    %v4099 = vpack.c.b16 %v4093, %v4092
    %v4106 = vsel %vm249, %v4069, 0
    %v4109 = vsel %vm2903, %v4099, 0
    %4111 = vmatprep.subr.bf16.mxu0 0
    %4112 = vmatpush1.bf16.msra.mxu0 0
    %4113 = vmatprep.subr.bf16.mxu0 0
    %4114 = vmatpush1.bf16.msra.mxu0 0
    %4115 = vmatprep.subr.bf16.mxu0 0
    %4116 = vmatpush1.bf16.msra.mxu0 %v4109
    %4117 = vmatprep.subr.bf16.mxu0 0
    %4118 = vmatpush1.bf16.msra.mxu0 %v4098
    %4119 = vmatprep.subr.bf16.mxu0 0
    %4120 = vmatpush1.bf16.msra.mxu0 %v4097
    %4121 = vmatprep.subr.bf16.mxu0 0
    %4122 = vmatpush1.bf16.msra.mxu0 %v4096
    %4123 = vmatprep.subr.bf16.mxu0 0
    %4124 = vmatpush1.bf16.msra.mxu0 %v4095
    %4125 = vmatprep.subr.bf16.mxu0 0
    %4126 = vmatpush1.bf16.msra.mxu0 %v4094
    %4127 = vmatprep.subr.bf16.mxu0 0
    %4128 = vmatpush2.bf16.msra.mxu0 0
    %4129 = vmatprep.subr.bf16.mxu0 0
    %4130 = vmatpush2.bf16.msra.mxu0 0
    %4131 = vmatprep.subr.bf16.mxu0 0
    %4132 = vmatpush2.bf16.msra.mxu0 0
    %4133 = vmatprep.subr.bf16.mxu0 0
    %4134 = vmatpush2.bf16.msra.mxu0 0
    %4135 = vmatprep.subr.bf16.mxu0 0
    %4136 = vmatpush2.bf16.msra.mxu0 0
    %4137 = vmatprep.subr.bf16.mxu0 0
    %4138 = vmatpush2.bf16.msra.mxu0 0
    %4139 = vmatprep.subr.bf16.mxu0 0
    %4140 = vmatpush2.bf16.msra.mxu0 0
    %4141 = vmatprep.subr.bf16.mxu0 0
    %4142 = vmatpush2.bf16.msra.mxu0 0
    %4143 = vmatprep.mubr.bf16.mxu0 0
    %4144 = vmatmul.mubr.bf16.gmra.mxu0 %v4106
    %v4145 = vpop.f32.mrf.mxu0
    %v4146 = vadd.f32 0.0, %v4145
    %v4147 = vpop.f32.mrf.mxu0
    %v4148 = vpop.f32.mrf.mxu0
    %v4149 = vpop.f32.mrf.mxu0
    %4150 = vdwg.mxu0
    %v4151 = vadd.f32 %v4055, %v4146
    %s4152 = scalar_lea.vmem %s9, 240
    %v4153 = vld [vmem:[%s4152] sm:$0xf]
    %v4154 = vld [vmem:[%s4152 + $0x4] sm:$0xf]
    %v4155 = vld [vmem:[%s4152 + $0x8] sm:$0xf]
    %v4156 = vld [vmem:[%s4152 + $0xc] sm:$0xf]
    %v4157 = vld [vmem:[%s4152 + $0x10] sm:$0xf]
    %v4158 = vld [vmem:[%s4152 + $0x14] sm:$0xf]
    %v4159 = vld [vmem:[%s4152 + $0x18] sm:$0xf]
    %v4160 = vld [vmem:[%s4152 + $0x1c] sm:$0xf]
    %v4161 = vld [vmem:[%s4152 + $0x20] sm:$0xf]
    %v4162 = vld [vmem:[%s4152 + $0x24] sm:$0xf]
    %v4163 = vld [vmem:[%s4152 + $0x28] sm:$0xf]
    %v4164 = vld [vmem:[%s4152 + $0x2c] sm:$0x3]
    %v4165 = vrot.slane %v3673, 5
    %v4178 = vunpack.c.l.b16 %v4153
    %v4179 = vunpack.c.l.b16 %v4154
    %v4180 = vunpack.c.l.b16 %v4155
    %v4181 = vunpack.c.l.b16 %v4156
    %v4182 = vunpack.c.l.b16 %v4157
    %v4183 = vunpack.c.l.b16 %v4158
    %v4184 = vunpack.c.l.b16 %v4159
    %v4185 = vunpack.c.l.b16 %v4160
    %v4186 = vunpack.c.l.b16 %v4161
    %v4187 = vunpack.c.l.b16 %v4162
    %v4188 = vunpack.c.l.b16 %v4163
    %v4189 = vunpack.c.l.b16 %v4164
    %v4190 = vpack.c.b16 %v4179, %v4178
    %v4191 = vpack.c.b16 %v4181, %v4180
    %v4192 = vpack.c.b16 %v4183, %v4182
    %v4193 = vpack.c.b16 %v4185, %v4184
    %v4194 = vpack.c.b16 %v4187, %v4186
    %v4195 = vpack.c.b16 %v4189, %v4188
    %v4202 = vsel %vm249, %v4165, 0
    %v4205 = vsel %vm2903, %v4195, 0
    %4207 = vmatprep.subr.bf16.mxu0 0
    %4208 = vmatpush1.bf16.msra.mxu0 0
    %4209 = vmatprep.subr.bf16.mxu0 0
    %4210 = vmatpush1.bf16.msra.mxu0 0
    %4211 = vmatprep.subr.bf16.mxu0 0
    %4212 = vmatpush1.bf16.msra.mxu0 %v4205
    %4213 = vmatprep.subr.bf16.mxu0 0
    %4214 = vmatpush1.bf16.msra.mxu0 %v4194
    %4215 = vmatprep.subr.bf16.mxu0 0
    %4216 = vmatpush1.bf16.msra.mxu0 %v4193
    %4217 = vmatprep.subr.bf16.mxu0 0
    %4218 = vmatpush1.bf16.msra.mxu0 %v4192
    %4219 = vmatprep.subr.bf16.mxu0 0
    %4220 = vmatpush1.bf16.msra.mxu0 %v4191
    %4221 = vmatprep.subr.bf16.mxu0 0
    %4222 = vmatpush1.bf16.msra.mxu0 %v4190
    %4223 = vmatprep.subr.bf16.mxu0 0
    %4224 = vmatpush2.bf16.msra.mxu0 0
    %4225 = vmatprep.subr.bf16.mxu0 0
    %4226 = vmatpush2.bf16.msra.mxu0 0
    %4227 = vmatprep.subr.bf16.mxu0 0
    %4228 = vmatpush2.bf16.msra.mxu0 0
    %4229 = vmatprep.subr.bf16.mxu0 0
    %4230 = vmatpush2.bf16.msra.mxu0 0
    %4231 = vmatprep.subr.bf16.mxu0 0
    %4232 = vmatpush2.bf16.msra.mxu0 0
    %4233 = vmatprep.subr.bf16.mxu0 0
    %4234 = vmatpush2.bf16.msra.mxu0 0
    %4235 = vmatprep.subr.bf16.mxu0 0
    %4236 = vmatpush2.bf16.msra.mxu0 0
    %4237 = vmatprep.subr.bf16.mxu0 0
    %4238 = vmatpush2.bf16.msra.mxu0 0
    %4239 = vmatprep.mubr.bf16.mxu0 0
    %4240 = vmatmul.mubr.bf16.gmra.mxu0 %v4202
    %v4241 = vpop.f32.mrf.mxu0
    %v4242 = vadd.f32 0.0, %v4241
    %v4243 = vpop.f32.mrf.mxu0
    %v4244 = vpop.f32.mrf.mxu0
    %v4245 = vpop.f32.mrf.mxu0
    %4246 = vdwg.mxu0
    %v4247 = vadd.f32 %v4151, %v4242
    %s4248 = scalar_lea.vmem %s9, 288
    %v4249 = vld [vmem:[%s4248] sm:$0xf]
    %v4250 = vld [vmem:[%s4248 + $0x4] sm:$0xf]
    %v4251 = vld [vmem:[%s4248 + $0x8] sm:$0xf]
    %v4252 = vld [vmem:[%s4248 + $0xc] sm:$0xf]
    %v4253 = vld [vmem:[%s4248 + $0x10] sm:$0xf]
    %v4254 = vld [vmem:[%s4248 + $0x14] sm:$0xf]
    %v4255 = vld [vmem:[%s4248 + $0x18] sm:$0xf]
    %v4256 = vld [vmem:[%s4248 + $0x1c] sm:$0xf]
    %v4257 = vld [vmem:[%s4248 + $0x20] sm:$0xf]
    %v4258 = vld [vmem:[%s4248 + $0x24] sm:$0xf]
    %v4259 = vld [vmem:[%s4248 + $0x28] sm:$0xf]
    %v4260 = vld [vmem:[%s4248 + $0x2c] sm:$0x3]
    %v4261 = vrot.slane %v3673, 6
    %v4274 = vunpack.c.l.b16 %v4249
    %v4275 = vunpack.c.l.b16 %v4250
    %v4276 = vunpack.c.l.b16 %v4251
    %v4277 = vunpack.c.l.b16 %v4252
    %v4278 = vunpack.c.l.b16 %v4253
    %v4279 = vunpack.c.l.b16 %v4254
    %v4280 = vunpack.c.l.b16 %v4255
    %v4281 = vunpack.c.l.b16 %v4256
    %v4282 = vunpack.c.l.b16 %v4257
    %v4283 = vunpack.c.l.b16 %v4258
    %v4284 = vunpack.c.l.b16 %v4259
    %v4285 = vunpack.c.l.b16 %v4260
    %v4286 = vpack.c.b16 %v4275, %v4274
    %v4287 = vpack.c.b16 %v4277, %v4276
    %v4288 = vpack.c.b16 %v4279, %v4278
    %v4289 = vpack.c.b16 %v4281, %v4280
    %v4290 = vpack.c.b16 %v4283, %v4282
    %v4291 = vpack.c.b16 %v4285, %v4284
    %v4298 = vsel %vm249, %v4261, 0
    %v4301 = vsel %vm2903, %v4291, 0
    %4303 = vmatprep.subr.bf16.mxu0 0
    %4304 = vmatpush1.bf16.msra.mxu0 0
    %4305 = vmatprep.subr.bf16.mxu0 0
    %4306 = vmatpush1.bf16.msra.mxu0 0
    %4307 = vmatprep.subr.bf16.mxu0 0
    %4308 = vmatpush1.bf16.msra.mxu0 %v4301
    %4309 = vmatprep.subr.bf16.mxu0 0
    %4310 = vmatpush1.bf16.msra.mxu0 %v4290
    %4311 = vmatprep.subr.bf16.mxu0 0
    %4312 = vmatpush1.bf16.msra.mxu0 %v4289
    %4313 = vmatprep.subr.bf16.mxu0 0
    %4314 = vmatpush1.bf16.msra.mxu0 %v4288
    %4315 = vmatprep.subr.bf16.mxu0 0
    %4316 = vmatpush1.bf16.msra.mxu0 %v4287
    %4317 = vmatprep.subr.bf16.mxu0 0
    %4318 = vmatpush1.bf16.msra.mxu0 %v4286
    %4319 = vmatprep.subr.bf16.mxu0 0
    %4320 = vmatpush2.bf16.msra.mxu0 0
    %4321 = vmatprep.subr.bf16.mxu0 0
    %4322 = vmatpush2.bf16.msra.mxu0 0
    %4323 = vmatprep.subr.bf16.mxu0 0
    %4324 = vmatpush2.bf16.msra.mxu0 0
    %4325 = vmatprep.subr.bf16.mxu0 0
    %4326 = vmatpush2.bf16.msra.mxu0 0
    %4327 = vmatprep.subr.bf16.mxu0 0
    %4328 = vmatpush2.bf16.msra.mxu0 0
    %4329 = vmatprep.subr.bf16.mxu0 0
    %4330 = vmatpush2.bf16.msra.mxu0 0
    %4331 = vmatprep.subr.bf16.mxu0 0
    %4332 = vmatpush2.bf16.msra.mxu0 0
    %4333 = vmatprep.subr.bf16.mxu0 0
    %4334 = vmatpush2.bf16.msra.mxu0 0
    %4335 = vmatprep.mubr.bf16.mxu0 0
    %4336 = vmatmul.mubr.bf16.gmra.mxu0 %v4298
    %v4337 = vpop.f32.mrf.mxu0
    %v4338 = vadd.f32 0.0, %v4337
    %v4339 = vpop.f32.mrf.mxu0
    %v4340 = vpop.f32.mrf.mxu0
    %v4341 = vpop.f32.mrf.mxu0
    %4342 = vdwg.mxu0
    %v4343 = vadd.f32 %v4247, %v4338
    %s4344 = scalar_lea.vmem %s9, 336
    %v4345 = vld [vmem:[%s4344] sm:$0xf]
    %v4346 = vld [vmem:[%s4344 + $0x4] sm:$0xf]
    %v4347 = vld [vmem:[%s4344 + $0x8] sm:$0xf]
    %v4348 = vld [vmem:[%s4344 + $0xc] sm:$0xf]
    %v4349 = vld [vmem:[%s4344 + $0x10] sm:$0xf]
    %v4350 = vld [vmem:[%s4344 + $0x14] sm:$0xf]
    %v4351 = vld [vmem:[%s4344 + $0x18] sm:$0xf]
    %v4352 = vld [vmem:[%s4344 + $0x1c] sm:$0xf]
    %v4353 = vld [vmem:[%s4344 + $0x20] sm:$0xf]
    %v4354 = vld [vmem:[%s4344 + $0x24] sm:$0xf]
    %v4355 = vld [vmem:[%s4344 + $0x28] sm:$0xf]
    %v4356 = vld [vmem:[%s4344 + $0x2c] sm:$0x3]
    %v4357 = vrot.slane %v3673, 7
    %v4370 = vunpack.c.l.b16 %v4345
    %v4371 = vunpack.c.l.b16 %v4346
    %v4372 = vunpack.c.l.b16 %v4347
    %v4373 = vunpack.c.l.b16 %v4348
    %v4374 = vunpack.c.l.b16 %v4349
    %v4375 = vunpack.c.l.b16 %v4350
    %v4376 = vunpack.c.l.b16 %v4351
    %v4377 = vunpack.c.l.b16 %v4352
    %v4378 = vunpack.c.l.b16 %v4353
    %v4379 = vunpack.c.l.b16 %v4354
    %v4380 = vunpack.c.l.b16 %v4355
    %v4381 = vunpack.c.l.b16 %v4356
    %v4382 = vpack.c.b16 %v4371, %v4370
    %v4383 = vpack.c.b16 %v4373, %v4372
    %v4384 = vpack.c.b16 %v4375, %v4374
    %v4385 = vpack.c.b16 %v4377, %v4376
    %v4386 = vpack.c.b16 %v4379, %v4378
    %v4387 = vpack.c.b16 %v4381, %v4380
    %v4394 = vsel %vm249, %v4357, 0
    %v4397 = vsel %vm2903, %v4387, 0
    %4399 = vmatprep.subr.bf16.mxu0 0
    %4400 = vmatpush1.bf16.msra.mxu0 0
    %4401 = vmatprep.subr.bf16.mxu0 0
    %4402 = vmatpush1.bf16.msra.mxu0 0
    %4403 = vmatprep.subr.bf16.mxu0 0
    %4404 = vmatpush1.bf16.msra.mxu0 %v4397
    %4405 = vmatprep.subr.bf16.mxu0 0
    %4406 = vmatpush1.bf16.msra.mxu0 %v4386
    %4407 = vmatprep.subr.bf16.mxu0 0
    %4408 = vmatpush1.bf16.msra.mxu0 %v4385
    %4409 = vmatprep.subr.bf16.mxu0 0
    %4410 = vmatpush1.bf16.msra.mxu0 %v4384
    %4411 = vmatprep.subr.bf16.mxu0 0
    %4412 = vmatpush1.bf16.msra.mxu0 %v4383
    %4413 = vmatprep.subr.bf16.mxu0 0
    %4414 = vmatpush1.bf16.msra.mxu0 %v4382
    %4415 = vmatprep.subr.bf16.mxu0 0
    %4416 = vmatpush2.bf16.msra.mxu0 0
    %4417 = vmatprep.subr.bf16.mxu0 0
    %4418 = vmatpush2.bf16.msra.mxu0 0
    %4419 = vmatprep.subr.bf16.mxu0 0
    %4420 = vmatpush2.bf16.msra.mxu0 0
    %4421 = vmatprep.subr.bf16.mxu0 0
    %4422 = vmatpush2.bf16.msra.mxu0 0
    %4423 = vmatprep.subr.bf16.mxu0 0
    %4424 = vmatpush2.bf16.msra.mxu0 0
    %4425 = vmatprep.subr.bf16.mxu0 0
    %4426 = vmatpush2.bf16.msra.mxu0 0
    %4427 = vmatprep.subr.bf16.mxu0 0
    %4428 = vmatpush2.bf16.msra.mxu0 0
    %4429 = vmatprep.subr.bf16.mxu0 0
    %4430 = vmatpush2.bf16.msra.mxu0 0
    %4431 = vmatprep.mubr.bf16.mxu0 0
    %4432 = vmatmul.mubr.bf16.gmra.mxu0 %v4394
    %v4433 = vpop.f32.mrf.mxu0
    %v4434 = vadd.f32 0.0, %v4433
    %v4435 = vpop.f32.mrf.mxu0
    %v4436 = vpop.f32.mrf.mxu0
    %v4437 = vpop.f32.mrf.mxu0
    %4438 = vdwg.mxu0
    %v4439 = vadd.f32 %v4343, %v4434
    %s4440 = scalar_lea.vmem %s9, 384
    %v4441 = vld [vmem:[%s4440] sm:$0xf]
    %v4442 = vld [vmem:[%s4440 + $0x4] sm:$0xf]
    %v4443 = vld [vmem:[%s4440 + $0x8] sm:$0xf]
    %v4444 = vld [vmem:[%s4440 + $0xc] sm:$0xf]
    %v4445 = vld [vmem:[%s4440 + $0x10] sm:$0xf]
    %v4446 = vld [vmem:[%s4440 + $0x14] sm:$0xf]
    %v4447 = vld [vmem:[%s4440 + $0x18] sm:$0xf]
    %v4448 = vld [vmem:[%s4440 + $0x1c] sm:$0xf]
    %v4449 = vld [vmem:[%s4440 + $0x20] sm:$0xf]
    %v4450 = vld [vmem:[%s4440 + $0x24] sm:$0xf]
    %v4451 = vld [vmem:[%s4440 + $0x28] sm:$0xf]
    %v4452 = vld [vmem:[%s4440 + $0x2c] sm:$0x3]
    %v4465 = vunpack.c.l.b16 %v4441
    %v4466 = vunpack.c.l.b16 %v4442
    %v4467 = vunpack.c.l.b16 %v4443
    %v4468 = vunpack.c.l.b16 %v4444
    %v4469 = vunpack.c.l.b16 %v4445
    %v4470 = vunpack.c.l.b16 %v4446
    %v4471 = vunpack.c.l.b16 %v4447
    %v4472 = vunpack.c.l.b16 %v4448
    %v4473 = vunpack.c.l.b16 %v4449
    %v4474 = vunpack.c.l.b16 %v4450
    %v4475 = vunpack.c.l.b16 %v4451
    %v4476 = vunpack.c.l.b16 %v4452
    %v4477 = vpack.c.b16 %v4466, %v4465
    %v4478 = vpack.c.b16 %v4468, %v4467
    %v4479 = vpack.c.b16 %v4470, %v4469
    %v4480 = vpack.c.b16 %v4472, %v4471
    %v4481 = vpack.c.b16 %v4474, %v4473
    %v4482 = vpack.c.b16 %v4476, %v4475
    %v4489 = vsel %vm249, %v3674, 0
    %v4492 = vsel %vm2903, %v4482, 0
    %4494 = vmatprep.subr.bf16.mxu0 0
    %4495 = vmatpush1.bf16.msra.mxu0 0
    %4496 = vmatprep.subr.bf16.mxu0 0
    %4497 = vmatpush1.bf16.msra.mxu0 0
    %4498 = vmatprep.subr.bf16.mxu0 0
    %4499 = vmatpush1.bf16.msra.mxu0 %v4492
    %4500 = vmatprep.subr.bf16.mxu0 0
    %4501 = vmatpush1.bf16.msra.mxu0 %v4481
    %4502 = vmatprep.subr.bf16.mxu0 0
    %4503 = vmatpush1.bf16.msra.mxu0 %v4480
    %4504 = vmatprep.subr.bf16.mxu0 0
    %4505 = vmatpush1.bf16.msra.mxu0 %v4479
    %4506 = vmatprep.subr.bf16.mxu0 0
    %4507 = vmatpush1.bf16.msra.mxu0 %v4478
    %4508 = vmatprep.subr.bf16.mxu0 0
    %4509 = vmatpush1.bf16.msra.mxu0 %v4477
    %4510 = vmatprep.subr.bf16.mxu0 0
    %4511 = vmatpush2.bf16.msra.mxu0 0
    %4512 = vmatprep.subr.bf16.mxu0 0
    %4513 = vmatpush2.bf16.msra.mxu0 0
    %4514 = vmatprep.subr.bf16.mxu0 0
    %4515 = vmatpush2.bf16.msra.mxu0 0
    %4516 = vmatprep.subr.bf16.mxu0 0
    %4517 = vmatpush2.bf16.msra.mxu0 0
    %4518 = vmatprep.subr.bf16.mxu0 0
    %4519 = vmatpush2.bf16.msra.mxu0 0
    %4520 = vmatprep.subr.bf16.mxu0 0
    %4521 = vmatpush2.bf16.msra.mxu0 0
    %4522 = vmatprep.subr.bf16.mxu0 0
    %4523 = vmatpush2.bf16.msra.mxu0 0
    %4524 = vmatprep.subr.bf16.mxu0 0
    %4525 = vmatpush2.bf16.msra.mxu0 0
    %4526 = vmatprep.mubr.bf16.mxu0 0
    %4527 = vmatmul.mubr.bf16.gmra.mxu0 %v4489
    %v4528 = vpop.f32.mrf.mxu0
    %v4529 = vadd.f32 0.0, %v4528
    %v4530 = vpop.f32.mrf.mxu0
    %v4531 = vpop.f32.mrf.mxu0
    %v4532 = vpop.f32.mrf.mxu0
    %4533 = vdwg.mxu0
    %v4534 = vadd.f32 %v4439, %v4529
    %s4535 = scalar_lea.vmem %s9, 432
    %v4536 = vld [vmem:[%s4535] sm:$0xf]
    %v4537 = vld [vmem:[%s4535 + $0x4] sm:$0xf]
    %v4538 = vld [vmem:[%s4535 + $0x8] sm:$0xf]
    %v4539 = vld [vmem:[%s4535 + $0xc] sm:$0xf]
    %v4540 = vld [vmem:[%s4535 + $0x10] sm:$0xf]
    %v4541 = vld [vmem:[%s4535 + $0x14] sm:$0xf]
    %v4542 = vld [vmem:[%s4535 + $0x18] sm:$0xf]
    %v4543 = vld [vmem:[%s4535 + $0x1c] sm:$0xf]
    %v4544 = vld [vmem:[%s4535 + $0x20] sm:$0xf]
    %v4545 = vld [vmem:[%s4535 + $0x24] sm:$0xf]
    %v4546 = vld [vmem:[%s4535 + $0x28] sm:$0xf]
    %v4547 = vld [vmem:[%s4535 + $0x2c] sm:$0x3]
    %v4549 = vrot.slane %v3674, 1
    %v4562 = vunpack.c.l.b16 %v4536
    %v4563 = vunpack.c.l.b16 %v4537
    %v4564 = vunpack.c.l.b16 %v4538
    %v4565 = vunpack.c.l.b16 %v4539
    %v4566 = vunpack.c.l.b16 %v4540
    %v4567 = vunpack.c.l.b16 %v4541
    %v4568 = vunpack.c.l.b16 %v4542
    %v4569 = vunpack.c.l.b16 %v4543
    %v4570 = vunpack.c.l.b16 %v4544
    %v4571 = vunpack.c.l.b16 %v4545
    %v4572 = vunpack.c.l.b16 %v4546
    %v4573 = vunpack.c.l.b16 %v4547
    %v4574 = vpack.c.b16 %v4563, %v4562
    %v4575 = vpack.c.b16 %v4565, %v4564
    %v4576 = vpack.c.b16 %v4567, %v4566
    %v4577 = vpack.c.b16 %v4569, %v4568
    %v4578 = vpack.c.b16 %v4571, %v4570
    %v4579 = vpack.c.b16 %v4573, %v4572
    %v4586 = vsel %vm249, %v4549, 0
    %v4589 = vsel %vm2903, %v4579, 0
    %4591 = vmatprep.subr.bf16.mxu0 0
    %4592 = vmatpush1.bf16.msra.mxu0 0
    %4593 = vmatprep.subr.bf16.mxu0 0
    %4594 = vmatpush1.bf16.msra.mxu0 0
    %4595 = vmatprep.subr.bf16.mxu0 0
    %4596 = vmatpush1.bf16.msra.mxu0 %v4589
    %4597 = vmatprep.subr.bf16.mxu0 0
    %4598 = vmatpush1.bf16.msra.mxu0 %v4578
    %4599 = vmatprep.subr.bf16.mxu0 0
    %4600 = vmatpush1.bf16.msra.mxu0 %v4577
    %4601 = vmatprep.subr.bf16.mxu0 0
    %4602 = vmatpush1.bf16.msra.mxu0 %v4576
    %4603 = vmatprep.subr.bf16.mxu0 0
    %4604 = vmatpush1.bf16.msra.mxu0 %v4575
    %4605 = vmatprep.subr.bf16.mxu0 0
    %4606 = vmatpush1.bf16.msra.mxu0 %v4574
    %4607 = vmatprep.subr.bf16.mxu0 0
    %4608 = vmatpush2.bf16.msra.mxu0 0
    %4609 = vmatprep.subr.bf16.mxu0 0
    %4610 = vmatpush2.bf16.msra.mxu0 0
    %4611 = vmatprep.subr.bf16.mxu0 0
    %4612 = vmatpush2.bf16.msra.mxu0 0
    %4613 = vmatprep.subr.bf16.mxu0 0
    %4614 = vmatpush2.bf16.msra.mxu0 0
    %4615 = vmatprep.subr.bf16.mxu0 0
    %4616 = vmatpush2.bf16.msra.mxu0 0
    %4617 = vmatprep.subr.bf16.mxu0 0
    %4618 = vmatpush2.bf16.msra.mxu0 0
    %4619 = vmatprep.subr.bf16.mxu0 0
    %4620 = vmatpush2.bf16.msra.mxu0 0
    %4621 = vmatprep.subr.bf16.mxu0 0
    %4622 = vmatpush2.bf16.msra.mxu0 0
    %4623 = vmatprep.mubr.bf16.mxu0 0
    %4624 = vmatmul.mubr.bf16.gmra.mxu0 %v4586
    %v4625 = vpop.f32.mrf.mxu0
    %v4626 = vadd.f32 0.0, %v4625
    %v4627 = vpop.f32.mrf.mxu0
    %v4628 = vpop.f32.mrf.mxu0
    %v4629 = vpop.f32.mrf.mxu0
    %4630 = vdwg.mxu0
    %v4631 = vadd.f32 %v4534, %v4626
    %s4632 = scalar_lea.vmem %s9, 480
    %v4633 = vld [vmem:[%s4632] sm:$0xf]
    %v4634 = vld [vmem:[%s4632 + $0x4] sm:$0xf]
    %v4635 = vld [vmem:[%s4632 + $0x8] sm:$0xf]
    %v4636 = vld [vmem:[%s4632 + $0xc] sm:$0xf]
    %v4637 = vld [vmem:[%s4632 + $0x10] sm:$0xf]
    %v4638 = vld [vmem:[%s4632 + $0x14] sm:$0xf]
    %v4639 = vld [vmem:[%s4632 + $0x18] sm:$0xf]
    %v4640 = vld [vmem:[%s4632 + $0x1c] sm:$0xf]
    %v4641 = vld [vmem:[%s4632 + $0x20] sm:$0xf]
    %v4642 = vld [vmem:[%s4632 + $0x24] sm:$0xf]
    %v4643 = vld [vmem:[%s4632 + $0x28] sm:$0xf]
    %v4644 = vld [vmem:[%s4632 + $0x2c] sm:$0x3]
    %v4645 = vrot.slane %v3674, 2
    %v4658 = vunpack.c.l.b16 %v4633
    %v4659 = vunpack.c.l.b16 %v4634
    %v4660 = vunpack.c.l.b16 %v4635
    %v4661 = vunpack.c.l.b16 %v4636
    %v4662 = vunpack.c.l.b16 %v4637
    %v4663 = vunpack.c.l.b16 %v4638
    %v4664 = vunpack.c.l.b16 %v4639
    %v4665 = vunpack.c.l.b16 %v4640
    %v4666 = vunpack.c.l.b16 %v4641
    %v4667 = vunpack.c.l.b16 %v4642
    %v4668 = vunpack.c.l.b16 %v4643
    %v4669 = vunpack.c.l.b16 %v4644
    %v4670 = vpack.c.b16 %v4659, %v4658
    %v4671 = vpack.c.b16 %v4661, %v4660
    %v4672 = vpack.c.b16 %v4663, %v4662
    %v4673 = vpack.c.b16 %v4665, %v4664
    %v4674 = vpack.c.b16 %v4667, %v4666
    %v4675 = vpack.c.b16 %v4669, %v4668
    %v4682 = vsel %vm249, %v4645, 0
    %v4685 = vsel %vm2903, %v4675, 0
    %4687 = vmatprep.subr.bf16.mxu0 0
    %4688 = vmatpush1.bf16.msra.mxu0 0
    %4689 = vmatprep.subr.bf16.mxu0 0
    %4690 = vmatpush1.bf16.msra.mxu0 0
    %4691 = vmatprep.subr.bf16.mxu0 0
    %4692 = vmatpush1.bf16.msra.mxu0 %v4685
    %4693 = vmatprep.subr.bf16.mxu0 0
    %4694 = vmatpush1.bf16.msra.mxu0 %v4674
    %4695 = vmatprep.subr.bf16.mxu0 0
    %4696 = vmatpush1.bf16.msra.mxu0 %v4673
    %4697 = vmatprep.subr.bf16.mxu0 0
    %4698 = vmatpush1.bf16.msra.mxu0 %v4672
    %4699 = vmatprep.subr.bf16.mxu0 0
    %4700 = vmatpush1.bf16.msra.mxu0 %v4671
    %4701 = vmatprep.subr.bf16.mxu0 0
    %4702 = vmatpush1.bf16.msra.mxu0 %v4670
    %4703 = vmatprep.subr.bf16.mxu0 0
    %4704 = vmatpush2.bf16.msra.mxu0 0
    %4705 = vmatprep.subr.bf16.mxu0 0
    %4706 = vmatpush2.bf16.msra.mxu0 0
    %4707 = vmatprep.subr.bf16.mxu0 0
    %4708 = vmatpush2.bf16.msra.mxu0 0
    %4709 = vmatprep.subr.bf16.mxu0 0
    %4710 = vmatpush2.bf16.msra.mxu0 0
    %4711 = vmatprep.subr.bf16.mxu0 0
    %4712 = vmatpush2.bf16.msra.mxu0 0
    %4713 = vmatprep.subr.bf16.mxu0 0
    %4714 = vmatpush2.bf16.msra.mxu0 0
    %4715 = vmatprep.subr.bf16.mxu0 0
    %4716 = vmatpush2.bf16.msra.mxu0 0
    %4717 = vmatprep.subr.bf16.mxu0 0
    %4718 = vmatpush2.bf16.msra.mxu0 0
    %4719 = vmatprep.mubr.bf16.mxu0 0
    %4720 = vmatmul.mubr.bf16.gmra.mxu0 %v4682
    %v4721 = vpop.f32.mrf.mxu0
    %v4722 = vadd.f32 0.0, %v4721
    %v4723 = vpop.f32.mrf.mxu0
    %v4724 = vpop.f32.mrf.mxu0
    %v4725 = vpop.f32.mrf.mxu0
    %4726 = vdwg.mxu0
    %v4727 = vadd.f32 %v4631, %v4722
    %s4728 = scalar_lea.vmem %s9, 528
    %v4729 = vld [vmem:[%s4728] sm:$0xf]
    %v4730 = vld [vmem:[%s4728 + $0x4] sm:$0xf]
    %v4731 = vld [vmem:[%s4728 + $0x8] sm:$0xf]
    %v4732 = vld [vmem:[%s4728 + $0xc] sm:$0xf]
    %v4733 = vld [vmem:[%s4728 + $0x10] sm:$0xf]
    %v4734 = vld [vmem:[%s4728 + $0x14] sm:$0xf]
    %v4735 = vld [vmem:[%s4728 + $0x18] sm:$0xf]
    %v4736 = vld [vmem:[%s4728 + $0x1c] sm:$0xf]
    %v4737 = vld [vmem:[%s4728 + $0x20] sm:$0xf]
    %v4738 = vld [vmem:[%s4728 + $0x24] sm:$0xf]
    %v4739 = vld [vmem:[%s4728 + $0x28] sm:$0xf]
    %v4740 = vld [vmem:[%s4728 + $0x2c] sm:$0x3]
    %v4741 = vrot.slane %v3674, 3
    %v4754 = vunpack.c.l.b16 %v4729
    %v4755 = vunpack.c.l.b16 %v4730
    %v4756 = vunpack.c.l.b16 %v4731
    %v4757 = vunpack.c.l.b16 %v4732
    %v4758 = vunpack.c.l.b16 %v4733
    %v4759 = vunpack.c.l.b16 %v4734
    %v4760 = vunpack.c.l.b16 %v4735
    %v4761 = vunpack.c.l.b16 %v4736
    %v4762 = vunpack.c.l.b16 %v4737
    %v4763 = vunpack.c.l.b16 %v4738
    %v4764 = vunpack.c.l.b16 %v4739
    %v4765 = vunpack.c.l.b16 %v4740
    %v4766 = vpack.c.b16 %v4755, %v4754
    %v4767 = vpack.c.b16 %v4757, %v4756
    %v4768 = vpack.c.b16 %v4759, %v4758
    %v4769 = vpack.c.b16 %v4761, %v4760
    %v4770 = vpack.c.b16 %v4763, %v4762
    %v4771 = vpack.c.b16 %v4765, %v4764
    %v4778 = vsel %vm249, %v4741, 0
    %v4781 = vsel %vm2903, %v4771, 0
    %4783 = vmatprep.subr.bf16.mxu0 0
    %4784 = vmatpush1.bf16.msra.mxu0 0
    %4785 = vmatprep.subr.bf16.mxu0 0
    %4786 = vmatpush1.bf16.msra.mxu0 0
    %4787 = vmatprep.subr.bf16.mxu0 0
    %4788 = vmatpush1.bf16.msra.mxu0 %v4781
    %4789 = vmatprep.subr.bf16.mxu0 0
    %4790 = vmatpush1.bf16.msra.mxu0 %v4770
    %4791 = vmatprep.subr.bf16.mxu0 0
    %4792 = vmatpush1.bf16.msra.mxu0 %v4769
    %4793 = vmatprep.subr.bf16.mxu0 0
    %4794 = vmatpush1.bf16.msra.mxu0 %v4768
    %4795 = vmatprep.subr.bf16.mxu0 0
    %4796 = vmatpush1.bf16.msra.mxu0 %v4767
    %4797 = vmatprep.subr.bf16.mxu0 0
    %4798 = vmatpush1.bf16.msra.mxu0 %v4766
    %4799 = vmatprep.subr.bf16.mxu0 0
    %4800 = vmatpush2.bf16.msra.mxu0 0
    %4801 = vmatprep.subr.bf16.mxu0 0
    %4802 = vmatpush2.bf16.msra.mxu0 0
    %4803 = vmatprep.subr.bf16.mxu0 0
    %4804 = vmatpush2.bf16.msra.mxu0 0
    %4805 = vmatprep.subr.bf16.mxu0 0
    %4806 = vmatpush2.bf16.msra.mxu0 0
    %4807 = vmatprep.subr.bf16.mxu0 0
    %4808 = vmatpush2.bf16.msra.mxu0 0
    %4809 = vmatprep.subr.bf16.mxu0 0
    %4810 = vmatpush2.bf16.msra.mxu0 0
    %4811 = vmatprep.subr.bf16.mxu0 0
    %4812 = vmatpush2.bf16.msra.mxu0 0
    %4813 = vmatprep.subr.bf16.mxu0 0
    %4814 = vmatpush2.bf16.msra.mxu0 0
    %4815 = vmatprep.mubr.bf16.mxu0 0
    %4816 = vmatmul.mubr.bf16.gmra.mxu0 %v4778
    %v4817 = vpop.f32.mrf.mxu0
    %v4818 = vadd.f32 0.0, %v4817
    %v4819 = vpop.f32.mrf.mxu0
    %v4820 = vpop.f32.mrf.mxu0
    %v4821 = vpop.f32.mrf.mxu0
    %4822 = vdwg.mxu0
    %v4823 = vadd.f32 %v4727, %v4818
    %v4824 = vld [vmem:[%s10] sm:$0x1]
    %v4826 = vlaneseq
    %v4827 = vshrl.u32 %v4826, 7
    %v4828 = vsub.s32 0, %v4827
    %v4829 = vrot.slane %v4824, %v4828
    %v4831 = vadd.f32 %v4823, %v4829
    %vm4832 = vcmask 74752
    %4833 = vst.msk [vmem:[#allocation2] sm:$0x3] %vm4832, %v4831
    // Predicated region
    $region46: #{forward.1} parent=1 // pred_check
      _
    $region47: #{forward.1} parent=1 // pred_check_branch
      %4835 = sbr.rel (0) target = $region49
    $region48: #{forward.1} parent=1 // pred_region
      %s4837 = ssub.s32 32, 32
      %4838 = vsyncadd [#allocation3], %s4837
      %s4840 = sshll.u32 [#allocation2], 4
      %s4841 = int_to_ptr.vmem [resolvable:$true] %s4840
      %4843 = dma.vmem_to_hbm [thread:$0]  %s4841, 32, %s11, [#allocation3]
    $region49: #{forward.1} parent=1 // pred_fallthru
      _
    // Predicated region
    $region50: #{forward.1} parent=1 // pred_check
      _
    $region51: #{forward.1} parent=1 // pred_check_branch
      %4845 = sbr.rel (0) target = $region53
    $region52: #{forward.1} parent=1 // pred_region
      %4846 = dma.done [#allocation3], 32
    $region53: #{forward.1} parent=1 // pred_fallthru
      _
    %4847 = vsyncpa [#allocation3], 1

</llo_original>
